<compile_context>
chip_gen: v5e
topology: v5e:2x2
jax: 0.10.0
libtpu: 0.0.40
codegen_flags: <defaults>
</compile_context>

<pallas_src>
import math

import jax
import jax.numpy as jnp
from jax.experimental import pallas as pl
from jax.experimental.pallas import tpu as pltpu

SIREN_W0 = 30.0          # omega_0 of the sine activation
SIREN_C = 6.0            # SIREN init constant c
LANE = 128               # vreg lane width
MAX_TILE_SUBLANES = 128  # sublanes per grid step -> 128*128 = 16384 coords/step


def _make_kernel(dims, n_sine):
    """Build the fused MLP kernel for a static list of layer widths.

    dims   = [in_dim, hidden, ..., hidden, out_channels]
    n_sine = number of leading sine layers (omega_0 already folded into the
             packed weights); the final layer is plain linear (its bias already
             includes the +0.5).
    """
    offs = []
    off = 0
    for li in range(len(dims) - 1):
        w_off = off
        off += dims[li] * dims[li + 1]
        b_off = off
        off += dims[li + 1]
        offs.append((w_off, b_off))

    def kernel(p_ref, x_ref, o_ref):
        # p_ref : (P,) f32 flat weights in SMEM
        # x_ref : (in_dim,       TS, 128) f32 in VMEM
        # o_ref : (out_channels, TS, 128) f32 in VMEM
        acts = [x_ref[k] for k in range(dims[0])]
        for li in range(len(dims) - 1):
            w_off, b_off = offs[li]
            d_in, d_out = dims[li], dims[li + 1]
            nxt = []
            for j in range(d_out):
                # z_j = sum_k W[k, j] * act_k + b_j   (W stored (d_in, d_out))
                z = p_ref[w_off + j] * acts[0]
                for k in range(1, d_in):
                    z = z + p_ref[w_off + k * d_out + j] * acts[k]
                z = z + p_ref[b_off + j]
                nxt.append(jnp.sin(z) if li < n_sine else z)
            acts = nxt
        for c in range(len(acts)):
            o_ref[c] = acts[c]

    return kernel


def siren_dws_forward(x, params):
    """x: (N, in_dim) float32.  Returns (N, out_channels) float32."""
    n, in_dim = x.shape
    n_layers = len(params)
    n_sine = n_layers - 1
    out_dims = [w.shape[1] for (w, _) in params]
    out_channels = out_dims[-1]
    dims = tuple([in_dim] + out_dims)

    # ---- pack weights into one flat SMEM vector (fold omega_0 and the +0.5) --
    flat = []
    for li, (w, b) in enumerate(params):
        if li < n_sine:                       # sine layers: fold omega_0
            w = SIREN_W0 * w
            b = SIREN_W0 * b
        else:                                 # final linear: fold the +0.5
            b = b + 0.5
        flat.append(w.reshape(-1).astype(jnp.float32))
        flat.append(b.reshape(-1).astype(jnp.float32))
    packed = jnp.concatenate(flat)
    p_len = int(packed.shape[0])
    p_pad = max(8, ((p_len + 7) // 8) * 8)
    packed = jnp.zeros((p_pad,), jnp.float32).at[:p_len].set(packed)

    # ---- lane-major coordinate slab: N on the lane axis, no 128-wide padding -
    m_need = (n + LANE - 1) // LANE                        # sublanes needed
    ts = min(MAX_TILE_SUBLANES, ((m_need + 7) // 8) * 8)   # sublanes / grid step
    block_elems = ts * LANE
    n_pad = ((n + block_elems - 1) // block_elems) * block_elems
    m_total = n_pad // LANE

    x_t = jnp.zeros((in_dim, n_pad), jnp.float32).at[:, :n].set(x.T)
    x_t = x_t.reshape(in_dim, m_total, LANE)

    kernel = _make_kernel(dims, n_sine)

    out_p = pl.pallas_call(
        kernel,
        out_shape=jax.ShapeDtypeStruct((out_channels, m_total, LANE), jnp.float32),
        grid_spec=pltpu.PrefetchScalarGridSpec(
            num_scalar_prefetch=0,
            grid=(m_total // ts,),
            in_specs=[
                # ~105 weight/bias scalars, whole array resident in SMEM.
                pl.BlockSpec(memory_space=pltpu.MemorySpace.SMEM),
                # (in_dim, TS, 128) coordinate tile, lane-dense.
                pl.BlockSpec((in_dim, ts, LANE), lambda i: (0, i, 0)),
            ],
            out_specs=pl.BlockSpec((out_channels, ts, LANE), lambda i: (0, i, 0)),
        ),
        # "parallel" lets dual-TensorCore chips (v7x) shard the N axis across
        # cores; it is a no-op on single-TC v5e/v6e.
        compiler_params=pltpu.CompilerParams(dimension_semantics=("parallel",)),
    )(packed, x_t)

    out = out_p.reshape(out_channels, n_pad)[:, :n]
    return out.T


def init_params(key, in_dim=2, n_layers=3, up_scale=4, out_channels=1):
    """Deterministic SIREN-style init (weights stored as (dim_in, dim_out))."""
    hidden = in_dim * up_scale
    dims = [in_dim] + [hidden] * (n_layers - 1) + [out_channels]
    params = []
    keys = jax.random.split(key, 2 * (len(dims) - 1))
    for li in range(len(dims) - 1):
        d_in, d_out = dims[li], dims[li + 1]
        if li < len(dims) - 2:  # Siren layers
            w_std = (1.0 / d_in) if li == 0 else (math.sqrt(SIREN_C / d_in) / SIREN_W0)
        else:                    # final nn.Linear (PyTorch default init bound)
            w_std = 1.0 / math.sqrt(d_in)
        w = jax.random.uniform(keys[2 * li], (d_in, d_out), jnp.float32, -w_std, w_std)
        b = jax.random.uniform(keys[2 * li + 1], (d_out,), jnp.float32, -w_std, w_std)
        params.append((w, b))
    return params


def siren_dws_reference(x, params):
    (w0, b0), (w1, b1), (w2, b2) = params
    h = jnp.sin(SIREN_W0 * (x @ w0 + b0))
    h = jnp.sin(SIREN_W0 * (h @ w1 + b1))
    return h @ w2 + b2 + 0.5


if __name__ == "__main__":
    key = jax.random.PRNGKey(0)
    k_param, k_x = jax.random.split(key)

    in_dim, n_layers, up_scale, out_channels = 2, 3, 4, 1
    params = init_params(k_param, in_dim, n_layers, up_scale, out_channels)

    # Coordinate-style input, e.g. 256 (x, y) points in [-1, 1].
    N = 256
    x = jax.random.uniform(k_x, (N, in_dim), jnp.float32, -1.0, 1.0)

    out = siren_dws_forward(x, params)
    out = jax.block_until_ready(out)

    ref = siren_dws_reference(x, params)
    assert out.shape == (N, out_channels)
    assert jnp.allclose(out, ref, atol=1e-4, rtol=1e-4), "mismatch vs reference"

    print("KERNEL_OK")
</pallas_src>

<mosaic_0001>
module attributes {stable_mosaic.version = 11 : i64} {
  func.func @kernel(%arg0: i32, %arg1: memref<112xf32, #tpu.memory_space<smem>>, %arg2: memref<2x8x128xf32, #tpu.memory_space<vmem>>, %arg3: memref<1x8x128xf32, #tpu.memory_space<vmem>>) attributes {dimension_semantics = [#tpu.dimension_semantics<parallel>], iteration_bounds = array<i64: 1>, scalar_prefetch = 0 : i64, scratch_operands = 0 : i64, tpu.core_type = #tpu.core_type<tc>, window_params = [{transform_indices = @transform_0, window_bounds = array<i64: 112>}, {transform_indices = @transform_1, window_bounds = array<i64: 2, 8, 128>}, {transform_indices = @transform_2, window_bounds = array<i64: 1, 8, 128>}]} {
    %c0 = arith.constant 0 : index
    %c0_0 = arith.constant 0 : index
    %c0_1 = arith.constant 0 : index
    %0 = vector.load %arg2[%c0, %c0_0, %c0_1] : memref<2x8x128xf32, #tpu.memory_space<vmem>>, vector<1x8x128xf32>
    %1 = vector.shape_cast %0 : vector<1x8x128xf32> to vector<8x128xf32>
    %c1 = arith.constant 1 : index
    %c0_2 = arith.constant 0 : index
    %c0_3 = arith.constant 0 : index
    %2 = vector.load %arg2[%c1, %c0_2, %c0_3] : memref<2x8x128xf32, #tpu.memory_space<vmem>>, vector<1x8x128xf32>
    %3 = vector.shape_cast %2 : vector<1x8x128xf32> to vector<8x128xf32>
    %c0_4 = arith.constant 0 : index
    %4 = memref.load %arg1[%c0_4] : memref<112xf32, #tpu.memory_space<smem>>
    %5 = vector.broadcast %4 : f32 to vector<8x128xf32>
    %6 = arith.mulf %5, %1 : vector<8x128xf32>
    %c8 = arith.constant 8 : index
    %7 = memref.load %arg1[%c8] : memref<112xf32, #tpu.memory_space<smem>>
    %8 = vector.broadcast %7 : f32 to vector<8x128xf32>
    %9 = arith.mulf %8, %3 : vector<8x128xf32>
    %10 = arith.addf %6, %9 : vector<8x128xf32>
    %c16 = arith.constant 16 : index
    %11 = memref.load %arg1[%c16] : memref<112xf32, #tpu.memory_space<smem>>
    %12 = vector.broadcast %11 : f32 to vector<8x128xf32>
    %13 = arith.addf %10, %12 : vector<8x128xf32>
    %14 = math.sin %13 : vector<8x128xf32>
    %c1_5 = arith.constant 1 : index
    %15 = memref.load %arg1[%c1_5] : memref<112xf32, #tpu.memory_space<smem>>
    %16 = vector.broadcast %15 : f32 to vector<8x128xf32>
    %17 = arith.mulf %16, %1 : vector<8x128xf32>
    %c9 = arith.constant 9 : index
    %18 = memref.load %arg1[%c9] : memref<112xf32, #tpu.memory_space<smem>>
    %19 = vector.broadcast %18 : f32 to vector<8x128xf32>
    %20 = arith.mulf %19, %3 : vector<8x128xf32>
    %21 = arith.addf %17, %20 : vector<8x128xf32>
    %c17 = arith.constant 17 : index
    %22 = memref.load %arg1[%c17] : memref<112xf32, #tpu.memory_space<smem>>
    %23 = vector.broadcast %22 : f32 to vector<8x128xf32>
    %24 = arith.addf %21, %23 : vector<8x128xf32>
    %25 = math.sin %24 : vector<8x128xf32>
    %c2 = arith.constant 2 : index
    %26 = memref.load %arg1[%c2] : memref<112xf32, #tpu.memory_space<smem>>
    %27 = vector.broadcast %26 : f32 to vector<8x128xf32>
    %28 = arith.mulf %27, %1 : vector<8x128xf32>
    %c10 = arith.constant 10 : index
    %29 = memref.load %arg1[%c10] : memref<112xf32, #tpu.memory_space<smem>>
    %30 = vector.broadcast %29 : f32 to vector<8x128xf32>
    %31 = arith.mulf %30, %3 : vector<8x128xf32>
    %32 = arith.addf %28, %31 : vector<8x128xf32>
    %c18 = arith.constant 18 : index
    %33 = memref.load %arg1[%c18] : memref<112xf32, #tpu.memory_space<smem>>
    %34 = vector.broadcast %33 : f32 to vector<8x128xf32>
    %35 = arith.addf %32, %34 : vector<8x128xf32>
    %36 = math.sin %35 : vector<8x128xf32>
    %c3 = arith.constant 3 : index
    %37 = memref.load %arg1[%c3] : memref<112xf32, #tpu.memory_space<smem>>
    %38 = vector.broadcast %37 : f32 to vector<8x128xf32>
    %39 = arith.mulf %38, %1 : vector<8x128xf32>
    %c11 = arith.constant 11 : index
    %40 = memref.load %arg1[%c11] : memref<112xf32, #tpu.memory_space<smem>>
    %41 = vector.broadcast %40 : f32 to vector<8x128xf32>
    %42 = arith.mulf %41, %3 : vector<8x128xf32>
    %43 = arith.addf %39, %42 : vector<8x128xf32>
    %c19 = arith.constant 19 : index
    %44 = memref.load %arg1[%c19] : memref<112xf32, #tpu.memory_space<smem>>
    %45 = vector.broadcast %44 : f32 to vector<8x128xf32>
    %46 = arith.addf %43, %45 : vector<8x128xf32>
    %47 = math.sin %46 : vector<8x128xf32>
    %c4 = arith.constant 4 : index
    %48 = memref.load %arg1[%c4] : memref<112xf32, #tpu.memory_space<smem>>
    %49 = vector.broadcast %48 : f32 to vector<8x128xf32>
    %50 = arith.mulf %49, %1 : vector<8x128xf32>
    %c12 = arith.constant 12 : index
    %51 = memref.load %arg1[%c12] : memref<112xf32, #tpu.memory_space<smem>>
    %52 = vector.broadcast %51 : f32 to vector<8x128xf32>
    %53 = arith.mulf %52, %3 : vector<8x128xf32>
    %54 = arith.addf %50, %53 : vector<8x128xf32>
    %c20 = arith.constant 20 : index
    %55 = memref.load %arg1[%c20] : memref<112xf32, #tpu.memory_space<smem>>
    %56 = vector.broadcast %55 : f32 to vector<8x128xf32>
    %57 = arith.addf %54, %56 : vector<8x128xf32>
    %58 = math.sin %57 : vector<8x128xf32>
    %c5 = arith.constant 5 : index
    %59 = memref.load %arg1[%c5] : memref<112xf32, #tpu.memory_space<smem>>
    %60 = vector.broadcast %59 : f32 to vector<8x128xf32>
    %61 = arith.mulf %60, %1 : vector<8x128xf32>
    %c13 = arith.constant 13 : index
    %62 = memref.load %arg1[%c13] : memref<112xf32, #tpu.memory_space<smem>>
    %63 = vector.broadcast %62 : f32 to vector<8x128xf32>
    %64 = arith.mulf %63, %3 : vector<8x128xf32>
    %65 = arith.addf %61, %64 : vector<8x128xf32>
    %c21 = arith.constant 21 : index
    %66 = memref.load %arg1[%c21] : memref<112xf32, #tpu.memory_space<smem>>
    %67 = vector.broadcast %66 : f32 to vector<8x128xf32>
    %68 = arith.addf %65, %67 : vector<8x128xf32>
    %69 = math.sin %68 : vector<8x128xf32>
    %c6 = arith.constant 6 : index
    %70 = memref.load %arg1[%c6] : memref<112xf32, #tpu.memory_space<smem>>
    %71 = vector.broadcast %70 : f32 to vector<8x128xf32>
    %72 = arith.mulf %71, %1 : vector<8x128xf32>
    %c14 = arith.constant 14 : index
    %73 = memref.load %arg1[%c14] : memref<112xf32, #tpu.memory_space<smem>>
    %74 = vector.broadcast %73 : f32 to vector<8x128xf32>
    %75 = arith.mulf %74, %3 : vector<8x128xf32>
    %76 = arith.addf %72, %75 : vector<8x128xf32>
    %c22 = arith.constant 22 : index
    %77 = memref.load %arg1[%c22] : memref<112xf32, #tpu.memory_space<smem>>
    %78 = vector.broadcast %77 : f32 to vector<8x128xf32>
    %79 = arith.addf %76, %78 : vector<8x128xf32>
    %80 = math.sin %79 : vector<8x128xf32>
    %c7 = arith.constant 7 : index
    %81 = memref.load %arg1[%c7] : memref<112xf32, #tpu.memory_space<smem>>
    %82 = vector.broadcast %81 : f32 to vector<8x128xf32>
    %83 = arith.mulf %82, %1 : vector<8x128xf32>
    %c15 = arith.constant 15 : index
    %84 = memref.load %arg1[%c15] : memref<112xf32, #tpu.memory_space<smem>>
    %85 = vector.broadcast %84 : f32 to vector<8x128xf32>
    %86 = arith.mulf %85, %3 : vector<8x128xf32>
    %87 = arith.addf %83, %86 : vector<8x128xf32>
    %c23 = arith.constant 23 : index
    %88 = memref.load %arg1[%c23] : memref<112xf32, #tpu.memory_space<smem>>
    %89 = vector.broadcast %88 : f32 to vector<8x128xf32>
    %90 = arith.addf %87, %89 : vector<8x128xf32>
    %91 = math.sin %90 : vector<8x128xf32>
    %c24 = arith.constant 24 : index
    %92 = memref.load %arg1[%c24] : memref<112xf32, #tpu.memory_space<smem>>
    %93 = vector.broadcast %92 : f32 to vector<8x128xf32>
    %94 = arith.mulf %93, %14 : vector<8x128xf32>
    %c32 = arith.constant 32 : index
    %95 = memref.load %arg1[%c32] : memref<112xf32, #tpu.memory_space<smem>>
    %96 = vector.broadcast %95 : f32 to vector<8x128xf32>
    %97 = arith.mulf %96, %25 : vector<8x128xf32>
    %98 = arith.addf %94, %97 : vector<8x128xf32>
    %c40 = arith.constant 40 : index
    %99 = memref.load %arg1[%c40] : memref<112xf32, #tpu.memory_space<smem>>
    %100 = vector.broadcast %99 : f32 to vector<8x128xf32>
    %101 = arith.mulf %100, %36 : vector<8x128xf32>
    %102 = arith.addf %98, %101 : vector<8x128xf32>
    %c48 = arith.constant 48 : index
    %103 = memref.load %arg1[%c48] : memref<112xf32, #tpu.memory_space<smem>>
    %104 = vector.broadcast %103 : f32 to vector<8x128xf32>
    %105 = arith.mulf %104, %47 : vector<8x128xf32>
    %106 = arith.addf %102, %105 : vector<8x128xf32>
    %c56 = arith.constant 56 : index
    %107 = memref.load %arg1[%c56] : memref<112xf32, #tpu.memory_space<smem>>
    %108 = vector.broadcast %107 : f32 to vector<8x128xf32>
    %109 = arith.mulf %108, %58 : vector<8x128xf32>
    %110 = arith.addf %106, %109 : vector<8x128xf32>
    %c64 = arith.constant 64 : index
    %111 = memref.load %arg1[%c64] : memref<112xf32, #tpu.memory_space<smem>>
    %112 = vector.broadcast %111 : f32 to vector<8x128xf32>
    %113 = arith.mulf %112, %69 : vector<8x128xf32>
    %114 = arith.addf %110, %113 : vector<8x128xf32>
    %c72 = arith.constant 72 : index
    %115 = memref.load %arg1[%c72] : memref<112xf32, #tpu.memory_space<smem>>
    %116 = vector.broadcast %115 : f32 to vector<8x128xf32>
    %117 = arith.mulf %116, %80 : vector<8x128xf32>
    %118 = arith.addf %114, %117 : vector<8x128xf32>
    %c80 = arith.constant 80 : index
    %119 = memref.load %arg1[%c80] : memref<112xf32, #tpu.memory_space<smem>>
    %120 = vector.broadcast %119 : f32 to vector<8x128xf32>
    %121 = arith.mulf %120, %91 : vector<8x128xf32>
    %122 = arith.addf %118, %121 : vector<8x128xf32>
    %c88 = arith.constant 88 : index
    %123 = memref.load %arg1[%c88] : memref<112xf32, #tpu.memory_space<smem>>
    %124 = vector.broadcast %123 : f32 to vector<8x128xf32>
    %125 = arith.addf %122, %124 : vector<8x128xf32>
    %126 = math.sin %125 : vector<8x128xf32>
    %c25 = arith.constant 25 : index
    %127 = memref.load %arg1[%c25] : memref<112xf32, #tpu.memory_space<smem>>
    %128 = vector.broadcast %127 : f32 to vector<8x128xf32>
    %129 = arith.mulf %128, %14 : vector<8x128xf32>
    %c33 = arith.constant 33 : index
    %130 = memref.load %arg1[%c33] : memref<112xf32, #tpu.memory_space<smem>>
    %131 = vector.broadcast %130 : f32 to vector<8x128xf32>
    %132 = arith.mulf %131, %25 : vector<8x128xf32>
    %133 = arith.addf %129, %132 : vector<8x128xf32>
    %c41 = arith.constant 41 : index
    %134 = memref.load %arg1[%c41] : memref<112xf32, #tpu.memory_space<smem>>
    %135 = vector.broadcast %134 : f32 to vector<8x128xf32>
    %136 = arith.mulf %135, %36 : vector<8x128xf32>
    %137 = arith.addf %133, %136 : vector<8x128xf32>
    %c49 = arith.constant 49 : index
    %138 = memref.load %arg1[%c49] : memref<112xf32, #tpu.memory_space<smem>>
    %139 = vector.broadcast %138 : f32 to vector<8x128xf32>
    %140 = arith.mulf %139, %47 : vector<8x128xf32>
    %141 = arith.addf %137, %140 : vector<8x128xf32>
    %c57 = arith.constant 57 : index
    %142 = memref.load %arg1[%c57] : memref<112xf32, #tpu.memory_space<smem>>
    %143 = vector.broadcast %142 : f32 to vector<8x128xf32>
    %144 = arith.mulf %143, %58 : vector<8x128xf32>
    %145 = arith.addf %141, %144 : vector<8x128xf32>
    %c65 = arith.constant 65 : index
    %146 = memref.load %arg1[%c65] : memref<112xf32, #tpu.memory_space<smem>>
    %147 = vector.broadcast %146 : f32 to vector<8x128xf32>
    %148 = arith.mulf %147, %69 : vector<8x128xf32>
    %149 = arith.addf %145, %148 : vector<8x128xf32>
    %c73 = arith.constant 73 : index
    %150 = memref.load %arg1[%c73] : memref<112xf32, #tpu.memory_space<smem>>
    %151 = vector.broadcast %150 : f32 to vector<8x128xf32>
    %152 = arith.mulf %151, %80 : vector<8x128xf32>
    %153 = arith.addf %149, %152 : vector<8x128xf32>
    %c81 = arith.constant 81 : index
    %154 = memref.load %arg1[%c81] : memref<112xf32, #tpu.memory_space<smem>>
    %155 = vector.broadcast %154 : f32 to vector<8x128xf32>
    %156 = arith.mulf %155, %91 : vector<8x128xf32>
    %157 = arith.addf %153, %156 : vector<8x128xf32>
    %c89 = arith.constant 89 : index
    %158 = memref.load %arg1[%c89] : memref<112xf32, #tpu.memory_space<smem>>
    %159 = vector.broadcast %158 : f32 to vector<8x128xf32>
    %160 = arith.addf %157, %159 : vector<8x128xf32>
    %161 = math.sin %160 : vector<8x128xf32>
    %c26 = arith.constant 26 : index
    %162 = memref.load %arg1[%c26] : memref<112xf32, #tpu.memory_space<smem>>
    %163 = vector.broadcast %162 : f32 to vector<8x128xf32>
    %164 = arith.mulf %163, %14 : vector<8x128xf32>
    %c34 = arith.constant 34 : index
    %165 = memref.load %arg1[%c34] : memref<112xf32, #tpu.memory_space<smem>>
    %166 = vector.broadcast %165 : f32 to vector<8x128xf32>
    %167 = arith.mulf %166, %25 : vector<8x128xf32>
    %168 = arith.addf %164, %167 : vector<8x128xf32>
    %c42 = arith.constant 42 : index
    %169 = memref.load %arg1[%c42] : memref<112xf32, #tpu.memory_space<smem>>
    %170 = vector.broadcast %169 : f32 to vector<8x128xf32>
    %171 = arith.mulf %170, %36 : vector<8x128xf32>
    %172 = arith.addf %168, %171 : vector<8x128xf32>
    %c50 = arith.constant 50 : index
    %173 = memref.load %arg1[%c50] : memref<112xf32, #tpu.memory_space<smem>>
    %174 = vector.broadcast %173 : f32 to vector<8x128xf32>
    %175 = arith.mulf %174, %47 : vector<8x128xf32>
    %176 = arith.addf %172, %175 : vector<8x128xf32>
    %c58 = arith.constant 58 : index
    %177 = memref.load %arg1[%c58] : memref<112xf32, #tpu.memory_space<smem>>
    %178 = vector.broadcast %177 : f32 to vector<8x128xf32>
    %179 = arith.mulf %178, %58 : vector<8x128xf32>
    %180 = arith.addf %176, %179 : vector<8x128xf32>
    %c66 = arith.constant 66 : index
    %181 = memref.load %arg1[%c66] : memref<112xf32, #tpu.memory_space<smem>>
    %182 = vector.broadcast %181 : f32 to vector<8x128xf32>
    %183 = arith.mulf %182, %69 : vector<8x128xf32>
    %184 = arith.addf %180, %183 : vector<8x128xf32>
    %c74 = arith.constant 74 : index
    %185 = memref.load %arg1[%c74] : memref<112xf32, #tpu.memory_space<smem>>
    %186 = vector.broadcast %185 : f32 to vector<8x128xf32>
    %187 = arith.mulf %186, %80 : vector<8x128xf32>
    %188 = arith.addf %184, %187 : vector<8x128xf32>
    %c82 = arith.constant 82 : index
    %189 = memref.load %arg1[%c82] : memref<112xf32, #tpu.memory_space<smem>>
    %190 = vector.broadcast %189 : f32 to vector<8x128xf32>
    %191 = arith.mulf %190, %91 : vector<8x128xf32>
    %192 = arith.addf %188, %191 : vector<8x128xf32>
    %c90 = arith.constant 90 : index
    %193 = memref.load %arg1[%c90] : memref<112xf32, #tpu.memory_space<smem>>
    %194 = vector.broadcast %193 : f32 to vector<8x128xf32>
    %195 = arith.addf %192, %194 : vector<8x128xf32>
    %196 = math.sin %195 : vector<8x128xf32>
    %c27 = arith.constant 27 : index
    %197 = memref.load %arg1[%c27] : memref<112xf32, #tpu.memory_space<smem>>
    %198 = vector.broadcast %197 : f32 to vector<8x128xf32>
    %199 = arith.mulf %198, %14 : vector<8x128xf32>
    %c35 = arith.constant 35 : index
    %200 = memref.load %arg1[%c35] : memref<112xf32, #tpu.memory_space<smem>>
    %201 = vector.broadcast %200 : f32 to vector<8x128xf32>
    %202 = arith.mulf %201, %25 : vector<8x128xf32>
    %203 = arith.addf %199, %202 : vector<8x128xf32>
    %c43 = arith.constant 43 : index
    %204 = memref.load %arg1[%c43] : memref<112xf32, #tpu.memory_space<smem>>
    %205 = vector.broadcast %204 : f32 to vector<8x128xf32>
    %206 = arith.mulf %205, %36 : vector<8x128xf32>
    %207 = arith.addf %203, %206 : vector<8x128xf32>
    %c51 = arith.constant 51 : index
    %208 = memref.load %arg1[%c51] : memref<112xf32, #tpu.memory_space<smem>>
    %209 = vector.broadcast %208 : f32 to vector<8x128xf32>
    %210 = arith.mulf %209, %47 : vector<8x128xf32>
    %211 = arith.addf %207, %210 : vector<8x128xf32>
    %c59 = arith.constant 59 : index
    %212 = memref.load %arg1[%c59] : memref<112xf32, #tpu.memory_space<smem>>
    %213 = vector.broadcast %212 : f32 to vector<8x128xf32>
    %214 = arith.mulf %213, %58 : vector<8x128xf32>
    %215 = arith.addf %211, %214 : vector<8x128xf32>
    %c67 = arith.constant 67 : index
    %216 = memref.load %arg1[%c67] : memref<112xf32, #tpu.memory_space<smem>>
    %217 = vector.broadcast %216 : f32 to vector<8x128xf32>
    %218 = arith.mulf %217, %69 : vector<8x128xf32>
    %219 = arith.addf %215, %218 : vector<8x128xf32>
    %c75 = arith.constant 75 : index
    %220 = memref.load %arg1[%c75] : memref<112xf32, #tpu.memory_space<smem>>
    %221 = vector.broadcast %220 : f32 to vector<8x128xf32>
    %222 = arith.mulf %221, %80 : vector<8x128xf32>
    %223 = arith.addf %219, %222 : vector<8x128xf32>
    %c83 = arith.constant 83 : index
    %224 = memref.load %arg1[%c83] : memref<112xf32, #tpu.memory_space<smem>>
    %225 = vector.broadcast %224 : f32 to vector<8x128xf32>
    %226 = arith.mulf %225, %91 : vector<8x128xf32>
    %227 = arith.addf %223, %226 : vector<8x128xf32>
    %c91 = arith.constant 91 : index
    %228 = memref.load %arg1[%c91] : memref<112xf32, #tpu.memory_space<smem>>
    %229 = vector.broadcast %228 : f32 to vector<8x128xf32>
    %230 = arith.addf %227, %229 : vector<8x128xf32>
    %231 = math.sin %230 : vector<8x128xf32>
    %c28 = arith.constant 28 : index
    %232 = memref.load %arg1[%c28] : memref<112xf32, #tpu.memory_space<smem>>
    %233 = vector.broadcast %232 : f32 to vector<8x128xf32>
    %234 = arith.mulf %233, %14 : vector<8x128xf32>
    %c36 = arith.constant 36 : index
    %235 = memref.load %arg1[%c36] : memref<112xf32, #tpu.memory_space<smem>>
    %236 = vector.broadcast %235 : f32 to vector<8x128xf32>
    %237 = arith.mulf %236, %25 : vector<8x128xf32>
    %238 = arith.addf %234, %237 : vector<8x128xf32>
    %c44 = arith.constant 44 : index
    %239 = memref.load %arg1[%c44] : memref<112xf32, #tpu.memory_space<smem>>
    %240 = vector.broadcast %239 : f32 to vector<8x128xf32>
    %241 = arith.mulf %240, %36 : vector<8x128xf32>
    %242 = arith.addf %238, %241 : vector<8x128xf32>
    %c52 = arith.constant 52 : index
    %243 = memref.load %arg1[%c52] : memref<112xf32, #tpu.memory_space<smem>>
    %244 = vector.broadcast %243 : f32 to vector<8x128xf32>
    %245 = arith.mulf %244, %47 : vector<8x128xf32>
    %246 = arith.addf %242, %245 : vector<8x128xf32>
    %c60 = arith.constant 60 : index
    %247 = memref.load %arg1[%c60] : memref<112xf32, #tpu.memory_space<smem>>
    %248 = vector.broadcast %247 : f32 to vector<8x128xf32>
    %249 = arith.mulf %248, %58 : vector<8x128xf32>
    %250 = arith.addf %246, %249 : vector<8x128xf32>
    %c68 = arith.constant 68 : index
    %251 = memref.load %arg1[%c68] : memref<112xf32, #tpu.memory_space<smem>>
    %252 = vector.broadcast %251 : f32 to vector<8x128xf32>
    %253 = arith.mulf %252, %69 : vector<8x128xf32>
    %254 = arith.addf %250, %253 : vector<8x128xf32>
    %c76 = arith.constant 76 : index
    %255 = memref.load %arg1[%c76] : memref<112xf32, #tpu.memory_space<smem>>
    %256 = vector.broadcast %255 : f32 to vector<8x128xf32>
    %257 = arith.mulf %256, %80 : vector<8x128xf32>
    %258 = arith.addf %254, %257 : vector<8x128xf32>
    %c84 = arith.constant 84 : index
    %259 = memref.load %arg1[%c84] : memref<112xf32, #tpu.memory_space<smem>>
    %260 = vector.broadcast %259 : f32 to vector<8x128xf32>
    %261 = arith.mulf %260, %91 : vector<8x128xf32>
    %262 = arith.addf %258, %261 : vector<8x128xf32>
    %c92 = arith.constant 92 : index
    %263 = memref.load %arg1[%c92] : memref<112xf32, #tpu.memory_space<smem>>
    %264 = vector.broadcast %263 : f32 to vector<8x128xf32>
    %265 = arith.addf %262, %264 : vector<8x128xf32>
    %266 = math.sin %265 : vector<8x128xf32>
    %c29 = arith.constant 29 : index
    %267 = memref.load %arg1[%c29] : memref<112xf32, #tpu.memory_space<smem>>
    %268 = vector.broadcast %267 : f32 to vector<8x128xf32>
    %269 = arith.mulf %268, %14 : vector<8x128xf32>
    %c37 = arith.constant 37 : index
    %270 = memref.load %arg1[%c37] : memref<112xf32, #tpu.memory_space<smem>>
    %271 = vector.broadcast %270 : f32 to vector<8x128xf32>
    %272 = arith.mulf %271, %25 : vector<8x128xf32>
    %273 = arith.addf %269, %272 : vector<8x128xf32>
    %c45 = arith.constant 45 : index
    %274 = memref.load %arg1[%c45] : memref<112xf32, #tpu.memory_space<smem>>
    %275 = vector.broadcast %274 : f32 to vector<8x128xf32>
    %276 = arith.mulf %275, %36 : vector<8x128xf32>
    %277 = arith.addf %273, %276 : vector<8x128xf32>
    %c53 = arith.constant 53 : index
    %278 = memref.load %arg1[%c53] : memref<112xf32, #tpu.memory_space<smem>>
    %279 = vector.broadcast %278 : f32 to vector<8x128xf32>
    %280 = arith.mulf %279, %47 : vector<8x128xf32>
    %281 = arith.addf %277, %280 : vector<8x128xf32>
    %c61 = arith.constant 61 : index
    %282 = memref.load %arg1[%c61] : memref<112xf32, #tpu.memory_space<smem>>
    %283 = vector.broadcast %282 : f32 to vector<8x128xf32>
    %284 = arith.mulf %283, %58 : vector<8x128xf32>
    %285 = arith.addf %281, %284 : vector<8x128xf32>
    %c69 = arith.constant 69 : index
    %286 = memref.load %arg1[%c69] : memref<112xf32, #tpu.memory_space<smem>>
    %287 = vector.broadcast %286 : f32 to vector<8x128xf32>
    %288 = arith.mulf %287, %69 : vector<8x128xf32>
    %289 = arith.addf %285, %288 : vector<8x128xf32>
    %c77 = arith.constant 77 : index
    %290 = memref.load %arg1[%c77] : memref<112xf32, #tpu.memory_space<smem>>
    %291 = vector.broadcast %290 : f32 to vector<8x128xf32>
    %292 = arith.mulf %291, %80 : vector<8x128xf32>
    %293 = arith.addf %289, %292 : vector<8x128xf32>
    %c85 = arith.constant 85 : index
    %294 = memref.load %arg1[%c85] : memref<112xf32, #tpu.memory_space<smem>>
    %295 = vector.broadcast %294 : f32 to vector<8x128xf32>
    %296 = arith.mulf %295, %91 : vector<8x128xf32>
    %297 = arith.addf %293, %296 : vector<8x128xf32>
    %c93 = arith.constant 93 : index
    %298 = memref.load %arg1[%c93] : memref<112xf32, #tpu.memory_space<smem>>
    %299 = vector.broadcast %298 : f32 to vector<8x128xf32>
    %300 = arith.addf %297, %299 : vector<8x128xf32>
    %301 = math.sin %300 : vector<8x128xf32>
    %c30 = arith.constant 30 : index
    %302 = memref.load %arg1[%c30] : memref<112xf32, #tpu.memory_space<smem>>
    %303 = vector.broadcast %302 : f32 to vector<8x128xf32>
    %304 = arith.mulf %303, %14 : vector<8x128xf32>
    %c38 = arith.constant 38 : index
    %305 = memref.load %arg1[%c38] : memref<112xf32, #tpu.memory_space<smem>>
    %306 = vector.broadcast %305 : f32 to vector<8x128xf32>
    %307 = arith.mulf %306, %25 : vector<8x128xf32>
    %308 = arith.addf %304, %307 : vector<8x128xf32>
    %c46 = arith.constant 46 : index
    %309 = memref.load %arg1[%c46] : memref<112xf32, #tpu.memory_space<smem>>
    %310 = vector.broadcast %309 : f32 to vector<8x128xf32>
    %311 = arith.mulf %310, %36 : vector<8x128xf32>
    %312 = arith.addf %308, %311 : vector<8x128xf32>
    %c54 = arith.constant 54 : index
    %313 = memref.load %arg1[%c54] : memref<112xf32, #tpu.memory_space<smem>>
    %314 = vector.broadcast %313 : f32 to vector<8x128xf32>
    %315 = arith.mulf %314, %47 : vector<8x128xf32>
    %316 = arith.addf %312, %315 : vector<8x128xf32>
    %c62 = arith.constant 62 : index
    %317 = memref.load %arg1[%c62] : memref<112xf32, #tpu.memory_space<smem>>
    %318 = vector.broadcast %317 : f32 to vector<8x128xf32>
    %319 = arith.mulf %318, %58 : vector<8x128xf32>
    %320 = arith.addf %316, %319 : vector<8x128xf32>
    %c70 = arith.constant 70 : index
    %321 = memref.load %arg1[%c70] : memref<112xf32, #tpu.memory_space<smem>>
    %322 = vector.broadcast %321 : f32 to vector<8x128xf32>
    %323 = arith.mulf %322, %69 : vector<8x128xf32>
    %324 = arith.addf %320, %323 : vector<8x128xf32>
    %c78 = arith.constant 78 : index
    %325 = memref.load %arg1[%c78] : memref<112xf32, #tpu.memory_space<smem>>
    %326 = vector.broadcast %325 : f32 to vector<8x128xf32>
    %327 = arith.mulf %326, %80 : vector<8x128xf32>
    %328 = arith.addf %324, %327 : vector<8x128xf32>
    %c86 = arith.constant 86 : index
    %329 = memref.load %arg1[%c86] : memref<112xf32, #tpu.memory_space<smem>>
    %330 = vector.broadcast %329 : f32 to vector<8x128xf32>
    %331 = arith.mulf %330, %91 : vector<8x128xf32>
    %332 = arith.addf %328, %331 : vector<8x128xf32>
    %c94 = arith.constant 94 : index
    %333 = memref.load %arg1[%c94] : memref<112xf32, #tpu.memory_space<smem>>
    %334 = vector.broadcast %333 : f32 to vector<8x128xf32>
    %335 = arith.addf %332, %334 : vector<8x128xf32>
    %336 = math.sin %335 : vector<8x128xf32>
    %c31 = arith.constant 31 : index
    %337 = memref.load %arg1[%c31] : memref<112xf32, #tpu.memory_space<smem>>
    %338 = vector.broadcast %337 : f32 to vector<8x128xf32>
    %339 = arith.mulf %338, %14 : vector<8x128xf32>
    %c39 = arith.constant 39 : index
    %340 = memref.load %arg1[%c39] : memref<112xf32, #tpu.memory_space<smem>>
    %341 = vector.broadcast %340 : f32 to vector<8x128xf32>
    %342 = arith.mulf %341, %25 : vector<8x128xf32>
    %343 = arith.addf %339, %342 : vector<8x128xf32>
    %c47 = arith.constant 47 : index
    %344 = memref.load %arg1[%c47] : memref<112xf32, #tpu.memory_space<smem>>
    %345 = vector.broadcast %344 : f32 to vector<8x128xf32>
    %346 = arith.mulf %345, %36 : vector<8x128xf32>
    %347 = arith.addf %343, %346 : vector<8x128xf32>
    %c55 = arith.constant 55 : index
    %348 = memref.load %arg1[%c55] : memref<112xf32, #tpu.memory_space<smem>>
    %349 = vector.broadcast %348 : f32 to vector<8x128xf32>
    %350 = arith.mulf %349, %47 : vector<8x128xf32>
    %351 = arith.addf %347, %350 : vector<8x128xf32>
    %c63 = arith.constant 63 : index
    %352 = memref.load %arg1[%c63] : memref<112xf32, #tpu.memory_space<smem>>
    %353 = vector.broadcast %352 : f32 to vector<8x128xf32>
    %354 = arith.mulf %353, %58 : vector<8x128xf32>
    %355 = arith.addf %351, %354 : vector<8x128xf32>
    %c71 = arith.constant 71 : index
    %356 = memref.load %arg1[%c71] : memref<112xf32, #tpu.memory_space<smem>>
    %357 = vector.broadcast %356 : f32 to vector<8x128xf32>
    %358 = arith.mulf %357, %69 : vector<8x128xf32>
    %359 = arith.addf %355, %358 : vector<8x128xf32>
    %c79 = arith.constant 79 : index
    %360 = memref.load %arg1[%c79] : memref<112xf32, #tpu.memory_space<smem>>
    %361 = vector.broadcast %360 : f32 to vector<8x128xf32>
    %362 = arith.mulf %361, %80 : vector<8x128xf32>
    %363 = arith.addf %359, %362 : vector<8x128xf32>
    %c87 = arith.constant 87 : index
    %364 = memref.load %arg1[%c87] : memref<112xf32, #tpu.memory_space<smem>>
    %365 = vector.broadcast %364 : f32 to vector<8x128xf32>
    %366 = arith.mulf %365, %91 : vector<8x128xf32>
    %367 = arith.addf %363, %366 : vector<8x128xf32>
    %c95 = arith.constant 95 : index
    %368 = memref.load %arg1[%c95] : memref<112xf32, #tpu.memory_space<smem>>
    %369 = vector.broadcast %368 : f32 to vector<8x128xf32>
    %370 = arith.addf %367, %369 : vector<8x128xf32>
    %371 = math.sin %370 : vector<8x128xf32>
    %c96 = arith.constant 96 : index
    %372 = memref.load %arg1[%c96] : memref<112xf32, #tpu.memory_space<smem>>
    %373 = vector.broadcast %372 : f32 to vector<8x128xf32>
    %374 = arith.mulf %373, %126 : vector<8x128xf32>
    %c97 = arith.constant 97 : index
    %375 = memref.load %arg1[%c97] : memref<112xf32, #tpu.memory_space<smem>>
    %376 = vector.broadcast %375 : f32 to vector<8x128xf32>
    %377 = arith.mulf %376, %161 : vector<8x128xf32>
    %378 = arith.addf %374, %377 : vector<8x128xf32>
    %c98 = arith.constant 98 : index
    %379 = memref.load %arg1[%c98] : memref<112xf32, #tpu.memory_space<smem>>
    %380 = vector.broadcast %379 : f32 to vector<8x128xf32>
    %381 = arith.mulf %380, %196 : vector<8x128xf32>
    %382 = arith.addf %378, %381 : vector<8x128xf32>
    %c99 = arith.constant 99 : index
    %383 = memref.load %arg1[%c99] : memref<112xf32, #tpu.memory_space<smem>>
    %384 = vector.broadcast %383 : f32 to vector<8x128xf32>
    %385 = arith.mulf %384, %231 : vector<8x128xf32>
    %386 = arith.addf %382, %385 : vector<8x128xf32>
    %c100 = arith.constant 100 : index
    %387 = memref.load %arg1[%c100] : memref<112xf32, #tpu.memory_space<smem>>
    %388 = vector.broadcast %387 : f32 to vector<8x128xf32>
    %389 = arith.mulf %388, %266 : vector<8x128xf32>
    %390 = arith.addf %386, %389 : vector<8x128xf32>
    %c101 = arith.constant 101 : index
    %391 = memref.load %arg1[%c101] : memref<112xf32, #tpu.memory_space<smem>>
    %392 = vector.broadcast %391 : f32 to vector<8x128xf32>
    %393 = arith.mulf %392, %301 : vector<8x128xf32>
    %394 = arith.addf %390, %393 : vector<8x128xf32>
    %c102 = arith.constant 102 : index
    %395 = memref.load %arg1[%c102] : memref<112xf32, #tpu.memory_space<smem>>
    %396 = vector.broadcast %395 : f32 to vector<8x128xf32>
    %397 = arith.mulf %396, %336 : vector<8x128xf32>
    %398 = arith.addf %394, %397 : vector<8x128xf32>
    %c103 = arith.constant 103 : index
    %399 = memref.load %arg1[%c103] : memref<112xf32, #tpu.memory_space<smem>>
    %400 = vector.broadcast %399 : f32 to vector<8x128xf32>
    %401 = arith.mulf %400, %371 : vector<8x128xf32>
    %402 = arith.addf %398, %401 : vector<8x128xf32>
    %c104 = arith.constant 104 : index
    %403 = memref.load %arg1[%c104] : memref<112xf32, #tpu.memory_space<smem>>
    %404 = vector.broadcast %403 : f32 to vector<8x128xf32>
    %405 = arith.addf %402, %404 : vector<8x128xf32>
    %c0_6 = arith.constant 0 : index
    %c0_7 = arith.constant 0 : index
    %c0_8 = arith.constant 0 : index
    %406 = vector.load %arg3[%c0_6, %c0_7, %c0_8] : memref<1x8x128xf32, #tpu.memory_space<vmem>>, vector<1x8x128xf32>
    %407 = vector.shape_cast %406 : vector<1x8x128xf32> to vector<8x128xf32>
    %408 = vector.shape_cast %405 : vector<8x128xf32> to vector<1x8x128xf32>
    tpu.vector_store %arg3[%c0_6, %c0_7, %c0_8], %408 {strides = array<i32>} : memref<1x8x128xf32, #tpu.memory_space<vmem>>, vector<1x8x128xf32>,
    return
  }
  func.func @transform_0(%arg0: i32) -> i32 {
    %c0_i32 = arith.constant 0 : i32
    %c0_i32_0 = arith.constant 0 : i32
    return %c0_i32 : i32
  }
  func.func @transform_1(%arg0: i32) -> (i32, i32, i32) {
    %c0_i32 = arith.constant 0 : i32
    %c0_i32_0 = arith.constant 0 : i32
    %c0_i32_1 = arith.constant 0 : i32
    return %c0_i32, %arg0, %c0_i32_0 : i32, i32, i32
  }
  func.func @transform_2(%arg0: i32) -> (i32, i32, i32) {
    %c0_i32 = arith.constant 0 : i32
    %c0_i32_0 = arith.constant 0 : i32
    %c0_i32_1 = arith.constant 0 : i32
    return %c0_i32, %arg0, %c0_i32_0 : i32, i32, i32
  }
}

</mosaic_0001>

<llo_original>
// kernel: tpu_custom_call.1
$region0: #{tpu_custom_call.1}
  #allocation0 [shape = 'u32[]', space=smem, size = 0x4, offset = 0x4, fixed_abs, tag = 'smem constant byte address 0x4 - core index']
  #allocation1 [shape = 'u32[72,128]{1,0:T(1,128)}', space=vmem, size = 0x9000, scoped, tag = 'internal scratch']
  %s0 = inlined_call_operand.hbm [shape: f32[112], index: 0, kind: input, shape index: {}]
  %s1 = inlined_call_operand.hbm [shape: f32[2,8,128], index: 1, kind: input, shape index: {}]
  %s2 = inlined_call_operand.hbm [shape: f32[1,8,128], index: 2, kind: output, shape index: {}]
  %s3 = sld [smem:[#allocation0]]
  $region26: #{tpu_custom_call.1} parent=0
    _
  %s5 = ssub.s32 1, %s3
  %s6 = scalar_select 0, %s5, %s3
  $region1: #{tpu_custom_call.1} parent=0
    #allocation2 [shape = 'u8[512]{0}', space=smem, size = 0x200, scoped, tag = 'input window, operand 0, single buffered']
    #allocation3 [shape = 's32[1]{0}', space=sflag, size = 0x4, scoped, tag = 'scoped memory for tpu_custom_call.1']
    #allocation4 [shape = 's32[1]{0}', space=sflag, size = 0x4, scoped, tag = 'scoped memory for tpu_custom_call.1']
    #allocation5 [shape = 's32[1]{0}', space=sflag, size = 0x4, scoped, tag = 'scoped memory for tpu_custom_call.1']
    #allocation6 [shape = 'u8[8192]{0}', space=vmem, size = 0x2000, scoped, tag = 'input window, operand 1, single buffered']
    #allocation7 [shape = 'u8[4096]{0}', space=vmem, size = 0x1000, scoped, tag = 'output window, operand 0, single buffered']
    %7 = vsyncpa [#allocation5], 0
    %8 = vsyncpa [#allocation3], 0
    %9 = vsyncpa [#allocation4], 0
    // Predicated region
    $region2: #{tpu_custom_call.1} parent=1 // pred_check
      _
    $region3: #{tpu_custom_call.1} parent=1 // pred_check_branch
      %11 = sbr.rel (0) target = $region5
    $region4: #{tpu_custom_call.1} parent=1 // pred_region
      %13 = vsyncadd [#allocation5], 0
      %s15 = sshll.u32 %s0, 4
      %s16 = int_to_ptr.hbm [resolvable:$true] %s15
      %18 = dma.hbm_to_smem %s16, 16, [#allocation2], [#allocation5]
    $region5: #{tpu_custom_call.1} parent=1 // pred_fallthru
      _
    // Predicated region
    $region6: #{tpu_custom_call.1} parent=1 // pred_check
      _
    $region7: #{tpu_custom_call.1} parent=1 // pred_check_branch
      %20 = sbr.rel (0) target = $region9
    $region8: #{tpu_custom_call.1} parent=1 // pred_region
      %22 = vsyncadd [#allocation3], 0
      %s23 = sshll.u32 %s1, 4
      %s24 = int_to_ptr.hbm [resolvable:$true] %s23
      %s25 = sshll.u32 [#allocation6], 4
      %s26 = int_to_ptr.vmem [resolvable:$true] %s25
      %31 = dma.hbm_to_vmem [thread:$0]  %s24, 256, %s26, [#allocation3], 128, 128, 8
    $region9: #{tpu_custom_call.1} parent=1 // pred_fallthru
      _
    // Predicated region
    $region10: #{tpu_custom_call.1} parent=1 // pred_check
      _
    $region11: #{tpu_custom_call.1} parent=1 // pred_check_branch
      %33 = sbr.rel (0) target = $region13
    $region12: #{tpu_custom_call.1} parent=1 // pred_region
      %35 = dma.done [#allocation5], 16
    $region13: #{tpu_custom_call.1} parent=1 // pred_fallthru
      _
    // Predicated region
    $region14: #{tpu_custom_call.1} parent=1 // pred_check
      _
    $region15: #{tpu_custom_call.1} parent=1 // pred_check_branch
      %37 = sbr.rel (0) target = $region17
    $region16: #{tpu_custom_call.1} parent=1 // pred_region
      %39 = dma.done [#allocation3], 256
    $region17: #{tpu_custom_call.1} parent=1 // pred_fallthru
      _
    %40 = sfence
    %v41 = vld [vmem:[#allocation6] sm:$0xff]
    %s42 = scalar_lea.vmem [#allocation6], 8
    %v43 = vld [vmem:[%s42] sm:$0xff]
    %s44 = sld [smem:[#allocation2]]
    %v45 = vstv %s44
    %v46 = vmul.f32 %v45, %v41
    %s47 = sld [smem:[#allocation2 + $0x8]]
    %v48 = vstv %s47
    %v49 = vmul.f32 %v48, %v43
    %v50 = vadd.f32 %v46, %v49
    %s51 = sld [smem:[#allocation2 + $0x10]]
    %v52 = vstv %s51
    %v53 = vadd.f32 %v50, %v52
    %v54 = vand.u32 2147483647, %v53
    %vm55 = vcmp.le.f32.partialorder %v54, 0.7853982
    %vm56 = vcmp.lt.s32.totalorder %v53, 0
    %v57 = vand.u32 %v53, 2139095040
    %v58 = vshrl.u32 %v57, 23
    %v59 = vsub.s32 %v58, 127
    %v60 = vand.u32 2147483647, %v53
    %v61 = vand.u32 %v60, 8388607
    %v62 = vor.u32 %v61, 8388608
    %v63 = vsub.s32 0, %v62
    %v64 = vadd.s32 %v59, 1
    %vm65 = vcmp.gt.s32.totalorder %v64, 0
    %v66 = vsel %vm65, %v64, 0
    %v67 = vshrl.u32 %v66, 5
    %v68 = vand.u32 %v66, 31
    %v69 = vsub.s32 32, %v68
    %v70 = vshrl.u32 683565275, %v69
    %v71 = vshll.u32 683565275, %v68
    %v72 = vshrl.u32 2475754826, %v69
    %v73 = vor.u32 %v71, %v72
    %v74 = vshll.u32 2475754826, %v68
    %v75 = vshrl.u32 2131351028, %v69
    %v76 = vor.u32 %v74, %v75
    %v77 = vshll.u32 2131351028, %v68
    %v78 = vshrl.u32 2102212464, %v69
    %v79 = vor.u32 %v77, %v78
    %v80 = vshll.u32 2102212464, %v68
    %v81 = vshrl.u32 920167782, %v69
    %v82 = vor.u32 %v80, %v81
    %v83 = vshll.u32 920167782, %v68
    %v84 = vshrl.u32 1326507024, %v69
    %v85 = vor.u32 %v83, %v84
    %vm86 = vcmp.lt.s32.totalorder %v67, 1
    %vm87 = vcmp.lt.s32.totalorder %v67, 2
    %vm88 = vcmp.lt.s32.totalorder %v67, 3
    %vm89 = vcmp.lt.s32.totalorder %v67, 4
    %v90 = vsel %vm86, %v70, %v73
    %v91 = vsel %vm89, %v79, 2102212464
    %v92 = vsel %vm88, %v76, %v91
    %v93 = vsel %vm87, %v90, %v92
    %v94 = vsel %vm86, %v73, %v76
    %v95 = vsel %vm89, %v82, 920167782
    %v96 = vsel %vm88, %v79, %v95
    %v97 = vsel %vm87, %v94, %v96
    %v98 = vsel %vm86, %v76, %v79
    %v99 = vsel %vm89, %v85, 1326507024
    %v100 = vsel %vm88, %v82, %v99
    %v101 = vsel %vm87, %v98, %v100
    %v102 = vshll.u32 %v62, 8
    %v103 = vand.u32 %v102, 65535
    %v104 = vshrl.u32 %v102, 16
    %v105 = vand.u32 %v101, 65535
    %v106 = vshrl.u32 %v101, 16
    %v107 = vmul.u32 %v103, %v105
    %v108 = vmul.u32 %v103, %v106
    %v109 = vmul.u32 %v104, %v105
    %v110 = vmul.u32 %v104, %v106
    %v111 = vshll.u32 %v108, 16
    %v112 = vshrl.u32 %v108, 16
    %v113 = vshll.u32 %v109, 16
    %v114 = vshrl.u32 %v109, 16
    %vm115 = vc.u32 %v107, %v111
    %v116 = vsel %vm115, 1, 0
    %v117 = vadd.s32 %v107, %v111
    %v118 = vadd.s32 %v110, %v116
    %vm119 = vc.u32 %v117, %v113
    %v120 = vsel %vm119, 1, 0
    %v121 = vadd.s32 %v117, %v113
    %v122 = vadd.s32 %v118, %v120
    %v123 = vadd.s32 %v122, %v112
    %v124 = vadd.s32 %v123, %v114
    %v125 = vand.u32 %v102, 65535
    %v126 = vshrl.u32 %v102, 16
    %v127 = vand.u32 %v97, 65535
    %v128 = vshrl.u32 %v97, 16
    %v129 = vmul.u32 %v125, %v127
    %v130 = vmul.u32 %v125, %v128
    %v131 = vmul.u32 %v126, %v127
    %v132 = vmul.u32 %v126, %v128
    %v133 = vshll.u32 %v130, 16
    %v134 = vshrl.u32 %v130, 16
    %v135 = vshll.u32 %v131, 16
    %v136 = vshrl.u32 %v131, 16
    %vm137 = vc.u32 %v129, %v133
    %v138 = vsel %vm137, 1, 0
    %v139 = vadd.s32 %v129, %v133
    %v140 = vadd.s32 %v132, %v138
    %vm141 = vc.u32 %v139, %v135
    %v142 = vsel %vm141, 1, 0
    %v143 = vadd.s32 %v139, %v135
    %v144 = vadd.s32 %v140, %v142
    %v145 = vadd.s32 %v144, %v134
    %v146 = vadd.s32 %v145, %v136
    %v147 = vmul.u32 %v102, %v93
    %v148 = vadd.s32 %v124, %v143
    %vm149 = vc.u32 %v124, %v143
    %v150 = vadd.s32 %v146, 1
    %v151 = vsel %vm149, %v150, %v146
    %v152 = vadd.s32 %v147, %v151
    %v153 = vadd.s32 %v152, 536870912
    %v154 = vshrl.u32 %v153, 30
    %v155 = vshll.u32 %v154, 30
    %v156 = vsub.s32 %v152, %v155
    %vm157 = vcmp.lt.s32.totalorder %v156, 0
    %v158 = vsub.s32 0, %v156
    %v159 = vsel %vm157, %v158, %v156
    %v160 = vclz %v159
    %v161 = vsub.s32 %v160, 2
    %vm162 = vcmp.gt.s32.totalorder 0, %v161
    %v163 = vsel %vm162, 0, %v161
    %v164 = vsub.s32 32, %v163
    %v165 = vshll.u32 %v156, %v163
    %v166 = vshrl.u32 %v148, %v164
    %v167 = vor.u32 %v165, %v166
    %v168 = vsub.s32 4294967266, %v163
    %v169 = vadd.s32 %v168, 127
    %v170 = vshll.u32 %v169, 23
    %v171 = vor.u32 4788187, %v170
    %v172 = vand.u32 2147483647, %v171
    %v174 = vcvt.s32.f32 %v167
    %v175 = vmul.f32 %v174, %v172
    %v176 = vxor.u32 %v175, 2147483648
    %v177 = vsel %vm56, %v176, %v175
    %v178 = vsub.s32 4, %v154
    %v179 = vsel %vm56, %v178, %v154
    %v180 = vsel %vm55, %v53, %v177
    %v181 = vsel %vm55, 0, %v179
    %v182 = vmul.f32 %v180, %v180
    %v183 = vmul.f32 %v182, -0.001358992
    %v184 = vadd.f32 %v183, 0.041655596
    %v185 = vmul.f32 %v182, %v184
    %v186 = vadd.f32 %v185, -0.4999988
    %v187 = vmul.f32 %v182, %v186
    %v188 = vadd.f32 1.0, %v187
    %v189 = vmul.f32 %v180, %v180
    %v190 = vmul.f32 %v189, -0.00019511016
    %v191 = vadd.f32 %v190, 0.008332121
    %v192 = vmul.f32 %v189, %v191
    %v193 = vadd.f32 %v192, -0.16666654
    %v194 = vmul.f32 %v189, %v193
    %v195 = vadd.f32 %v194, 1.0
    %v196 = vmul.f32 %v195, %v180
    %vm197 = vweird.f32 %v53
    %v198 = vadd.s32 %v181, 3
    %v199 = vand.u32 %v198, 3
    %vm200 = vcmp.lt.s32.totalorder %v199, 2
    %vm201 = vcmp.eq.s32.totalorder %v199, 0
    %v202 = vxor.u32 %v196, 2147483648
    %v203 = vsel %vm201, %v188, %v202
    %vm204 = vcmp.eq.s32.totalorder %v199, 2
    %v205 = vxor.u32 %v188, 2147483648
    %v206 = vsel %vm204, %v205, %v196
    %v207 = vsel %vm200, %v203, %v206
    %v208 = vsel %vm197, nan, %v207
    %s209 = sld [smem:[#allocation2 + $0x1]]
    %v210 = vstv %s209
    %v211 = vmul.f32 %v210, %v41
    %s212 = sld [smem:[#allocation2 + $0x9]]
    %v213 = vstv %s212
    %v214 = vmul.f32 %v213, %v43
    %v215 = vadd.f32 %v211, %v214
    %s216 = sld [smem:[#allocation2 + $0x11]]
    %v217 = vstv %s216
    %v218 = vadd.f32 %v215, %v217
    %v219 = vand.u32 2147483647, %v218
    %vm220 = vcmp.le.f32.partialorder %v219, 0.7853982
    %vm221 = vcmp.lt.s32.totalorder %v218, 0
    %v222 = vand.u32 %v218, 2139095040
    %v223 = vshrl.u32 %v222, 23
    %v224 = vsub.s32 %v223, 127
    %v225 = vand.u32 2147483647, %v218
    %v226 = vand.u32 %v225, 8388607
    %v227 = vor.u32 %v226, 8388608
    %v228 = vsub.s32 0, %v227
    %v229 = vadd.s32 %v224, 1
    %vm230 = vcmp.gt.s32.totalorder %v229, 0
    %v231 = vsel %vm230, %v229, 0
    %v232 = vshrl.u32 %v231, 5
    %v233 = vand.u32 %v231, 31
    %v234 = vsub.s32 32, %v233
    %v235 = vshrl.u32 683565275, %v234
    %v236 = vshll.u32 683565275, %v233
    %v237 = vshrl.u32 2475754826, %v234
    %v238 = vor.u32 %v236, %v237
    %v239 = vshll.u32 2475754826, %v233
    %v240 = vshrl.u32 2131351028, %v234
    %v241 = vor.u32 %v239, %v240
    %v242 = vshll.u32 2131351028, %v233
    %v243 = vshrl.u32 2102212464, %v234
    %v244 = vor.u32 %v242, %v243
    %v245 = vshll.u32 2102212464, %v233
    %v246 = vshrl.u32 920167782, %v234
    %v247 = vor.u32 %v245, %v246
    %v248 = vshll.u32 920167782, %v233
    %v249 = vshrl.u32 1326507024, %v234
    %v250 = vor.u32 %v248, %v249
    %vm251 = vcmp.lt.s32.totalorder %v232, 1
    %vm252 = vcmp.lt.s32.totalorder %v232, 2
    %vm253 = vcmp.lt.s32.totalorder %v232, 3
    %vm254 = vcmp.lt.s32.totalorder %v232, 4
    %v255 = vsel %vm251, %v235, %v238
    %v256 = vsel %vm254, %v244, 2102212464
    %v257 = vsel %vm253, %v241, %v256
    %v258 = vsel %vm252, %v255, %v257
    %v259 = vsel %vm251, %v238, %v241
    %v260 = vsel %vm254, %v247, 920167782
    %v261 = vsel %vm253, %v244, %v260
    %v262 = vsel %vm252, %v259, %v261
    %v263 = vsel %vm251, %v241, %v244
    %v264 = vsel %vm254, %v250, 1326507024
    %v265 = vsel %vm253, %v247, %v264
    %v266 = vsel %vm252, %v263, %v265
    %v267 = vshll.u32 %v227, 8
    %v268 = vand.u32 %v267, 65535
    %v269 = vshrl.u32 %v267, 16
    %v270 = vand.u32 %v266, 65535
    %v271 = vshrl.u32 %v266, 16
    %v272 = vmul.u32 %v268, %v270
    %v273 = vmul.u32 %v268, %v271
    %v274 = vmul.u32 %v269, %v270
    %v275 = vmul.u32 %v269, %v271
    %v276 = vshll.u32 %v273, 16
    %v277 = vshrl.u32 %v273, 16
    %v278 = vshll.u32 %v274, 16
    %v279 = vshrl.u32 %v274, 16
    %vm280 = vc.u32 %v272, %v276
    %v281 = vsel %vm280, 1, 0
    %v282 = vadd.s32 %v272, %v276
    %v283 = vadd.s32 %v275, %v281
    %vm284 = vc.u32 %v282, %v278
    %v285 = vsel %vm284, 1, 0
    %v286 = vadd.s32 %v282, %v278
    %v287 = vadd.s32 %v283, %v285
    %v288 = vadd.s32 %v287, %v277
    %v289 = vadd.s32 %v288, %v279
    %v290 = vand.u32 %v267, 65535
    %v291 = vshrl.u32 %v267, 16
    %v292 = vand.u32 %v262, 65535
    %v293 = vshrl.u32 %v262, 16
    %v294 = vmul.u32 %v290, %v292
    %v295 = vmul.u32 %v290, %v293
    %v296 = vmul.u32 %v291, %v292
    %v297 = vmul.u32 %v291, %v293
    %v298 = vshll.u32 %v295, 16
    %v299 = vshrl.u32 %v295, 16
    %v300 = vshll.u32 %v296, 16
    %v301 = vshrl.u32 %v296, 16
    %vm302 = vc.u32 %v294, %v298
    %v303 = vsel %vm302, 1, 0
    %v304 = vadd.s32 %v294, %v298
    %v305 = vadd.s32 %v297, %v303
    %vm306 = vc.u32 %v304, %v300
    %v307 = vsel %vm306, 1, 0
    %v308 = vadd.s32 %v304, %v300
    %v309 = vadd.s32 %v305, %v307
    %v310 = vadd.s32 %v309, %v299
    %v311 = vadd.s32 %v310, %v301
    %v312 = vmul.u32 %v267, %v258
    %v313 = vadd.s32 %v289, %v308
    %vm314 = vc.u32 %v289, %v308
    %v315 = vadd.s32 %v311, 1
    %v316 = vsel %vm314, %v315, %v311
    %v317 = vadd.s32 %v312, %v316
    %v318 = vadd.s32 %v317, 536870912
    %v319 = vshrl.u32 %v318, 30
    %v320 = vshll.u32 %v319, 30
    %v321 = vsub.s32 %v317, %v320
    %vm322 = vcmp.lt.s32.totalorder %v321, 0
    %v323 = vsub.s32 0, %v321
    %v324 = vsel %vm322, %v323, %v321
    %v325 = vclz %v324
    %v326 = vsub.s32 %v325, 2
    %vm327 = vcmp.gt.s32.totalorder 0, %v326
    %v328 = vsel %vm327, 0, %v326
    %v329 = vsub.s32 32, %v328
    %v330 = vshll.u32 %v321, %v328
    %v331 = vshrl.u32 %v313, %v329
    %v332 = vor.u32 %v330, %v331
    %v333 = vsub.s32 4294967266, %v328
    %v334 = vadd.s32 %v333, 127
    %v335 = vshll.u32 %v334, 23
    %v336 = vor.u32 4788187, %v335
    %v337 = vand.u32 2147483647, %v336
    %v339 = vcvt.s32.f32 %v332
    %v340 = vmul.f32 %v339, %v337
    %v341 = vxor.u32 %v340, 2147483648
    %v342 = vsel %vm221, %v341, %v340
    %v343 = vsub.s32 4, %v319
    %v344 = vsel %vm221, %v343, %v319
    %v345 = vsel %vm220, %v218, %v342
    %v346 = vsel %vm220, 0, %v344
    %v347 = vmul.f32 %v345, %v345
    %v348 = vmul.f32 %v347, -0.001358992
    %v349 = vadd.f32 %v348, 0.041655596
    %v350 = vmul.f32 %v347, %v349
    %v351 = vadd.f32 %v350, -0.4999988
    %v352 = vmul.f32 %v347, %v351
    %v353 = vadd.f32 1.0, %v352
    %v354 = vmul.f32 %v345, %v345
    %v355 = vmul.f32 %v354, -0.00019511016
    %v356 = vadd.f32 %v355, 0.008332121
    %v357 = vmul.f32 %v354, %v356
    %v358 = vadd.f32 %v357, -0.16666654
    %v359 = vmul.f32 %v354, %v358
    %v360 = vadd.f32 %v359, 1.0
    %v361 = vmul.f32 %v360, %v345
    %vm362 = vweird.f32 %v218
    %v363 = vadd.s32 %v346, 3
    %v364 = vand.u32 %v363, 3
    %vm365 = vcmp.lt.s32.totalorder %v364, 2
    %vm366 = vcmp.eq.s32.totalorder %v364, 0
    %v367 = vxor.u32 %v361, 2147483648
    %v368 = vsel %vm366, %v353, %v367
    %vm369 = vcmp.eq.s32.totalorder %v364, 2
    %v370 = vxor.u32 %v353, 2147483648
    %v371 = vsel %vm369, %v370, %v361
    %v372 = vsel %vm365, %v368, %v371
    %v373 = vsel %vm362, nan, %v372
    %s374 = sld [smem:[#allocation2 + $0x2]]
    %v375 = vstv %s374
    %v376 = vmul.f32 %v375, %v41
    %s377 = sld [smem:[#allocation2 + $0xa]]
    %v378 = vstv %s377
    %v379 = vmul.f32 %v378, %v43
    %v380 = vadd.f32 %v376, %v379
    %s381 = sld [smem:[#allocation2 + $0x12]]
    %v382 = vstv %s381
    %v383 = vadd.f32 %v380, %v382
    %v384 = vand.u32 2147483647, %v383
    %vm385 = vcmp.le.f32.partialorder %v384, 0.7853982
    %vm386 = vcmp.lt.s32.totalorder %v383, 0
    %v387 = vand.u32 %v383, 2139095040
    %v388 = vshrl.u32 %v387, 23
    %v389 = vsub.s32 %v388, 127
    %v390 = vand.u32 2147483647, %v383
    %v391 = vand.u32 %v390, 8388607
    %v392 = vor.u32 %v391, 8388608
    %v393 = vsub.s32 0, %v392
    %v394 = vadd.s32 %v389, 1
    %vm395 = vcmp.gt.s32.totalorder %v394, 0
    %v396 = vsel %vm395, %v394, 0
    %v397 = vshrl.u32 %v396, 5
    %v398 = vand.u32 %v396, 31
    %v399 = vsub.s32 32, %v398
    %v400 = vshrl.u32 683565275, %v399
    %v401 = vshll.u32 683565275, %v398
    %v402 = vshrl.u32 2475754826, %v399
    %v403 = vor.u32 %v401, %v402
    %v404 = vshll.u32 2475754826, %v398
    %v405 = vshrl.u32 2131351028, %v399
    %v406 = vor.u32 %v404, %v405
    %v407 = vshll.u32 2131351028, %v398
    %v408 = vshrl.u32 2102212464, %v399
    %v409 = vor.u32 %v407, %v408
    %v410 = vshll.u32 2102212464, %v398
    %v411 = vshrl.u32 920167782, %v399
    %v412 = vor.u32 %v410, %v411
    %v413 = vshll.u32 920167782, %v398
    %v414 = vshrl.u32 1326507024, %v399
    %v415 = vor.u32 %v413, %v414
    %vm416 = vcmp.lt.s32.totalorder %v397, 1
    %vm417 = vcmp.lt.s32.totalorder %v397, 2
    %vm418 = vcmp.lt.s32.totalorder %v397, 3
    %vm419 = vcmp.lt.s32.totalorder %v397, 4
    %v420 = vsel %vm416, %v400, %v403
    %v421 = vsel %vm419, %v409, 2102212464
    %v422 = vsel %vm418, %v406, %v421
    %v423 = vsel %vm417, %v420, %v422
    %v424 = vsel %vm416, %v403, %v406
    %v425 = vsel %vm419, %v412, 920167782
    %v426 = vsel %vm418, %v409, %v425
    %v427 = vsel %vm417, %v424, %v426
    %v428 = vsel %vm416, %v406, %v409
    %v429 = vsel %vm419, %v415, 1326507024
    %v430 = vsel %vm418, %v412, %v429
    %v431 = vsel %vm417, %v428, %v430
    %v432 = vshll.u32 %v392, 8
    %v433 = vand.u32 %v432, 65535
    %v434 = vshrl.u32 %v432, 16
    %v435 = vand.u32 %v431, 65535
    %v436 = vshrl.u32 %v431, 16
    %v437 = vmul.u32 %v433, %v435
    %v438 = vmul.u32 %v433, %v436
    %v439 = vmul.u32 %v434, %v435
    %v440 = vmul.u32 %v434, %v436
    %v441 = vshll.u32 %v438, 16
    %v442 = vshrl.u32 %v438, 16
    %v443 = vshll.u32 %v439, 16
    %v444 = vshrl.u32 %v439, 16
    %vm445 = vc.u32 %v437, %v441
    %v446 = vsel %vm445, 1, 0
    %v447 = vadd.s32 %v437, %v441
    %v448 = vadd.s32 %v440, %v446
    %vm449 = vc.u32 %v447, %v443
    %v450 = vsel %vm449, 1, 0
    %v451 = vadd.s32 %v447, %v443
    %v452 = vadd.s32 %v448, %v450
    %v453 = vadd.s32 %v452, %v442
    %v454 = vadd.s32 %v453, %v444
    %v455 = vand.u32 %v432, 65535
    %v456 = vshrl.u32 %v432, 16
    %v457 = vand.u32 %v427, 65535
    %v458 = vshrl.u32 %v427, 16
    %v459 = vmul.u32 %v455, %v457
    %v460 = vmul.u32 %v455, %v458
    %v461 = vmul.u32 %v456, %v457
    %v462 = vmul.u32 %v456, %v458
    %v463 = vshll.u32 %v460, 16
    %v464 = vshrl.u32 %v460, 16
    %v465 = vshll.u32 %v461, 16
    %v466 = vshrl.u32 %v461, 16
    %vm467 = vc.u32 %v459, %v463
    %v468 = vsel %vm467, 1, 0
    %v469 = vadd.s32 %v459, %v463
    %v470 = vadd.s32 %v462, %v468
    %vm471 = vc.u32 %v469, %v465
    %v472 = vsel %vm471, 1, 0
    %v473 = vadd.s32 %v469, %v465
    %v474 = vadd.s32 %v470, %v472
    %v475 = vadd.s32 %v474, %v464
    %v476 = vadd.s32 %v475, %v466
    %v477 = vmul.u32 %v432, %v423
    %v478 = vadd.s32 %v454, %v473
    %vm479 = vc.u32 %v454, %v473
    %v480 = vadd.s32 %v476, 1
    %v481 = vsel %vm479, %v480, %v476
    %v482 = vadd.s32 %v477, %v481
    %v483 = vadd.s32 %v482, 536870912
    %v484 = vshrl.u32 %v483, 30
    %v485 = vshll.u32 %v484, 30
    %v486 = vsub.s32 %v482, %v485
    %vm487 = vcmp.lt.s32.totalorder %v486, 0
    %v488 = vsub.s32 0, %v486
    %v489 = vsel %vm487, %v488, %v486
    %v490 = vclz %v489
    %v491 = vsub.s32 %v490, 2
    %vm492 = vcmp.gt.s32.totalorder 0, %v491
    %v493 = vsel %vm492, 0, %v491
    %v494 = vsub.s32 32, %v493
    %v495 = vshll.u32 %v486, %v493
    %v496 = vshrl.u32 %v478, %v494
    %v497 = vor.u32 %v495, %v496
    %v498 = vsub.s32 4294967266, %v493
    %v499 = vadd.s32 %v498, 127
    %v500 = vshll.u32 %v499, 23
    %v501 = vor.u32 4788187, %v500
    %v502 = vand.u32 2147483647, %v501
    %v504 = vcvt.s32.f32 %v497
    %v505 = vmul.f32 %v504, %v502
    %v506 = vxor.u32 %v505, 2147483648
    %v507 = vsel %vm386, %v506, %v505
    %v508 = vsub.s32 4, %v484
    %v509 = vsel %vm386, %v508, %v484
    %v510 = vsel %vm385, %v383, %v507
    %v511 = vsel %vm385, 0, %v509
    %v512 = vmul.f32 %v510, %v510
    %v513 = vmul.f32 %v512, -0.001358992
    %v514 = vadd.f32 %v513, 0.041655596
    %v515 = vmul.f32 %v512, %v514
    %v516 = vadd.f32 %v515, -0.4999988
    %v517 = vmul.f32 %v512, %v516
    %v518 = vadd.f32 1.0, %v517
    %v519 = vmul.f32 %v510, %v510
    %v520 = vmul.f32 %v519, -0.00019511016
    %v521 = vadd.f32 %v520, 0.008332121
    %v522 = vmul.f32 %v519, %v521
    %v523 = vadd.f32 %v522, -0.16666654
    %v524 = vmul.f32 %v519, %v523
    %v525 = vadd.f32 %v524, 1.0
    %v526 = vmul.f32 %v525, %v510
    %vm527 = vweird.f32 %v383
    %v528 = vadd.s32 %v511, 3
    %v529 = vand.u32 %v528, 3
    %vm530 = vcmp.lt.s32.totalorder %v529, 2
    %vm531 = vcmp.eq.s32.totalorder %v529, 0
    %v532 = vxor.u32 %v526, 2147483648
    %v533 = vsel %vm531, %v518, %v532
    %vm534 = vcmp.eq.s32.totalorder %v529, 2
    %v535 = vxor.u32 %v518, 2147483648
    %v536 = vsel %vm534, %v535, %v526
    %v537 = vsel %vm530, %v533, %v536
    %v538 = vsel %vm527, nan, %v537
    %s539 = sld [smem:[#allocation2 + $0x3]]
    %v540 = vstv %s539
    %v541 = vmul.f32 %v540, %v41
    %s542 = sld [smem:[#allocation2 + $0xb]]
    %v543 = vstv %s542
    %v544 = vmul.f32 %v543, %v43
    %v545 = vadd.f32 %v541, %v544
    %s546 = sld [smem:[#allocation2 + $0x13]]
    %v547 = vstv %s546
    %v548 = vadd.f32 %v545, %v547
    %v549 = vand.u32 2147483647, %v548
    %vm550 = vcmp.le.f32.partialorder %v549, 0.7853982
    %vm551 = vcmp.lt.s32.totalorder %v548, 0
    %v552 = vand.u32 %v548, 2139095040
    %v553 = vshrl.u32 %v552, 23
    %v554 = vsub.s32 %v553, 127
    %v555 = vand.u32 2147483647, %v548
    %v556 = vand.u32 %v555, 8388607
    %v557 = vor.u32 %v556, 8388608
    %v558 = vsub.s32 0, %v557
    %v559 = vadd.s32 %v554, 1
    %vm560 = vcmp.gt.s32.totalorder %v559, 0
    %v561 = vsel %vm560, %v559, 0
    %v562 = vshrl.u32 %v561, 5
    %v563 = vand.u32 %v561, 31
    %v564 = vsub.s32 32, %v563
    %v565 = vshrl.u32 683565275, %v564
    %v566 = vshll.u32 683565275, %v563
    %v567 = vshrl.u32 2475754826, %v564
    %v568 = vor.u32 %v566, %v567
    %v569 = vshll.u32 2475754826, %v563
    %v570 = vshrl.u32 2131351028, %v564
    %v571 = vor.u32 %v569, %v570
    %v572 = vshll.u32 2131351028, %v563
    %v573 = vshrl.u32 2102212464, %v564
    %v574 = vor.u32 %v572, %v573
    %v575 = vshll.u32 2102212464, %v563
    %v576 = vshrl.u32 920167782, %v564
    %v577 = vor.u32 %v575, %v576
    %v578 = vshll.u32 920167782, %v563
    %v579 = vshrl.u32 1326507024, %v564
    %v580 = vor.u32 %v578, %v579
    %vm581 = vcmp.lt.s32.totalorder %v562, 1
    %vm582 = vcmp.lt.s32.totalorder %v562, 2
    %vm583 = vcmp.lt.s32.totalorder %v562, 3
    %vm584 = vcmp.lt.s32.totalorder %v562, 4
    %v585 = vsel %vm581, %v565, %v568
    %v586 = vsel %vm584, %v574, 2102212464
    %v587 = vsel %vm583, %v571, %v586
    %v588 = vsel %vm582, %v585, %v587
    %v589 = vsel %vm581, %v568, %v571
    %v590 = vsel %vm584, %v577, 920167782
    %v591 = vsel %vm583, %v574, %v590
    %v592 = vsel %vm582, %v589, %v591
    %v593 = vsel %vm581, %v571, %v574
    %v594 = vsel %vm584, %v580, 1326507024
    %v595 = vsel %vm583, %v577, %v594
    %v596 = vsel %vm582, %v593, %v595
    %v597 = vshll.u32 %v557, 8
    %v598 = vand.u32 %v597, 65535
    %v599 = vshrl.u32 %v597, 16
    %v600 = vand.u32 %v596, 65535
    %v601 = vshrl.u32 %v596, 16
    %v602 = vmul.u32 %v598, %v600
    %v603 = vmul.u32 %v598, %v601
    %v604 = vmul.u32 %v599, %v600
    %v605 = vmul.u32 %v599, %v601
    %v606 = vshll.u32 %v603, 16
    %v607 = vshrl.u32 %v603, 16
    %v608 = vshll.u32 %v604, 16
    %v609 = vshrl.u32 %v604, 16
    %vm610 = vc.u32 %v602, %v606
    %v611 = vsel %vm610, 1, 0
    %v612 = vadd.s32 %v602, %v606
    %v613 = vadd.s32 %v605, %v611
    %vm614 = vc.u32 %v612, %v608
    %v615 = vsel %vm614, 1, 0
    %v616 = vadd.s32 %v612, %v608
    %v617 = vadd.s32 %v613, %v615
    %v618 = vadd.s32 %v617, %v607
    %v619 = vadd.s32 %v618, %v609
    %v620 = vand.u32 %v597, 65535
    %v621 = vshrl.u32 %v597, 16
    %v622 = vand.u32 %v592, 65535
    %v623 = vshrl.u32 %v592, 16
    %v624 = vmul.u32 %v620, %v622
    %v625 = vmul.u32 %v620, %v623
    %v626 = vmul.u32 %v621, %v622
    %v627 = vmul.u32 %v621, %v623
    %v628 = vshll.u32 %v625, 16
    %v629 = vshrl.u32 %v625, 16
    %v630 = vshll.u32 %v626, 16
    %v631 = vshrl.u32 %v626, 16
    %vm632 = vc.u32 %v624, %v628
    %v633 = vsel %vm632, 1, 0
    %v634 = vadd.s32 %v624, %v628
    %v635 = vadd.s32 %v627, %v633
    %vm636 = vc.u32 %v634, %v630
    %v637 = vsel %vm636, 1, 0
    %v638 = vadd.s32 %v634, %v630
    %v639 = vadd.s32 %v635, %v637
    %v640 = vadd.s32 %v639, %v629
    %v641 = vadd.s32 %v640, %v631
    %v642 = vmul.u32 %v597, %v588
    %v643 = vadd.s32 %v619, %v638
    %vm644 = vc.u32 %v619, %v638
    %v645 = vadd.s32 %v641, 1
    %v646 = vsel %vm644, %v645, %v641
    %v647 = vadd.s32 %v642, %v646
    %v648 = vadd.s32 %v647, 536870912
    %v649 = vshrl.u32 %v648, 30
    %v650 = vshll.u32 %v649, 30
    %v651 = vsub.s32 %v647, %v650
    %vm652 = vcmp.lt.s32.totalorder %v651, 0
    %v653 = vsub.s32 0, %v651
    %v654 = vsel %vm652, %v653, %v651
    %v655 = vclz %v654
    %v656 = vsub.s32 %v655, 2
    %vm657 = vcmp.gt.s32.totalorder 0, %v656
    %v658 = vsel %vm657, 0, %v656
    %v659 = vsub.s32 32, %v658
    %v660 = vshll.u32 %v651, %v658
    %v661 = vshrl.u32 %v643, %v659
    %v662 = vor.u32 %v660, %v661
    %v663 = vsub.s32 4294967266, %v658
    %v664 = vadd.s32 %v663, 127
    %v665 = vshll.u32 %v664, 23
    %v666 = vor.u32 4788187, %v665
    %v667 = vand.u32 2147483647, %v666
    %v669 = vcvt.s32.f32 %v662
    %v670 = vmul.f32 %v669, %v667
    %v671 = vxor.u32 %v670, 2147483648
    %v672 = vsel %vm551, %v671, %v670
    %v673 = vsub.s32 4, %v649
    %v674 = vsel %vm551, %v673, %v649
    %v675 = vsel %vm550, %v548, %v672
    %v676 = vsel %vm550, 0, %v674
    %v677 = vmul.f32 %v675, %v675
    %v678 = vmul.f32 %v677, -0.001358992
    %v679 = vadd.f32 %v678, 0.041655596
    %v680 = vmul.f32 %v677, %v679
    %v681 = vadd.f32 %v680, -0.4999988
    %v682 = vmul.f32 %v677, %v681
    %v683 = vadd.f32 1.0, %v682
    %v684 = vmul.f32 %v675, %v675
    %v685 = vmul.f32 %v684, -0.00019511016
    %v686 = vadd.f32 %v685, 0.008332121
    %v687 = vmul.f32 %v684, %v686
    %v688 = vadd.f32 %v687, -0.16666654
    %v689 = vmul.f32 %v684, %v688
    %v690 = vadd.f32 %v689, 1.0
    %v691 = vmul.f32 %v690, %v675
    %vm692 = vweird.f32 %v548
    %v693 = vadd.s32 %v676, 3
    %v694 = vand.u32 %v693, 3
    %vm695 = vcmp.lt.s32.totalorder %v694, 2
    %vm696 = vcmp.eq.s32.totalorder %v694, 0
    %v697 = vxor.u32 %v691, 2147483648
    %v698 = vsel %vm696, %v683, %v697
    %vm699 = vcmp.eq.s32.totalorder %v694, 2
    %v700 = vxor.u32 %v683, 2147483648
    %v701 = vsel %vm699, %v700, %v691
    %v702 = vsel %vm695, %v698, %v701
    %v703 = vsel %vm692, nan, %v702
    %s704 = sld [smem:[#allocation2 + $0x4]]
    %v705 = vstv %s704
    %v706 = vmul.f32 %v705, %v41
    %s707 = sld [smem:[#allocation2 + $0xc]]
    %v708 = vstv %s707
    %v709 = vmul.f32 %v708, %v43
    %v710 = vadd.f32 %v706, %v709
    %s711 = sld [smem:[#allocation2 + $0x14]]
    %v712 = vstv %s711
    %v713 = vadd.f32 %v710, %v712
    %v714 = vand.u32 2147483647, %v713
    %vm715 = vcmp.le.f32.partialorder %v714, 0.7853982
    %vm716 = vcmp.lt.s32.totalorder %v713, 0
    %v717 = vand.u32 %v713, 2139095040
    %v718 = vshrl.u32 %v717, 23
    %v719 = vsub.s32 %v718, 127
    %v720 = vand.u32 2147483647, %v713
    %v721 = vand.u32 %v720, 8388607
    %v722 = vor.u32 %v721, 8388608
    %v723 = vsub.s32 0, %v722
    %v724 = vadd.s32 %v719, 1
    %vm725 = vcmp.gt.s32.totalorder %v724, 0
    %v726 = vsel %vm725, %v724, 0
    %v727 = vshrl.u32 %v726, 5
    %v728 = vand.u32 %v726, 31
    %v729 = vsub.s32 32, %v728
    %v730 = vshrl.u32 683565275, %v729
    %v731 = vshll.u32 683565275, %v728
    %v732 = vshrl.u32 2475754826, %v729
    %v733 = vor.u32 %v731, %v732
    %v734 = vshll.u32 2475754826, %v728
    %v735 = vshrl.u32 2131351028, %v729
    %v736 = vor.u32 %v734, %v735
    %v737 = vshll.u32 2131351028, %v728
    %v738 = vshrl.u32 2102212464, %v729
    %v739 = vor.u32 %v737, %v738
    %v740 = vshll.u32 2102212464, %v728
    %v741 = vshrl.u32 920167782, %v729
    %v742 = vor.u32 %v740, %v741
    %v743 = vshll.u32 920167782, %v728
    %v744 = vshrl.u32 1326507024, %v729
    %v745 = vor.u32 %v743, %v744
    %vm746 = vcmp.lt.s32.totalorder %v727, 1
    %vm747 = vcmp.lt.s32.totalorder %v727, 2
    %vm748 = vcmp.lt.s32.totalorder %v727, 3
    %vm749 = vcmp.lt.s32.totalorder %v727, 4
    %v750 = vsel %vm746, %v730, %v733
    %v751 = vsel %vm749, %v739, 2102212464
    %v752 = vsel %vm748, %v736, %v751
    %v753 = vsel %vm747, %v750, %v752
    %v754 = vsel %vm746, %v733, %v736
    %v755 = vsel %vm749, %v742, 920167782
    %v756 = vsel %vm748, %v739, %v755
    %v757 = vsel %vm747, %v754, %v756
    %v758 = vsel %vm746, %v736, %v739
    %v759 = vsel %vm749, %v745, 1326507024
    %v760 = vsel %vm748, %v742, %v759
    %v761 = vsel %vm747, %v758, %v760
    %v762 = vshll.u32 %v722, 8
    %v763 = vand.u32 %v762, 65535
    %v764 = vshrl.u32 %v762, 16
    %v765 = vand.u32 %v761, 65535
    %v766 = vshrl.u32 %v761, 16
    %v767 = vmul.u32 %v763, %v765
    %v768 = vmul.u32 %v763, %v766
    %v769 = vmul.u32 %v764, %v765
    %v770 = vmul.u32 %v764, %v766
    %v771 = vshll.u32 %v768, 16
    %v772 = vshrl.u32 %v768, 16
    %v773 = vshll.u32 %v769, 16
    %v774 = vshrl.u32 %v769, 16
    %vm775 = vc.u32 %v767, %v771
    %v776 = vsel %vm775, 1, 0
    %v777 = vadd.s32 %v767, %v771
    %v778 = vadd.s32 %v770, %v776
    %vm779 = vc.u32 %v777, %v773
    %v780 = vsel %vm779, 1, 0
    %v781 = vadd.s32 %v777, %v773
    %v782 = vadd.s32 %v778, %v780
    %v783 = vadd.s32 %v782, %v772
    %v784 = vadd.s32 %v783, %v774
    %v785 = vand.u32 %v762, 65535
    %v786 = vshrl.u32 %v762, 16
    %v787 = vand.u32 %v757, 65535
    %v788 = vshrl.u32 %v757, 16
    %v789 = vmul.u32 %v785, %v787
    %v790 = vmul.u32 %v785, %v788
    %v791 = vmul.u32 %v786, %v787
    %v792 = vmul.u32 %v786, %v788
    %v793 = vshll.u32 %v790, 16
    %v794 = vshrl.u32 %v790, 16
    %v795 = vshll.u32 %v791, 16
    %v796 = vshrl.u32 %v791, 16
    %vm797 = vc.u32 %v789, %v793
    %v798 = vsel %vm797, 1, 0
    %v799 = vadd.s32 %v789, %v793
    %v800 = vadd.s32 %v792, %v798
    %vm801 = vc.u32 %v799, %v795
    %v802 = vsel %vm801, 1, 0
    %v803 = vadd.s32 %v799, %v795
    %v804 = vadd.s32 %v800, %v802
    %v805 = vadd.s32 %v804, %v794
    %v806 = vadd.s32 %v805, %v796
    %v807 = vmul.u32 %v762, %v753
    %v808 = vadd.s32 %v784, %v803
    %vm809 = vc.u32 %v784, %v803
    %v810 = vadd.s32 %v806, 1
    %v811 = vsel %vm809, %v810, %v806
    %v812 = vadd.s32 %v807, %v811
    %v813 = vadd.s32 %v812, 536870912
    %v814 = vshrl.u32 %v813, 30
    %v815 = vshll.u32 %v814, 30
    %v816 = vsub.s32 %v812, %v815
    %vm817 = vcmp.lt.s32.totalorder %v816, 0
    %v818 = vsub.s32 0, %v816
    %v819 = vsel %vm817, %v818, %v816
    %v820 = vclz %v819
    %v821 = vsub.s32 %v820, 2
    %vm822 = vcmp.gt.s32.totalorder 0, %v821
    %v823 = vsel %vm822, 0, %v821
    %v824 = vsub.s32 32, %v823
    %v825 = vshll.u32 %v816, %v823
    %v826 = vshrl.u32 %v808, %v824
    %v827 = vor.u32 %v825, %v826
    %v828 = vsub.s32 4294967266, %v823
    %v829 = vadd.s32 %v828, 127
    %v830 = vshll.u32 %v829, 23
    %v831 = vor.u32 4788187, %v830
    %v832 = vand.u32 2147483647, %v831
    %v834 = vcvt.s32.f32 %v827
    %v835 = vmul.f32 %v834, %v832
    %v836 = vxor.u32 %v835, 2147483648
    %v837 = vsel %vm716, %v836, %v835
    %v838 = vsub.s32 4, %v814
    %v839 = vsel %vm716, %v838, %v814
    %v840 = vsel %vm715, %v713, %v837
    %v841 = vsel %vm715, 0, %v839
    %v842 = vmul.f32 %v840, %v840
    %v843 = vmul.f32 %v842, -0.001358992
    %v844 = vadd.f32 %v843, 0.041655596
    %v845 = vmul.f32 %v842, %v844
    %v846 = vadd.f32 %v845, -0.4999988
    %v847 = vmul.f32 %v842, %v846
    %v848 = vadd.f32 1.0, %v847
    %v849 = vmul.f32 %v840, %v840
    %v850 = vmul.f32 %v849, -0.00019511016
    %v851 = vadd.f32 %v850, 0.008332121
    %v852 = vmul.f32 %v849, %v851
    %v853 = vadd.f32 %v852, -0.16666654
    %v854 = vmul.f32 %v849, %v853
    %v855 = vadd.f32 %v854, 1.0
    %v856 = vmul.f32 %v855, %v840
    %vm857 = vweird.f32 %v713
    %v858 = vadd.s32 %v841, 3
    %v859 = vand.u32 %v858, 3
    %vm860 = vcmp.lt.s32.totalorder %v859, 2
    %vm861 = vcmp.eq.s32.totalorder %v859, 0
    %v862 = vxor.u32 %v856, 2147483648
    %v863 = vsel %vm861, %v848, %v862
    %vm864 = vcmp.eq.s32.totalorder %v859, 2
    %v865 = vxor.u32 %v848, 2147483648
    %v866 = vsel %vm864, %v865, %v856
    %v867 = vsel %vm860, %v863, %v866
    %v868 = vsel %vm857, nan, %v867
    %s869 = sld [smem:[#allocation2 + $0x5]]
    %v870 = vstv %s869
    %v871 = vmul.f32 %v870, %v41
    %s872 = sld [smem:[#allocation2 + $0xd]]
    %v873 = vstv %s872
    %v874 = vmul.f32 %v873, %v43
    %v875 = vadd.f32 %v871, %v874
    %s876 = sld [smem:[#allocation2 + $0x15]]
    %v877 = vstv %s876
    %v878 = vadd.f32 %v875, %v877
    %v879 = vand.u32 2147483647, %v878
    %vm880 = vcmp.le.f32.partialorder %v879, 0.7853982
    %vm881 = vcmp.lt.s32.totalorder %v878, 0
    %v882 = vand.u32 %v878, 2139095040
    %v883 = vshrl.u32 %v882, 23
    %v884 = vsub.s32 %v883, 127
    %v885 = vand.u32 2147483647, %v878
    %v886 = vand.u32 %v885, 8388607
    %v887 = vor.u32 %v886, 8388608
    %v888 = vsub.s32 0, %v887
    %v889 = vadd.s32 %v884, 1
    %vm890 = vcmp.gt.s32.totalorder %v889, 0
    %v891 = vsel %vm890, %v889, 0
    %v892 = vshrl.u32 %v891, 5
    %v893 = vand.u32 %v891, 31
    %v894 = vsub.s32 32, %v893
    %v895 = vshrl.u32 683565275, %v894
    %v896 = vshll.u32 683565275, %v893
    %v897 = vshrl.u32 2475754826, %v894
    %v898 = vor.u32 %v896, %v897
    %v899 = vshll.u32 2475754826, %v893
    %v900 = vshrl.u32 2131351028, %v894
    %v901 = vor.u32 %v899, %v900
    %v902 = vshll.u32 2131351028, %v893
    %v903 = vshrl.u32 2102212464, %v894
    %v904 = vor.u32 %v902, %v903
    %v905 = vshll.u32 2102212464, %v893
    %v906 = vshrl.u32 920167782, %v894
    %v907 = vor.u32 %v905, %v906
    %v908 = vshll.u32 920167782, %v893
    %v909 = vshrl.u32 1326507024, %v894
    %v910 = vor.u32 %v908, %v909
    %vm911 = vcmp.lt.s32.totalorder %v892, 1
    %vm912 = vcmp.lt.s32.totalorder %v892, 2
    %vm913 = vcmp.lt.s32.totalorder %v892, 3
    %vm914 = vcmp.lt.s32.totalorder %v892, 4
    %v915 = vsel %vm911, %v895, %v898
    %v916 = vsel %vm914, %v904, 2102212464
    %v917 = vsel %vm913, %v901, %v916
    %v918 = vsel %vm912, %v915, %v917
    %v919 = vsel %vm911, %v898, %v901
    %v920 = vsel %vm914, %v907, 920167782
    %v921 = vsel %vm913, %v904, %v920
    %v922 = vsel %vm912, %v919, %v921
    %v923 = vsel %vm911, %v901, %v904
    %v924 = vsel %vm914, %v910, 1326507024
    %v925 = vsel %vm913, %v907, %v924
    %v926 = vsel %vm912, %v923, %v925
    %v927 = vshll.u32 %v887, 8
    %v928 = vand.u32 %v927, 65535
    %v929 = vshrl.u32 %v927, 16
    %v930 = vand.u32 %v926, 65535
    %v931 = vshrl.u32 %v926, 16
    %v932 = vmul.u32 %v928, %v930
    %v933 = vmul.u32 %v928, %v931
    %v934 = vmul.u32 %v929, %v930
    %v935 = vmul.u32 %v929, %v931
    %v936 = vshll.u32 %v933, 16
    %v937 = vshrl.u32 %v933, 16
    %v938 = vshll.u32 %v934, 16
    %v939 = vshrl.u32 %v934, 16
    %vm940 = vc.u32 %v932, %v936
    %v941 = vsel %vm940, 1, 0
    %v942 = vadd.s32 %v932, %v936
    %v943 = vadd.s32 %v935, %v941
    %vm944 = vc.u32 %v942, %v938
    %v945 = vsel %vm944, 1, 0
    %v946 = vadd.s32 %v942, %v938
    %v947 = vadd.s32 %v943, %v945
    %v948 = vadd.s32 %v947, %v937
    %v949 = vadd.s32 %v948, %v939
    %v950 = vand.u32 %v927, 65535
    %v951 = vshrl.u32 %v927, 16
    %v952 = vand.u32 %v922, 65535
    %v953 = vshrl.u32 %v922, 16
    %v954 = vmul.u32 %v950, %v952
    %v955 = vmul.u32 %v950, %v953
    %v956 = vmul.u32 %v951, %v952
    %v957 = vmul.u32 %v951, %v953
    %v958 = vshll.u32 %v955, 16
    %v959 = vshrl.u32 %v955, 16
    %v960 = vshll.u32 %v956, 16
    %v961 = vshrl.u32 %v956, 16
    %vm962 = vc.u32 %v954, %v958
    %v963 = vsel %vm962, 1, 0
    %v964 = vadd.s32 %v954, %v958
    %v965 = vadd.s32 %v957, %v963
    %vm966 = vc.u32 %v964, %v960
    %v967 = vsel %vm966, 1, 0
    %v968 = vadd.s32 %v964, %v960
    %v969 = vadd.s32 %v965, %v967
    %v970 = vadd.s32 %v969, %v959
    %v971 = vadd.s32 %v970, %v961
    %v972 = vmul.u32 %v927, %v918
    %v973 = vadd.s32 %v949, %v968
    %vm974 = vc.u32 %v949, %v968
    %v975 = vadd.s32 %v971, 1
    %v976 = vsel %vm974, %v975, %v971
    %v977 = vadd.s32 %v972, %v976
    %v978 = vadd.s32 %v977, 536870912
    %v979 = vshrl.u32 %v978, 30
    %v980 = vshll.u32 %v979, 30
    %v981 = vsub.s32 %v977, %v980
    %vm982 = vcmp.lt.s32.totalorder %v981, 0
    %v983 = vsub.s32 0, %v981
    %v984 = vsel %vm982, %v983, %v981
    %v985 = vclz %v984
    %v986 = vsub.s32 %v985, 2
    %vm987 = vcmp.gt.s32.totalorder 0, %v986
    %v988 = vsel %vm987, 0, %v986
    %v989 = vsub.s32 32, %v988
    %v990 = vshll.u32 %v981, %v988
    %v991 = vshrl.u32 %v973, %v989
    %v992 = vor.u32 %v990, %v991
    %v993 = vsub.s32 4294967266, %v988
    %v994 = vadd.s32 %v993, 127
    %v995 = vshll.u32 %v994, 23
    %v996 = vor.u32 4788187, %v995
    %v997 = vand.u32 2147483647, %v996
    %v999 = vcvt.s32.f32 %v992
    %v1000 = vmul.f32 %v999, %v997
    %v1001 = vxor.u32 %v1000, 2147483648
    %v1002 = vsel %vm881, %v1001, %v1000
    %v1003 = vsub.s32 4, %v979
    %v1004 = vsel %vm881, %v1003, %v979
    %v1005 = vsel %vm880, %v878, %v1002
    %v1006 = vsel %vm880, 0, %v1004
    %v1007 = vmul.f32 %v1005, %v1005
    %v1008 = vmul.f32 %v1007, -0.001358992
    %v1009 = vadd.f32 %v1008, 0.041655596
    %v1010 = vmul.f32 %v1007, %v1009
    %v1011 = vadd.f32 %v1010, -0.4999988
    %v1012 = vmul.f32 %v1007, %v1011
    %v1013 = vadd.f32 1.0, %v1012
    %v1014 = vmul.f32 %v1005, %v1005
    %v1015 = vmul.f32 %v1014, -0.00019511016
    %v1016 = vadd.f32 %v1015, 0.008332121
    %v1017 = vmul.f32 %v1014, %v1016
    %v1018 = vadd.f32 %v1017, -0.16666654
    %v1019 = vmul.f32 %v1014, %v1018
    %v1020 = vadd.f32 %v1019, 1.0
    %v1021 = vmul.f32 %v1020, %v1005
    %vm1022 = vweird.f32 %v878
    %v1023 = vadd.s32 %v1006, 3
    %v1024 = vand.u32 %v1023, 3
    %vm1025 = vcmp.lt.s32.totalorder %v1024, 2
    %vm1026 = vcmp.eq.s32.totalorder %v1024, 0
    %v1027 = vxor.u32 %v1021, 2147483648
    %v1028 = vsel %vm1026, %v1013, %v1027
    %vm1029 = vcmp.eq.s32.totalorder %v1024, 2
    %v1030 = vxor.u32 %v1013, 2147483648
    %v1031 = vsel %vm1029, %v1030, %v1021
    %v1032 = vsel %vm1025, %v1028, %v1031
    %v1033 = vsel %vm1022, nan, %v1032
    %s1034 = sld [smem:[#allocation2 + $0x6]]
    %v1035 = vstv %s1034
    %v1036 = vmul.f32 %v1035, %v41
    %s1037 = sld [smem:[#allocation2 + $0xe]]
    %v1038 = vstv %s1037
    %v1039 = vmul.f32 %v1038, %v43
    %v1040 = vadd.f32 %v1036, %v1039
    %s1041 = sld [smem:[#allocation2 + $0x16]]
    %v1042 = vstv %s1041
    %v1043 = vadd.f32 %v1040, %v1042
    %v1044 = vand.u32 2147483647, %v1043
    %vm1045 = vcmp.le.f32.partialorder %v1044, 0.7853982
    %vm1046 = vcmp.lt.s32.totalorder %v1043, 0
    %v1047 = vand.u32 %v1043, 2139095040
    %v1048 = vshrl.u32 %v1047, 23
    %v1049 = vsub.s32 %v1048, 127
    %v1050 = vand.u32 2147483647, %v1043
    %v1051 = vand.u32 %v1050, 8388607
    %v1052 = vor.u32 %v1051, 8388608
    %v1053 = vsub.s32 0, %v1052
    %v1054 = vadd.s32 %v1049, 1
    %vm1055 = vcmp.gt.s32.totalorder %v1054, 0
    %v1056 = vsel %vm1055, %v1054, 0
    %v1057 = vshrl.u32 %v1056, 5
    %v1058 = vand.u32 %v1056, 31
    %v1059 = vsub.s32 32, %v1058
    %v1060 = vshrl.u32 683565275, %v1059
    %v1061 = vshll.u32 683565275, %v1058
    %v1062 = vshrl.u32 2475754826, %v1059
    %v1063 = vor.u32 %v1061, %v1062
    %v1064 = vshll.u32 2475754826, %v1058
    %v1065 = vshrl.u32 2131351028, %v1059
    %v1066 = vor.u32 %v1064, %v1065
    %v1067 = vshll.u32 2131351028, %v1058
    %v1068 = vshrl.u32 2102212464, %v1059
    %v1069 = vor.u32 %v1067, %v1068
    %v1070 = vshll.u32 2102212464, %v1058
    %v1071 = vshrl.u32 920167782, %v1059
    %v1072 = vor.u32 %v1070, %v1071
    %v1073 = vshll.u32 920167782, %v1058
    %v1074 = vshrl.u32 1326507024, %v1059
    %v1075 = vor.u32 %v1073, %v1074
    %vm1076 = vcmp.lt.s32.totalorder %v1057, 1
    %vm1077 = vcmp.lt.s32.totalorder %v1057, 2
    %vm1078 = vcmp.lt.s32.totalorder %v1057, 3
    %vm1079 = vcmp.lt.s32.totalorder %v1057, 4
    %v1080 = vsel %vm1076, %v1060, %v1063
    %v1081 = vsel %vm1079, %v1069, 2102212464
    %v1082 = vsel %vm1078, %v1066, %v1081
    %v1083 = vsel %vm1077, %v1080, %v1082
    %v1084 = vsel %vm1076, %v1063, %v1066
    %v1085 = vsel %vm1079, %v1072, 920167782
    %v1086 = vsel %vm1078, %v1069, %v1085
    %v1087 = vsel %vm1077, %v1084, %v1086
    %v1088 = vsel %vm1076, %v1066, %v1069
    %v1089 = vsel %vm1079, %v1075, 1326507024
    %v1090 = vsel %vm1078, %v1072, %v1089
    %v1091 = vsel %vm1077, %v1088, %v1090
    %v1092 = vshll.u32 %v1052, 8
    %v1093 = vand.u32 %v1092, 65535
    %v1094 = vshrl.u32 %v1092, 16
    %v1095 = vand.u32 %v1091, 65535
    %v1096 = vshrl.u32 %v1091, 16
    %v1097 = vmul.u32 %v1093, %v1095
    %v1098 = vmul.u32 %v1093, %v1096
    %v1099 = vmul.u32 %v1094, %v1095
    %v1100 = vmul.u32 %v1094, %v1096
    %v1101 = vshll.u32 %v1098, 16
    %v1102 = vshrl.u32 %v1098, 16
    %v1103 = vshll.u32 %v1099, 16
    %v1104 = vshrl.u32 %v1099, 16
    %vm1105 = vc.u32 %v1097, %v1101
    %v1106 = vsel %vm1105, 1, 0
    %v1107 = vadd.s32 %v1097, %v1101
    %v1108 = vadd.s32 %v1100, %v1106
    %vm1109 = vc.u32 %v1107, %v1103
    %v1110 = vsel %vm1109, 1, 0
    %v1111 = vadd.s32 %v1107, %v1103
    %v1112 = vadd.s32 %v1108, %v1110
    %v1113 = vadd.s32 %v1112, %v1102
    %v1114 = vadd.s32 %v1113, %v1104
    %v1115 = vand.u32 %v1092, 65535
    %v1116 = vshrl.u32 %v1092, 16
    %v1117 = vand.u32 %v1087, 65535
    %v1118 = vshrl.u32 %v1087, 16
    %v1119 = vmul.u32 %v1115, %v1117
    %v1120 = vmul.u32 %v1115, %v1118
    %v1121 = vmul.u32 %v1116, %v1117
    %v1122 = vmul.u32 %v1116, %v1118
    %v1123 = vshll.u32 %v1120, 16
    %v1124 = vshrl.u32 %v1120, 16
    %v1125 = vshll.u32 %v1121, 16
    %v1126 = vshrl.u32 %v1121, 16
    %vm1127 = vc.u32 %v1119, %v1123
    %v1128 = vsel %vm1127, 1, 0
    %v1129 = vadd.s32 %v1119, %v1123
    %v1130 = vadd.s32 %v1122, %v1128
    %vm1131 = vc.u32 %v1129, %v1125
    %v1132 = vsel %vm1131, 1, 0
    %v1133 = vadd.s32 %v1129, %v1125
    %v1134 = vadd.s32 %v1130, %v1132
    %v1135 = vadd.s32 %v1134, %v1124
    %v1136 = vadd.s32 %v1135, %v1126
    %v1137 = vmul.u32 %v1092, %v1083
    %v1138 = vadd.s32 %v1114, %v1133
    %vm1139 = vc.u32 %v1114, %v1133
    %v1140 = vadd.s32 %v1136, 1
    %v1141 = vsel %vm1139, %v1140, %v1136
    %v1142 = vadd.s32 %v1137, %v1141
    %v1143 = vadd.s32 %v1142, 536870912
    %v1144 = vshrl.u32 %v1143, 30
    %v1145 = vshll.u32 %v1144, 30
    %v1146 = vsub.s32 %v1142, %v1145
    %vm1147 = vcmp.lt.s32.totalorder %v1146, 0
    %v1148 = vsub.s32 0, %v1146
    %v1149 = vsel %vm1147, %v1148, %v1146
    %v1150 = vclz %v1149
    %v1151 = vsub.s32 %v1150, 2
    %vm1152 = vcmp.gt.s32.totalorder 0, %v1151
    %v1153 = vsel %vm1152, 0, %v1151
    %v1154 = vsub.s32 32, %v1153
    %v1155 = vshll.u32 %v1146, %v1153
    %v1156 = vshrl.u32 %v1138, %v1154
    %v1157 = vor.u32 %v1155, %v1156
    %v1158 = vsub.s32 4294967266, %v1153
    %v1159 = vadd.s32 %v1158, 127
    %v1160 = vshll.u32 %v1159, 23
    %v1161 = vor.u32 4788187, %v1160
    %v1162 = vand.u32 2147483647, %v1161
    %v1164 = vcvt.s32.f32 %v1157
    %v1165 = vmul.f32 %v1164, %v1162
    %v1166 = vxor.u32 %v1165, 2147483648
    %v1167 = vsel %vm1046, %v1166, %v1165
    %v1168 = vsub.s32 4, %v1144
    %v1169 = vsel %vm1046, %v1168, %v1144
    %v1170 = vsel %vm1045, %v1043, %v1167
    %v1171 = vsel %vm1045, 0, %v1169
    %v1172 = vmul.f32 %v1170, %v1170
    %v1173 = vmul.f32 %v1172, -0.001358992
    %v1174 = vadd.f32 %v1173, 0.041655596
    %v1175 = vmul.f32 %v1172, %v1174
    %v1176 = vadd.f32 %v1175, -0.4999988
    %v1177 = vmul.f32 %v1172, %v1176
    %v1178 = vadd.f32 1.0, %v1177
    %v1179 = vmul.f32 %v1170, %v1170
    %v1180 = vmul.f32 %v1179, -0.00019511016
    %v1181 = vadd.f32 %v1180, 0.008332121
    %v1182 = vmul.f32 %v1179, %v1181
    %v1183 = vadd.f32 %v1182, -0.16666654
    %v1184 = vmul.f32 %v1179, %v1183
    %v1185 = vadd.f32 %v1184, 1.0
    %v1186 = vmul.f32 %v1185, %v1170
    %vm1187 = vweird.f32 %v1043
    %v1188 = vadd.s32 %v1171, 3
    %v1189 = vand.u32 %v1188, 3
    %vm1190 = vcmp.lt.s32.totalorder %v1189, 2
    %vm1191 = vcmp.eq.s32.totalorder %v1189, 0
    %v1192 = vxor.u32 %v1186, 2147483648
    %v1193 = vsel %vm1191, %v1178, %v1192
    %vm1194 = vcmp.eq.s32.totalorder %v1189, 2
    %v1195 = vxor.u32 %v1178, 2147483648
    %v1196 = vsel %vm1194, %v1195, %v1186
    %v1197 = vsel %vm1190, %v1193, %v1196
    %v1198 = vsel %vm1187, nan, %v1197
    %s1199 = sld [smem:[#allocation2 + $0x7]]
    %v1200 = vstv %s1199
    %v1201 = vmul.f32 %v1200, %v41
    %s1202 = sld [smem:[#allocation2 + $0xf]]
    %v1203 = vstv %s1202
    %v1204 = vmul.f32 %v1203, %v43
    %v1205 = vadd.f32 %v1201, %v1204
    %s1206 = sld [smem:[#allocation2 + $0x17]]
    %v1207 = vstv %s1206
    %v1208 = vadd.f32 %v1205, %v1207
    %v1209 = vand.u32 2147483647, %v1208
    %vm1210 = vcmp.le.f32.partialorder %v1209, 0.7853982
    %vm1211 = vcmp.lt.s32.totalorder %v1208, 0
    %v1212 = vand.u32 %v1208, 2139095040
    %v1213 = vshrl.u32 %v1212, 23
    %v1214 = vsub.s32 %v1213, 127
    %v1215 = vand.u32 2147483647, %v1208
    %v1216 = vand.u32 %v1215, 8388607
    %v1217 = vor.u32 %v1216, 8388608
    %v1218 = vsub.s32 0, %v1217
    %v1219 = vadd.s32 %v1214, 1
    %vm1220 = vcmp.gt.s32.totalorder %v1219, 0
    %v1221 = vsel %vm1220, %v1219, 0
    %v1222 = vshrl.u32 %v1221, 5
    %v1223 = vand.u32 %v1221, 31
    %v1224 = vsub.s32 32, %v1223
    %v1225 = vshrl.u32 683565275, %v1224
    %v1226 = vshll.u32 683565275, %v1223
    %v1227 = vshrl.u32 2475754826, %v1224
    %v1228 = vor.u32 %v1226, %v1227
    %v1229 = vshll.u32 2475754826, %v1223
    %v1230 = vshrl.u32 2131351028, %v1224
    %v1231 = vor.u32 %v1229, %v1230
    %v1232 = vshll.u32 2131351028, %v1223
    %v1233 = vshrl.u32 2102212464, %v1224
    %v1234 = vor.u32 %v1232, %v1233
    %v1235 = vshll.u32 2102212464, %v1223
    %v1236 = vshrl.u32 920167782, %v1224
    %v1237 = vor.u32 %v1235, %v1236
    %v1238 = vshll.u32 920167782, %v1223
    %v1239 = vshrl.u32 1326507024, %v1224
    %v1240 = vor.u32 %v1238, %v1239
    %vm1241 = vcmp.lt.s32.totalorder %v1222, 1
    %vm1242 = vcmp.lt.s32.totalorder %v1222, 2
    %vm1243 = vcmp.lt.s32.totalorder %v1222, 3
    %vm1244 = vcmp.lt.s32.totalorder %v1222, 4
    %v1245 = vsel %vm1241, %v1225, %v1228
    %v1246 = vsel %vm1244, %v1234, 2102212464
    %v1247 = vsel %vm1243, %v1231, %v1246
    %v1248 = vsel %vm1242, %v1245, %v1247
    %v1249 = vsel %vm1241, %v1228, %v1231
    %v1250 = vsel %vm1244, %v1237, 920167782
    %v1251 = vsel %vm1243, %v1234, %v1250
    %v1252 = vsel %vm1242, %v1249, %v1251
    %v1253 = vsel %vm1241, %v1231, %v1234
    %v1254 = vsel %vm1244, %v1240, 1326507024
    %v1255 = vsel %vm1243, %v1237, %v1254
    %v1256 = vsel %vm1242, %v1253, %v1255
    %v1257 = vshll.u32 %v1217, 8
    %v1258 = vand.u32 %v1257, 65535
    %v1259 = vshrl.u32 %v1257, 16
    %v1260 = vand.u32 %v1256, 65535
    %v1261 = vshrl.u32 %v1256, 16
    %v1262 = vmul.u32 %v1258, %v1260
    %v1263 = vmul.u32 %v1258, %v1261
    %v1264 = vmul.u32 %v1259, %v1260
    %v1265 = vmul.u32 %v1259, %v1261
    %v1266 = vshll.u32 %v1263, 16
    %v1267 = vshrl.u32 %v1263, 16
    %v1268 = vshll.u32 %v1264, 16
    %v1269 = vshrl.u32 %v1264, 16
    %vm1270 = vc.u32 %v1262, %v1266
    %v1271 = vsel %vm1270, 1, 0
    %v1272 = vadd.s32 %v1262, %v1266
    %v1273 = vadd.s32 %v1265, %v1271
    %vm1274 = vc.u32 %v1272, %v1268
    %v1275 = vsel %vm1274, 1, 0
    %v1276 = vadd.s32 %v1272, %v1268
    %v1277 = vadd.s32 %v1273, %v1275
    %v1278 = vadd.s32 %v1277, %v1267
    %v1279 = vadd.s32 %v1278, %v1269
    %v1280 = vand.u32 %v1257, 65535
    %v1281 = vshrl.u32 %v1257, 16
    %v1282 = vand.u32 %v1252, 65535
    %v1283 = vshrl.u32 %v1252, 16
    %v1284 = vmul.u32 %v1280, %v1282
    %v1285 = vmul.u32 %v1280, %v1283
    %v1286 = vmul.u32 %v1281, %v1282
    %v1287 = vmul.u32 %v1281, %v1283
    %v1288 = vshll.u32 %v1285, 16
    %v1289 = vshrl.u32 %v1285, 16
    %v1290 = vshll.u32 %v1286, 16
    %v1291 = vshrl.u32 %v1286, 16
    %vm1292 = vc.u32 %v1284, %v1288
    %v1293 = vsel %vm1292, 1, 0
    %v1294 = vadd.s32 %v1284, %v1288
    %v1295 = vadd.s32 %v1287, %v1293
    %vm1296 = vc.u32 %v1294, %v1290
    %v1297 = vsel %vm1296, 1, 0
    %v1298 = vadd.s32 %v1294, %v1290
    %v1299 = vadd.s32 %v1295, %v1297
    %v1300 = vadd.s32 %v1299, %v1289
    %v1301 = vadd.s32 %v1300, %v1291
    %v1302 = vmul.u32 %v1257, %v1248
    %v1303 = vadd.s32 %v1279, %v1298
    %vm1304 = vc.u32 %v1279, %v1298
    %v1305 = vadd.s32 %v1301, 1
    %v1306 = vsel %vm1304, %v1305, %v1301
    %v1307 = vadd.s32 %v1302, %v1306
    %v1308 = vadd.s32 %v1307, 536870912
    %v1309 = vshrl.u32 %v1308, 30
    %v1310 = vshll.u32 %v1309, 30
    %v1311 = vsub.s32 %v1307, %v1310
    %vm1312 = vcmp.lt.s32.totalorder %v1311, 0
    %v1313 = vsub.s32 0, %v1311
    %v1314 = vsel %vm1312, %v1313, %v1311
    %v1315 = vclz %v1314
    %v1316 = vsub.s32 %v1315, 2
    %vm1317 = vcmp.gt.s32.totalorder 0, %v1316
    %v1318 = vsel %vm1317, 0, %v1316
    %v1319 = vsub.s32 32, %v1318
    %v1320 = vshll.u32 %v1311, %v1318
    %v1321 = vshrl.u32 %v1303, %v1319
    %v1322 = vor.u32 %v1320, %v1321
    %v1323 = vsub.s32 4294967266, %v1318
    %v1324 = vadd.s32 %v1323, 127
    %v1325 = vshll.u32 %v1324, 23
    %v1326 = vor.u32 4788187, %v1325
    %v1327 = vand.u32 2147483647, %v1326
    %v1329 = vcvt.s32.f32 %v1322
    %v1330 = vmul.f32 %v1329, %v1327
    %v1331 = vxor.u32 %v1330, 2147483648
    %v1332 = vsel %vm1211, %v1331, %v1330
    %v1333 = vsub.s32 4, %v1309
    %v1334 = vsel %vm1211, %v1333, %v1309
    %v1335 = vsel %vm1210, %v1208, %v1332
    %v1336 = vsel %vm1210, 0, %v1334
    %v1337 = vmul.f32 %v1335, %v1335
    %v1338 = vmul.f32 %v1337, -0.001358992
    %v1339 = vadd.f32 %v1338, 0.041655596
    %v1340 = vmul.f32 %v1337, %v1339
    %v1341 = vadd.f32 %v1340, -0.4999988
    %v1342 = vmul.f32 %v1337, %v1341
    %v1343 = vadd.f32 1.0, %v1342
    %v1344 = vmul.f32 %v1335, %v1335
    %v1345 = vmul.f32 %v1344, -0.00019511016
    %v1346 = vadd.f32 %v1345, 0.008332121
    %v1347 = vmul.f32 %v1344, %v1346
    %v1348 = vadd.f32 %v1347, -0.16666654
    %v1349 = vmul.f32 %v1344, %v1348
    %v1350 = vadd.f32 %v1349, 1.0
    %v1351 = vmul.f32 %v1350, %v1335
    %vm1352 = vweird.f32 %v1208
    %v1353 = vadd.s32 %v1336, 3
    %v1354 = vand.u32 %v1353, 3
    %vm1355 = vcmp.lt.s32.totalorder %v1354, 2
    %vm1356 = vcmp.eq.s32.totalorder %v1354, 0
    %v1357 = vxor.u32 %v1351, 2147483648
    %v1358 = vsel %vm1356, %v1343, %v1357
    %vm1359 = vcmp.eq.s32.totalorder %v1354, 2
    %v1360 = vxor.u32 %v1343, 2147483648
    %v1361 = vsel %vm1359, %v1360, %v1351
    %v1362 = vsel %vm1355, %v1358, %v1361
    %v1363 = vsel %vm1352, nan, %v1362
    %s1364 = sld [smem:[#allocation2 + $0x18]]
    %v1365 = vstv %s1364
    %v1366 = vmul.f32 %v1365, %v208
    %s1367 = sld [smem:[#allocation2 + $0x20]]
    %v1368 = vstv %s1367
    %v1369 = vmul.f32 %v1368, %v373
    %v1370 = vadd.f32 %v1366, %v1369
    %s1371 = sld [smem:[#allocation2 + $0x28]]
    %v1372 = vstv %s1371
    %v1373 = vmul.f32 %v1372, %v538
    %v1374 = vadd.f32 %v1370, %v1373
    %s1375 = sld [smem:[#allocation2 + $0x30]]
    %v1376 = vstv %s1375
    %v1377 = vmul.f32 %v1376, %v703
    %v1378 = vadd.f32 %v1374, %v1377
    %s1379 = sld [smem:[#allocation2 + $0x38]]
    %v1380 = vstv %s1379
    %v1381 = vmul.f32 %v1380, %v868
    %v1382 = vadd.f32 %v1378, %v1381
    %s1383 = sld [smem:[#allocation2 + $0x40]]
    %v1384 = vstv %s1383
    %v1385 = vmul.f32 %v1384, %v1033
    %v1386 = vadd.f32 %v1382, %v1385
    %s1387 = sld [smem:[#allocation2 + $0x48]]
    %v1388 = vstv %s1387
    %v1389 = vmul.f32 %v1388, %v1198
    %v1390 = vadd.f32 %v1386, %v1389
    %s1391 = sld [smem:[#allocation2 + $0x50]]
    %v1392 = vstv %s1391
    %v1393 = vmul.f32 %v1392, %v1363
    %v1394 = vadd.f32 %v1390, %v1393
    %s1395 = sld [smem:[#allocation2 + $0x58]]
    %v1396 = vstv %s1395
    %v1397 = vadd.f32 %v1394, %v1396
    %v1398 = vand.u32 2147483647, %v1397
    %vm1399 = vcmp.le.f32.partialorder %v1398, 0.7853982
    %vm1400 = vcmp.lt.s32.totalorder %v1397, 0
    %v1401 = vand.u32 %v1397, 2139095040
    %v1402 = vshrl.u32 %v1401, 23
    %v1403 = vsub.s32 %v1402, 127
    %v1404 = vand.u32 2147483647, %v1397
    %v1405 = vand.u32 %v1404, 8388607
    %v1406 = vor.u32 %v1405, 8388608
    %v1407 = vsub.s32 0, %v1406
    %v1408 = vadd.s32 %v1403, 1
    %vm1409 = vcmp.gt.s32.totalorder %v1408, 0
    %v1410 = vsel %vm1409, %v1408, 0
    %v1411 = vshrl.u32 %v1410, 5
    %v1412 = vand.u32 %v1410, 31
    %v1413 = vsub.s32 32, %v1412
    %v1414 = vshrl.u32 683565275, %v1413
    %v1415 = vshll.u32 683565275, %v1412
    %v1416 = vshrl.u32 2475754826, %v1413
    %v1417 = vor.u32 %v1415, %v1416
    %v1418 = vshll.u32 2475754826, %v1412
    %v1419 = vshrl.u32 2131351028, %v1413
    %v1420 = vor.u32 %v1418, %v1419
    %v1421 = vshll.u32 2131351028, %v1412
    %v1422 = vshrl.u32 2102212464, %v1413
    %v1423 = vor.u32 %v1421, %v1422
    %v1424 = vshll.u32 2102212464, %v1412
    %v1425 = vshrl.u32 920167782, %v1413
    %v1426 = vor.u32 %v1424, %v1425
    %v1427 = vshll.u32 920167782, %v1412
    %v1428 = vshrl.u32 1326507024, %v1413
    %v1429 = vor.u32 %v1427, %v1428
    %vm1430 = vcmp.lt.s32.totalorder %v1411, 1
    %vm1431 = vcmp.lt.s32.totalorder %v1411, 2
    %vm1432 = vcmp.lt.s32.totalorder %v1411, 3
    %vm1433 = vcmp.lt.s32.totalorder %v1411, 4
    %v1434 = vsel %vm1430, %v1414, %v1417
    %v1435 = vsel %vm1433, %v1423, 2102212464
    %v1436 = vsel %vm1432, %v1420, %v1435
    %v1437 = vsel %vm1431, %v1434, %v1436
    %v1438 = vsel %vm1430, %v1417, %v1420
    %v1439 = vsel %vm1433, %v1426, 920167782
    %v1440 = vsel %vm1432, %v1423, %v1439
    %v1441 = vsel %vm1431, %v1438, %v1440
    %v1442 = vsel %vm1430, %v1420, %v1423
    %v1443 = vsel %vm1433, %v1429, 1326507024
    %v1444 = vsel %vm1432, %v1426, %v1443
    %v1445 = vsel %vm1431, %v1442, %v1444
    %v1446 = vshll.u32 %v1406, 8
    %v1447 = vand.u32 %v1446, 65535
    %v1448 = vshrl.u32 %v1446, 16
    %v1449 = vand.u32 %v1445, 65535
    %v1450 = vshrl.u32 %v1445, 16
    %v1451 = vmul.u32 %v1447, %v1449
    %v1452 = vmul.u32 %v1447, %v1450
    %v1453 = vmul.u32 %v1448, %v1449
    %v1454 = vmul.u32 %v1448, %v1450
    %v1455 = vshll.u32 %v1452, 16
    %v1456 = vshrl.u32 %v1452, 16
    %v1457 = vshll.u32 %v1453, 16
    %v1458 = vshrl.u32 %v1453, 16
    %vm1459 = vc.u32 %v1451, %v1455
    %v1460 = vsel %vm1459, 1, 0
    %v1461 = vadd.s32 %v1451, %v1455
    %v1462 = vadd.s32 %v1454, %v1460
    %vm1463 = vc.u32 %v1461, %v1457
    %v1464 = vsel %vm1463, 1, 0
    %v1465 = vadd.s32 %v1461, %v1457
    %v1466 = vadd.s32 %v1462, %v1464
    %v1467 = vadd.s32 %v1466, %v1456
    %v1468 = vadd.s32 %v1467, %v1458
    %v1469 = vand.u32 %v1446, 65535
    %v1470 = vshrl.u32 %v1446, 16
    %v1471 = vand.u32 %v1441, 65535
    %v1472 = vshrl.u32 %v1441, 16
    %v1473 = vmul.u32 %v1469, %v1471
    %v1474 = vmul.u32 %v1469, %v1472
    %v1475 = vmul.u32 %v1470, %v1471
    %v1476 = vmul.u32 %v1470, %v1472
    %v1477 = vshll.u32 %v1474, 16
    %v1478 = vshrl.u32 %v1474, 16
    %v1479 = vshll.u32 %v1475, 16
    %v1480 = vshrl.u32 %v1475, 16
    %vm1481 = vc.u32 %v1473, %v1477
    %v1482 = vsel %vm1481, 1, 0
    %v1483 = vadd.s32 %v1473, %v1477
    %v1484 = vadd.s32 %v1476, %v1482
    %vm1485 = vc.u32 %v1483, %v1479
    %v1486 = vsel %vm1485, 1, 0
    %v1487 = vadd.s32 %v1483, %v1479
    %v1488 = vadd.s32 %v1484, %v1486
    %v1489 = vadd.s32 %v1488, %v1478
    %v1490 = vadd.s32 %v1489, %v1480
    %v1491 = vmul.u32 %v1446, %v1437
    %v1492 = vadd.s32 %v1468, %v1487
    %vm1493 = vc.u32 %v1468, %v1487
    %v1494 = vadd.s32 %v1490, 1
    %v1495 = vsel %vm1493, %v1494, %v1490
    %v1496 = vadd.s32 %v1491, %v1495
    %v1497 = vadd.s32 %v1496, 536870912
    %v1498 = vshrl.u32 %v1497, 30
    %v1499 = vshll.u32 %v1498, 30
    %v1500 = vsub.s32 %v1496, %v1499
    %vm1501 = vcmp.lt.s32.totalorder %v1500, 0
    %v1502 = vsub.s32 0, %v1500
    %v1503 = vsel %vm1501, %v1502, %v1500
    %v1504 = vclz %v1503
    %v1505 = vsub.s32 %v1504, 2
    %vm1506 = vcmp.gt.s32.totalorder 0, %v1505
    %v1507 = vsel %vm1506, 0, %v1505
    %v1508 = vsub.s32 32, %v1507
    %v1509 = vshll.u32 %v1500, %v1507
    %v1510 = vshrl.u32 %v1492, %v1508
    %v1511 = vor.u32 %v1509, %v1510
    %v1512 = vsub.s32 4294967266, %v1507
    %v1513 = vadd.s32 %v1512, 127
    %v1514 = vshll.u32 %v1513, 23
    %v1515 = vor.u32 4788187, %v1514
    %v1516 = vand.u32 2147483647, %v1515
    %v1518 = vcvt.s32.f32 %v1511
    %v1519 = vmul.f32 %v1518, %v1516
    %v1520 = vxor.u32 %v1519, 2147483648
    %v1521 = vsel %vm1400, %v1520, %v1519
    %v1522 = vsub.s32 4, %v1498
    %v1523 = vsel %vm1400, %v1522, %v1498
    %v1524 = vsel %vm1399, %v1397, %v1521
    %v1525 = vsel %vm1399, 0, %v1523
    %v1526 = vmul.f32 %v1524, %v1524
    %v1527 = vmul.f32 %v1526, -0.001358992
    %v1528 = vadd.f32 %v1527, 0.041655596
    %v1529 = vmul.f32 %v1526, %v1528
    %v1530 = vadd.f32 %v1529, -0.4999988
    %v1531 = vmul.f32 %v1526, %v1530
    %v1532 = vadd.f32 1.0, %v1531
    %v1533 = vmul.f32 %v1524, %v1524
    %v1534 = vmul.f32 %v1533, -0.00019511016
    %v1535 = vadd.f32 %v1534, 0.008332121
    %v1536 = vmul.f32 %v1533, %v1535
    %v1537 = vadd.f32 %v1536, -0.16666654
    %v1538 = vmul.f32 %v1533, %v1537
    %v1539 = vadd.f32 %v1538, 1.0
    %v1540 = vmul.f32 %v1539, %v1524
    %vm1541 = vweird.f32 %v1397
    %v1542 = vadd.s32 %v1525, 3
    %v1543 = vand.u32 %v1542, 3
    %vm1544 = vcmp.lt.s32.totalorder %v1543, 2
    %vm1545 = vcmp.eq.s32.totalorder %v1543, 0
    %v1546 = vxor.u32 %v1540, 2147483648
    %v1547 = vsel %vm1545, %v1532, %v1546
    %vm1548 = vcmp.eq.s32.totalorder %v1543, 2
    %v1549 = vxor.u32 %v1532, 2147483648
    %v1550 = vsel %vm1548, %v1549, %v1540
    %v1551 = vsel %vm1544, %v1547, %v1550
    %v1552 = vsel %vm1541, nan, %v1551
    %s1553 = sld [smem:[#allocation2 + $0x19]]
    %v1554 = vstv %s1553
    %v1555 = vmul.f32 %v1554, %v208
    %s1556 = sld [smem:[#allocation2 + $0x21]]
    %v1557 = vstv %s1556
    %v1558 = vmul.f32 %v1557, %v373
    %v1559 = vadd.f32 %v1555, %v1558
    %s1560 = sld [smem:[#allocation2 + $0x29]]
    %v1561 = vstv %s1560
    %v1562 = vmul.f32 %v1561, %v538
    %v1563 = vadd.f32 %v1559, %v1562
    %s1564 = sld [smem:[#allocation2 + $0x31]]
    %v1565 = vstv %s1564
    %v1566 = vmul.f32 %v1565, %v703
    %v1567 = vadd.f32 %v1563, %v1566
    %s1568 = sld [smem:[#allocation2 + $0x39]]
    %v1569 = vstv %s1568
    %v1570 = vmul.f32 %v1569, %v868
    %v1571 = vadd.f32 %v1567, %v1570
    %s1572 = sld [smem:[#allocation2 + $0x41]]
    %v1573 = vstv %s1572
    %v1574 = vmul.f32 %v1573, %v1033
    %v1575 = vadd.f32 %v1571, %v1574
    %s1576 = sld [smem:[#allocation2 + $0x49]]
    %v1577 = vstv %s1576
    %v1578 = vmul.f32 %v1577, %v1198
    %v1579 = vadd.f32 %v1575, %v1578
    %s1580 = sld [smem:[#allocation2 + $0x51]]
    %v1581 = vstv %s1580
    %v1582 = vmul.f32 %v1581, %v1363
    %v1583 = vadd.f32 %v1579, %v1582
    %s1584 = sld [smem:[#allocation2 + $0x59]]
    %v1585 = vstv %s1584
    %v1586 = vadd.f32 %v1583, %v1585
    %v1587 = vand.u32 2147483647, %v1586
    %vm1588 = vcmp.le.f32.partialorder %v1587, 0.7853982
    %vm1589 = vcmp.lt.s32.totalorder %v1586, 0
    %v1590 = vand.u32 %v1586, 2139095040
    %v1591 = vshrl.u32 %v1590, 23
    %v1592 = vsub.s32 %v1591, 127
    %v1593 = vand.u32 2147483647, %v1586
    %v1594 = vand.u32 %v1593, 8388607
    %v1595 = vor.u32 %v1594, 8388608
    %v1596 = vsub.s32 0, %v1595
    %v1597 = vadd.s32 %v1592, 1
    %vm1598 = vcmp.gt.s32.totalorder %v1597, 0
    %v1599 = vsel %vm1598, %v1597, 0
    %v1600 = vshrl.u32 %v1599, 5
    %v1601 = vand.u32 %v1599, 31
    %v1602 = vsub.s32 32, %v1601
    %v1603 = vshrl.u32 683565275, %v1602
    %v1604 = vshll.u32 683565275, %v1601
    %v1605 = vshrl.u32 2475754826, %v1602
    %v1606 = vor.u32 %v1604, %v1605
    %v1607 = vshll.u32 2475754826, %v1601
    %v1608 = vshrl.u32 2131351028, %v1602
    %v1609 = vor.u32 %v1607, %v1608
    %v1610 = vshll.u32 2131351028, %v1601
    %v1611 = vshrl.u32 2102212464, %v1602
    %v1612 = vor.u32 %v1610, %v1611
    %v1613 = vshll.u32 2102212464, %v1601
    %v1614 = vshrl.u32 920167782, %v1602
    %v1615 = vor.u32 %v1613, %v1614
    %v1616 = vshll.u32 920167782, %v1601
    %v1617 = vshrl.u32 1326507024, %v1602
    %v1618 = vor.u32 %v1616, %v1617
    %vm1619 = vcmp.lt.s32.totalorder %v1600, 1
    %vm1620 = vcmp.lt.s32.totalorder %v1600, 2
    %vm1621 = vcmp.lt.s32.totalorder %v1600, 3
    %vm1622 = vcmp.lt.s32.totalorder %v1600, 4
    %v1623 = vsel %vm1619, %v1603, %v1606
    %v1624 = vsel %vm1622, %v1612, 2102212464
    %v1625 = vsel %vm1621, %v1609, %v1624
    %v1626 = vsel %vm1620, %v1623, %v1625
    %v1627 = vsel %vm1619, %v1606, %v1609
    %v1628 = vsel %vm1622, %v1615, 920167782
    %v1629 = vsel %vm1621, %v1612, %v1628
    %v1630 = vsel %vm1620, %v1627, %v1629
    %v1631 = vsel %vm1619, %v1609, %v1612
    %v1632 = vsel %vm1622, %v1618, 1326507024
    %v1633 = vsel %vm1621, %v1615, %v1632
    %v1634 = vsel %vm1620, %v1631, %v1633
    %v1635 = vshll.u32 %v1595, 8
    %v1636 = vand.u32 %v1635, 65535
    %v1637 = vshrl.u32 %v1635, 16
    %v1638 = vand.u32 %v1634, 65535
    %v1639 = vshrl.u32 %v1634, 16
    %v1640 = vmul.u32 %v1636, %v1638
    %v1641 = vmul.u32 %v1636, %v1639
    %v1642 = vmul.u32 %v1637, %v1638
    %v1643 = vmul.u32 %v1637, %v1639
    %v1644 = vshll.u32 %v1641, 16
    %v1645 = vshrl.u32 %v1641, 16
    %v1646 = vshll.u32 %v1642, 16
    %v1647 = vshrl.u32 %v1642, 16
    %vm1648 = vc.u32 %v1640, %v1644
    %v1649 = vsel %vm1648, 1, 0
    %v1650 = vadd.s32 %v1640, %v1644
    %v1651 = vadd.s32 %v1643, %v1649
    %vm1652 = vc.u32 %v1650, %v1646
    %v1653 = vsel %vm1652, 1, 0
    %v1654 = vadd.s32 %v1650, %v1646
    %v1655 = vadd.s32 %v1651, %v1653
    %v1656 = vadd.s32 %v1655, %v1645
    %v1657 = vadd.s32 %v1656, %v1647
    %v1658 = vand.u32 %v1635, 65535
    %v1659 = vshrl.u32 %v1635, 16
    %v1660 = vand.u32 %v1630, 65535
    %v1661 = vshrl.u32 %v1630, 16
    %v1662 = vmul.u32 %v1658, %v1660
    %v1663 = vmul.u32 %v1658, %v1661
    %v1664 = vmul.u32 %v1659, %v1660
    %v1665 = vmul.u32 %v1659, %v1661
    %v1666 = vshll.u32 %v1663, 16
    %v1667 = vshrl.u32 %v1663, 16
    %v1668 = vshll.u32 %v1664, 16
    %v1669 = vshrl.u32 %v1664, 16
    %vm1670 = vc.u32 %v1662, %v1666
    %v1671 = vsel %vm1670, 1, 0
    %v1672 = vadd.s32 %v1662, %v1666
    %v1673 = vadd.s32 %v1665, %v1671
    %vm1674 = vc.u32 %v1672, %v1668
    %v1675 = vsel %vm1674, 1, 0
    %v1676 = vadd.s32 %v1672, %v1668
    %v1677 = vadd.s32 %v1673, %v1675
    %v1678 = vadd.s32 %v1677, %v1667
    %v1679 = vadd.s32 %v1678, %v1669
    %v1680 = vmul.u32 %v1635, %v1626
    %v1681 = vadd.s32 %v1657, %v1676
    %vm1682 = vc.u32 %v1657, %v1676
    %v1683 = vadd.s32 %v1679, 1
    %v1684 = vsel %vm1682, %v1683, %v1679
    %v1685 = vadd.s32 %v1680, %v1684
    %v1686 = vadd.s32 %v1685, 536870912
    %v1687 = vshrl.u32 %v1686, 30
    %v1688 = vshll.u32 %v1687, 30
    %v1689 = vsub.s32 %v1685, %v1688
    %vm1690 = vcmp.lt.s32.totalorder %v1689, 0
    %v1691 = vsub.s32 0, %v1689
    %v1692 = vsel %vm1690, %v1691, %v1689
    %v1693 = vclz %v1692
    %v1694 = vsub.s32 %v1693, 2
    %vm1695 = vcmp.gt.s32.totalorder 0, %v1694
    %v1696 = vsel %vm1695, 0, %v1694
    %v1697 = vsub.s32 32, %v1696
    %v1698 = vshll.u32 %v1689, %v1696
    %v1699 = vshrl.u32 %v1681, %v1697
    %v1700 = vor.u32 %v1698, %v1699
    %v1701 = vsub.s32 4294967266, %v1696
    %v1702 = vadd.s32 %v1701, 127
    %v1703 = vshll.u32 %v1702, 23
    %v1704 = vor.u32 4788187, %v1703
    %v1705 = vand.u32 2147483647, %v1704
    %v1707 = vcvt.s32.f32 %v1700
    %v1708 = vmul.f32 %v1707, %v1705
    %v1709 = vxor.u32 %v1708, 2147483648
    %v1710 = vsel %vm1589, %v1709, %v1708
    %v1711 = vsub.s32 4, %v1687
    %v1712 = vsel %vm1589, %v1711, %v1687
    %v1713 = vsel %vm1588, %v1586, %v1710
    %v1714 = vsel %vm1588, 0, %v1712
    %v1715 = vmul.f32 %v1713, %v1713
    %v1716 = vmul.f32 %v1715, -0.001358992
    %v1717 = vadd.f32 %v1716, 0.041655596
    %v1718 = vmul.f32 %v1715, %v1717
    %v1719 = vadd.f32 %v1718, -0.4999988
    %v1720 = vmul.f32 %v1715, %v1719
    %v1721 = vadd.f32 1.0, %v1720
    %v1722 = vmul.f32 %v1713, %v1713
    %v1723 = vmul.f32 %v1722, -0.00019511016
    %v1724 = vadd.f32 %v1723, 0.008332121
    %v1725 = vmul.f32 %v1722, %v1724
    %v1726 = vadd.f32 %v1725, -0.16666654
    %v1727 = vmul.f32 %v1722, %v1726
    %v1728 = vadd.f32 %v1727, 1.0
    %v1729 = vmul.f32 %v1728, %v1713
    %vm1730 = vweird.f32 %v1586
    %v1731 = vadd.s32 %v1714, 3
    %v1732 = vand.u32 %v1731, 3
    %vm1733 = vcmp.lt.s32.totalorder %v1732, 2
    %vm1734 = vcmp.eq.s32.totalorder %v1732, 0
    %v1735 = vxor.u32 %v1729, 2147483648
    %v1736 = vsel %vm1734, %v1721, %v1735
    %vm1737 = vcmp.eq.s32.totalorder %v1732, 2
    %v1738 = vxor.u32 %v1721, 2147483648
    %v1739 = vsel %vm1737, %v1738, %v1729
    %v1740 = vsel %vm1733, %v1736, %v1739
    %v1741 = vsel %vm1730, nan, %v1740
    %s1742 = sld [smem:[#allocation2 + $0x1a]]
    %v1743 = vstv %s1742
    %v1744 = vmul.f32 %v1743, %v208
    %s1745 = sld [smem:[#allocation2 + $0x22]]
    %v1746 = vstv %s1745
    %v1747 = vmul.f32 %v1746, %v373
    %v1748 = vadd.f32 %v1744, %v1747
    %s1749 = sld [smem:[#allocation2 + $0x2a]]
    %v1750 = vstv %s1749
    %v1751 = vmul.f32 %v1750, %v538
    %v1752 = vadd.f32 %v1748, %v1751
    %s1753 = sld [smem:[#allocation2 + $0x32]]
    %v1754 = vstv %s1753
    %v1755 = vmul.f32 %v1754, %v703
    %v1756 = vadd.f32 %v1752, %v1755
    %s1757 = sld [smem:[#allocation2 + $0x3a]]
    %v1758 = vstv %s1757
    %v1759 = vmul.f32 %v1758, %v868
    %v1760 = vadd.f32 %v1756, %v1759
    %s1761 = sld [smem:[#allocation2 + $0x42]]
    %v1762 = vstv %s1761
    %v1763 = vmul.f32 %v1762, %v1033
    %v1764 = vadd.f32 %v1760, %v1763
    %s1765 = sld [smem:[#allocation2 + $0x4a]]
    %v1766 = vstv %s1765
    %v1767 = vmul.f32 %v1766, %v1198
    %v1768 = vadd.f32 %v1764, %v1767
    %s1769 = sld [smem:[#allocation2 + $0x52]]
    %v1770 = vstv %s1769
    %v1771 = vmul.f32 %v1770, %v1363
    %v1772 = vadd.f32 %v1768, %v1771
    %s1773 = sld [smem:[#allocation2 + $0x5a]]
    %v1774 = vstv %s1773
    %v1775 = vadd.f32 %v1772, %v1774
    %v1776 = vand.u32 2147483647, %v1775
    %vm1777 = vcmp.le.f32.partialorder %v1776, 0.7853982
    %vm1778 = vcmp.lt.s32.totalorder %v1775, 0
    %v1779 = vand.u32 %v1775, 2139095040
    %v1780 = vshrl.u32 %v1779, 23
    %v1781 = vsub.s32 %v1780, 127
    %v1782 = vand.u32 2147483647, %v1775
    %v1783 = vand.u32 %v1782, 8388607
    %v1784 = vor.u32 %v1783, 8388608
    %v1785 = vsub.s32 0, %v1784
    %v1786 = vadd.s32 %v1781, 1
    %vm1787 = vcmp.gt.s32.totalorder %v1786, 0
    %v1788 = vsel %vm1787, %v1786, 0
    %v1789 = vshrl.u32 %v1788, 5
    %v1790 = vand.u32 %v1788, 31
    %v1791 = vsub.s32 32, %v1790
    %v1792 = vshrl.u32 683565275, %v1791
    %v1793 = vshll.u32 683565275, %v1790
    %v1794 = vshrl.u32 2475754826, %v1791
    %v1795 = vor.u32 %v1793, %v1794
    %v1796 = vshll.u32 2475754826, %v1790
    %v1797 = vshrl.u32 2131351028, %v1791
    %v1798 = vor.u32 %v1796, %v1797
    %v1799 = vshll.u32 2131351028, %v1790
    %v1800 = vshrl.u32 2102212464, %v1791
    %v1801 = vor.u32 %v1799, %v1800
    %v1802 = vshll.u32 2102212464, %v1790
    %v1803 = vshrl.u32 920167782, %v1791
    %v1804 = vor.u32 %v1802, %v1803
    %v1805 = vshll.u32 920167782, %v1790
    %v1806 = vshrl.u32 1326507024, %v1791
    %v1807 = vor.u32 %v1805, %v1806
    %vm1808 = vcmp.lt.s32.totalorder %v1789, 1
    %vm1809 = vcmp.lt.s32.totalorder %v1789, 2
    %vm1810 = vcmp.lt.s32.totalorder %v1789, 3
    %vm1811 = vcmp.lt.s32.totalorder %v1789, 4
    %v1812 = vsel %vm1808, %v1792, %v1795
    %v1813 = vsel %vm1811, %v1801, 2102212464
    %v1814 = vsel %vm1810, %v1798, %v1813
    %v1815 = vsel %vm1809, %v1812, %v1814
    %v1816 = vsel %vm1808, %v1795, %v1798
    %v1817 = vsel %vm1811, %v1804, 920167782
    %v1818 = vsel %vm1810, %v1801, %v1817
    %v1819 = vsel %vm1809, %v1816, %v1818
    %v1820 = vsel %vm1808, %v1798, %v1801
    %v1821 = vsel %vm1811, %v1807, 1326507024
    %v1822 = vsel %vm1810, %v1804, %v1821
    %v1823 = vsel %vm1809, %v1820, %v1822
    %v1824 = vshll.u32 %v1784, 8
    %v1825 = vand.u32 %v1824, 65535
    %v1826 = vshrl.u32 %v1824, 16
    %v1827 = vand.u32 %v1823, 65535
    %v1828 = vshrl.u32 %v1823, 16
    %v1829 = vmul.u32 %v1825, %v1827
    %v1830 = vmul.u32 %v1825, %v1828
    %v1831 = vmul.u32 %v1826, %v1827
    %v1832 = vmul.u32 %v1826, %v1828
    %v1833 = vshll.u32 %v1830, 16
    %v1834 = vshrl.u32 %v1830, 16
    %v1835 = vshll.u32 %v1831, 16
    %v1836 = vshrl.u32 %v1831, 16
    %vm1837 = vc.u32 %v1829, %v1833
    %v1838 = vsel %vm1837, 1, 0
    %v1839 = vadd.s32 %v1829, %v1833
    %v1840 = vadd.s32 %v1832, %v1838
    %vm1841 = vc.u32 %v1839, %v1835
    %v1842 = vsel %vm1841, 1, 0
    %v1843 = vadd.s32 %v1839, %v1835
    %v1844 = vadd.s32 %v1840, %v1842
    %v1845 = vadd.s32 %v1844, %v1834
    %v1846 = vadd.s32 %v1845, %v1836
    %v1847 = vand.u32 %v1824, 65535
    %v1848 = vshrl.u32 %v1824, 16
    %v1849 = vand.u32 %v1819, 65535
    %v1850 = vshrl.u32 %v1819, 16
    %v1851 = vmul.u32 %v1847, %v1849
    %v1852 = vmul.u32 %v1847, %v1850
    %v1853 = vmul.u32 %v1848, %v1849
    %v1854 = vmul.u32 %v1848, %v1850
    %v1855 = vshll.u32 %v1852, 16
    %v1856 = vshrl.u32 %v1852, 16
    %v1857 = vshll.u32 %v1853, 16
    %v1858 = vshrl.u32 %v1853, 16
    %vm1859 = vc.u32 %v1851, %v1855
    %v1860 = vsel %vm1859, 1, 0
    %v1861 = vadd.s32 %v1851, %v1855
    %v1862 = vadd.s32 %v1854, %v1860
    %vm1863 = vc.u32 %v1861, %v1857
    %v1864 = vsel %vm1863, 1, 0
    %v1865 = vadd.s32 %v1861, %v1857
    %v1866 = vadd.s32 %v1862, %v1864
    %v1867 = vadd.s32 %v1866, %v1856
    %v1868 = vadd.s32 %v1867, %v1858
    %v1869 = vmul.u32 %v1824, %v1815
    %v1870 = vadd.s32 %v1846, %v1865
    %vm1871 = vc.u32 %v1846, %v1865
    %v1872 = vadd.s32 %v1868, 1
    %v1873 = vsel %vm1871, %v1872, %v1868
    %v1874 = vadd.s32 %v1869, %v1873
    %v1875 = vadd.s32 %v1874, 536870912
    %v1876 = vshrl.u32 %v1875, 30
    %v1877 = vshll.u32 %v1876, 30
    %v1878 = vsub.s32 %v1874, %v1877
    %vm1879 = vcmp.lt.s32.totalorder %v1878, 0
    %v1880 = vsub.s32 0, %v1878
    %v1881 = vsel %vm1879, %v1880, %v1878
    %v1882 = vclz %v1881
    %v1883 = vsub.s32 %v1882, 2
    %vm1884 = vcmp.gt.s32.totalorder 0, %v1883
    %v1885 = vsel %vm1884, 0, %v1883
    %v1886 = vsub.s32 32, %v1885
    %v1887 = vshll.u32 %v1878, %v1885
    %v1888 = vshrl.u32 %v1870, %v1886
    %v1889 = vor.u32 %v1887, %v1888
    %v1890 = vsub.s32 4294967266, %v1885
    %v1891 = vadd.s32 %v1890, 127
    %v1892 = vshll.u32 %v1891, 23
    %v1893 = vor.u32 4788187, %v1892
    %v1894 = vand.u32 2147483647, %v1893
    %v1896 = vcvt.s32.f32 %v1889
    %v1897 = vmul.f32 %v1896, %v1894
    %v1898 = vxor.u32 %v1897, 2147483648
    %v1899 = vsel %vm1778, %v1898, %v1897
    %v1900 = vsub.s32 4, %v1876
    %v1901 = vsel %vm1778, %v1900, %v1876
    %v1902 = vsel %vm1777, %v1775, %v1899
    %v1903 = vsel %vm1777, 0, %v1901
    %v1904 = vmul.f32 %v1902, %v1902
    %v1905 = vmul.f32 %v1904, -0.001358992
    %v1906 = vadd.f32 %v1905, 0.041655596
    %v1907 = vmul.f32 %v1904, %v1906
    %v1908 = vadd.f32 %v1907, -0.4999988
    %v1909 = vmul.f32 %v1904, %v1908
    %v1910 = vadd.f32 1.0, %v1909
    %v1911 = vmul.f32 %v1902, %v1902
    %v1912 = vmul.f32 %v1911, -0.00019511016
    %v1913 = vadd.f32 %v1912, 0.008332121
    %v1914 = vmul.f32 %v1911, %v1913
    %v1915 = vadd.f32 %v1914, -0.16666654
    %v1916 = vmul.f32 %v1911, %v1915
    %v1917 = vadd.f32 %v1916, 1.0
    %v1918 = vmul.f32 %v1917, %v1902
    %vm1919 = vweird.f32 %v1775
    %v1920 = vadd.s32 %v1903, 3
    %v1921 = vand.u32 %v1920, 3
    %vm1922 = vcmp.lt.s32.totalorder %v1921, 2
    %vm1923 = vcmp.eq.s32.totalorder %v1921, 0
    %v1924 = vxor.u32 %v1918, 2147483648
    %v1925 = vsel %vm1923, %v1910, %v1924
    %vm1926 = vcmp.eq.s32.totalorder %v1921, 2
    %v1927 = vxor.u32 %v1910, 2147483648
    %v1928 = vsel %vm1926, %v1927, %v1918
    %v1929 = vsel %vm1922, %v1925, %v1928
    %v1930 = vsel %vm1919, nan, %v1929
    %s1931 = sld [smem:[#allocation2 + $0x1b]]
    %v1932 = vstv %s1931
    %v1933 = vmul.f32 %v1932, %v208
    %s1934 = sld [smem:[#allocation2 + $0x23]]
    %v1935 = vstv %s1934
    %v1936 = vmul.f32 %v1935, %v373
    %v1937 = vadd.f32 %v1933, %v1936
    %s1938 = sld [smem:[#allocation2 + $0x2b]]
    %v1939 = vstv %s1938
    %v1940 = vmul.f32 %v1939, %v538
    %v1941 = vadd.f32 %v1937, %v1940
    %s1942 = sld [smem:[#allocation2 + $0x33]]
    %v1943 = vstv %s1942
    %v1944 = vmul.f32 %v1943, %v703
    %v1945 = vadd.f32 %v1941, %v1944
    %s1946 = sld [smem:[#allocation2 + $0x3b]]
    %v1947 = vstv %s1946
    %v1948 = vmul.f32 %v1947, %v868
    %v1949 = vadd.f32 %v1945, %v1948
    %s1950 = sld [smem:[#allocation2 + $0x43]]
    %v1951 = vstv %s1950
    %v1952 = vmul.f32 %v1951, %v1033
    %v1953 = vadd.f32 %v1949, %v1952
    %s1954 = sld [smem:[#allocation2 + $0x4b]]
    %v1955 = vstv %s1954
    %v1956 = vmul.f32 %v1955, %v1198
    %v1957 = vadd.f32 %v1953, %v1956
    %s1958 = sld [smem:[#allocation2 + $0x53]]
    %v1959 = vstv %s1958
    %v1960 = vmul.f32 %v1959, %v1363
    %v1961 = vadd.f32 %v1957, %v1960
    %s1962 = sld [smem:[#allocation2 + $0x5b]]
    %v1963 = vstv %s1962
    %v1964 = vadd.f32 %v1961, %v1963
    %v1965 = vand.u32 2147483647, %v1964
    %vm1966 = vcmp.le.f32.partialorder %v1965, 0.7853982
    %vm1967 = vcmp.lt.s32.totalorder %v1964, 0
    %v1968 = vand.u32 %v1964, 2139095040
    %v1969 = vshrl.u32 %v1968, 23
    %v1970 = vsub.s32 %v1969, 127
    %v1971 = vand.u32 2147483647, %v1964
    %v1972 = vand.u32 %v1971, 8388607
    %v1973 = vor.u32 %v1972, 8388608
    %v1974 = vsub.s32 0, %v1973
    %v1975 = vadd.s32 %v1970, 1
    %vm1976 = vcmp.gt.s32.totalorder %v1975, 0
    %v1977 = vsel %vm1976, %v1975, 0
    %v1978 = vshrl.u32 %v1977, 5
    %v1979 = vand.u32 %v1977, 31
    %v1980 = vsub.s32 32, %v1979
    %v1981 = vshrl.u32 683565275, %v1980
    %v1982 = vshll.u32 683565275, %v1979
    %v1983 = vshrl.u32 2475754826, %v1980
    %v1984 = vor.u32 %v1982, %v1983
    %v1985 = vshll.u32 2475754826, %v1979
    %v1986 = vshrl.u32 2131351028, %v1980
    %v1987 = vor.u32 %v1985, %v1986
    %v1988 = vshll.u32 2131351028, %v1979
    %v1989 = vshrl.u32 2102212464, %v1980
    %v1990 = vor.u32 %v1988, %v1989
    %v1991 = vshll.u32 2102212464, %v1979
    %v1992 = vshrl.u32 920167782, %v1980
    %v1993 = vor.u32 %v1991, %v1992
    %v1994 = vshll.u32 920167782, %v1979
    %v1995 = vshrl.u32 1326507024, %v1980
    %v1996 = vor.u32 %v1994, %v1995
    %vm1997 = vcmp.lt.s32.totalorder %v1978, 1
    %vm1998 = vcmp.lt.s32.totalorder %v1978, 2
    %vm1999 = vcmp.lt.s32.totalorder %v1978, 3
    %vm2000 = vcmp.lt.s32.totalorder %v1978, 4
    %v2001 = vsel %vm1997, %v1981, %v1984
    %v2002 = vsel %vm2000, %v1990, 2102212464
    %v2003 = vsel %vm1999, %v1987, %v2002
    %v2004 = vsel %vm1998, %v2001, %v2003
    %v2005 = vsel %vm1997, %v1984, %v1987
    %v2006 = vsel %vm2000, %v1993, 920167782
    %v2007 = vsel %vm1999, %v1990, %v2006
    %v2008 = vsel %vm1998, %v2005, %v2007
    %v2009 = vsel %vm1997, %v1987, %v1990
    %v2010 = vsel %vm2000, %v1996, 1326507024
    %v2011 = vsel %vm1999, %v1993, %v2010
    %v2012 = vsel %vm1998, %v2009, %v2011
    %v2013 = vshll.u32 %v1973, 8
    %v2014 = vand.u32 %v2013, 65535
    %v2015 = vshrl.u32 %v2013, 16
    %v2016 = vand.u32 %v2012, 65535
    %v2017 = vshrl.u32 %v2012, 16
    %v2018 = vmul.u32 %v2014, %v2016
    %v2019 = vmul.u32 %v2014, %v2017
    %v2020 = vmul.u32 %v2015, %v2016
    %v2021 = vmul.u32 %v2015, %v2017
    %v2022 = vshll.u32 %v2019, 16
    %v2023 = vshrl.u32 %v2019, 16
    %v2024 = vshll.u32 %v2020, 16
    %v2025 = vshrl.u32 %v2020, 16
    %vm2026 = vc.u32 %v2018, %v2022
    %v2027 = vsel %vm2026, 1, 0
    %v2028 = vadd.s32 %v2018, %v2022
    %v2029 = vadd.s32 %v2021, %v2027
    %vm2030 = vc.u32 %v2028, %v2024
    %v2031 = vsel %vm2030, 1, 0
    %v2032 = vadd.s32 %v2028, %v2024
    %v2033 = vadd.s32 %v2029, %v2031
    %v2034 = vadd.s32 %v2033, %v2023
    %v2035 = vadd.s32 %v2034, %v2025
    %v2036 = vand.u32 %v2013, 65535
    %v2037 = vshrl.u32 %v2013, 16
    %v2038 = vand.u32 %v2008, 65535
    %v2039 = vshrl.u32 %v2008, 16
    %v2040 = vmul.u32 %v2036, %v2038
    %v2041 = vmul.u32 %v2036, %v2039
    %v2042 = vmul.u32 %v2037, %v2038
    %v2043 = vmul.u32 %v2037, %v2039
    %v2044 = vshll.u32 %v2041, 16
    %v2045 = vshrl.u32 %v2041, 16
    %v2046 = vshll.u32 %v2042, 16
    %v2047 = vshrl.u32 %v2042, 16
    %vm2048 = vc.u32 %v2040, %v2044
    %v2049 = vsel %vm2048, 1, 0
    %v2050 = vadd.s32 %v2040, %v2044
    %v2051 = vadd.s32 %v2043, %v2049
    %vm2052 = vc.u32 %v2050, %v2046
    %v2053 = vsel %vm2052, 1, 0
    %v2054 = vadd.s32 %v2050, %v2046
    %v2055 = vadd.s32 %v2051, %v2053
    %v2056 = vadd.s32 %v2055, %v2045
    %v2057 = vadd.s32 %v2056, %v2047
    %v2058 = vmul.u32 %v2013, %v2004
    %v2059 = vadd.s32 %v2035, %v2054
    %vm2060 = vc.u32 %v2035, %v2054
    %v2061 = vadd.s32 %v2057, 1
    %v2062 = vsel %vm2060, %v2061, %v2057
    %v2063 = vadd.s32 %v2058, %v2062
    %v2064 = vadd.s32 %v2063, 536870912
    %v2065 = vshrl.u32 %v2064, 30
    %v2066 = vshll.u32 %v2065, 30
    %v2067 = vsub.s32 %v2063, %v2066
    %vm2068 = vcmp.lt.s32.totalorder %v2067, 0
    %v2069 = vsub.s32 0, %v2067
    %v2070 = vsel %vm2068, %v2069, %v2067
    %v2071 = vclz %v2070
    %v2072 = vsub.s32 %v2071, 2
    %vm2073 = vcmp.gt.s32.totalorder 0, %v2072
    %v2074 = vsel %vm2073, 0, %v2072
    %v2075 = vsub.s32 32, %v2074
    %v2076 = vshll.u32 %v2067, %v2074
    %v2077 = vshrl.u32 %v2059, %v2075
    %v2078 = vor.u32 %v2076, %v2077
    %v2079 = vsub.s32 4294967266, %v2074
    %v2080 = vadd.s32 %v2079, 127
    %v2081 = vshll.u32 %v2080, 23
    %v2082 = vor.u32 4788187, %v2081
    %v2083 = vand.u32 2147483647, %v2082
    %v2085 = vcvt.s32.f32 %v2078
    %v2086 = vmul.f32 %v2085, %v2083
    %v2087 = vxor.u32 %v2086, 2147483648
    %v2088 = vsel %vm1967, %v2087, %v2086
    %v2089 = vsub.s32 4, %v2065
    %v2090 = vsel %vm1967, %v2089, %v2065
    %v2091 = vsel %vm1966, %v1964, %v2088
    %v2092 = vsel %vm1966, 0, %v2090
    %v2093 = vmul.f32 %v2091, %v2091
    %v2094 = vmul.f32 %v2093, -0.001358992
    %v2095 = vadd.f32 %v2094, 0.041655596
    %v2096 = vmul.f32 %v2093, %v2095
    %v2097 = vadd.f32 %v2096, -0.4999988
    %v2098 = vmul.f32 %v2093, %v2097
    %v2099 = vadd.f32 1.0, %v2098
    %v2100 = vmul.f32 %v2091, %v2091
    %v2101 = vmul.f32 %v2100, -0.00019511016
    %v2102 = vadd.f32 %v2101, 0.008332121
    %v2103 = vmul.f32 %v2100, %v2102
    %v2104 = vadd.f32 %v2103, -0.16666654
    %v2105 = vmul.f32 %v2100, %v2104
    %v2106 = vadd.f32 %v2105, 1.0
    %v2107 = vmul.f32 %v2106, %v2091
    %vm2108 = vweird.f32 %v1964
    %v2109 = vadd.s32 %v2092, 3
    %v2110 = vand.u32 %v2109, 3
    %vm2111 = vcmp.lt.s32.totalorder %v2110, 2
    %vm2112 = vcmp.eq.s32.totalorder %v2110, 0
    %v2113 = vxor.u32 %v2107, 2147483648
    %v2114 = vsel %vm2112, %v2099, %v2113
    %vm2115 = vcmp.eq.s32.totalorder %v2110, 2
    %v2116 = vxor.u32 %v2099, 2147483648
    %v2117 = vsel %vm2115, %v2116, %v2107
    %v2118 = vsel %vm2111, %v2114, %v2117
    %v2119 = vsel %vm2108, nan, %v2118
    %s2120 = sld [smem:[#allocation2 + $0x1c]]
    %v2121 = vstv %s2120
    %v2122 = vmul.f32 %v2121, %v208
    %s2123 = sld [smem:[#allocation2 + $0x24]]
    %v2124 = vstv %s2123
    %v2125 = vmul.f32 %v2124, %v373
    %v2126 = vadd.f32 %v2122, %v2125
    %s2127 = sld [smem:[#allocation2 + $0x2c]]
    %v2128 = vstv %s2127
    %v2129 = vmul.f32 %v2128, %v538
    %v2130 = vadd.f32 %v2126, %v2129
    %s2131 = sld [smem:[#allocation2 + $0x34]]
    %v2132 = vstv %s2131
    %v2133 = vmul.f32 %v2132, %v703
    %v2134 = vadd.f32 %v2130, %v2133
    %s2135 = sld [smem:[#allocation2 + $0x3c]]
    %v2136 = vstv %s2135
    %v2137 = vmul.f32 %v2136, %v868
    %v2138 = vadd.f32 %v2134, %v2137
    %s2139 = sld [smem:[#allocation2 + $0x44]]
    %v2140 = vstv %s2139
    %v2141 = vmul.f32 %v2140, %v1033
    %v2142 = vadd.f32 %v2138, %v2141
    %s2143 = sld [smem:[#allocation2 + $0x4c]]
    %v2144 = vstv %s2143
    %v2145 = vmul.f32 %v2144, %v1198
    %v2146 = vadd.f32 %v2142, %v2145
    %s2147 = sld [smem:[#allocation2 + $0x54]]
    %v2148 = vstv %s2147
    %v2149 = vmul.f32 %v2148, %v1363
    %v2150 = vadd.f32 %v2146, %v2149
    %s2151 = sld [smem:[#allocation2 + $0x5c]]
    %v2152 = vstv %s2151
    %v2153 = vadd.f32 %v2150, %v2152
    %v2154 = vand.u32 2147483647, %v2153
    %vm2155 = vcmp.le.f32.partialorder %v2154, 0.7853982
    %vm2156 = vcmp.lt.s32.totalorder %v2153, 0
    %v2157 = vand.u32 %v2153, 2139095040
    %v2158 = vshrl.u32 %v2157, 23
    %v2159 = vsub.s32 %v2158, 127
    %v2160 = vand.u32 2147483647, %v2153
    %v2161 = vand.u32 %v2160, 8388607
    %v2162 = vor.u32 %v2161, 8388608
    %v2163 = vsub.s32 0, %v2162
    %v2164 = vadd.s32 %v2159, 1
    %vm2165 = vcmp.gt.s32.totalorder %v2164, 0
    %v2166 = vsel %vm2165, %v2164, 0
    %v2167 = vshrl.u32 %v2166, 5
    %v2168 = vand.u32 %v2166, 31
    %v2169 = vsub.s32 32, %v2168
    %v2170 = vshrl.u32 683565275, %v2169
    %v2171 = vshll.u32 683565275, %v2168
    %v2172 = vshrl.u32 2475754826, %v2169
    %v2173 = vor.u32 %v2171, %v2172
    %v2174 = vshll.u32 2475754826, %v2168
    %v2175 = vshrl.u32 2131351028, %v2169
    %v2176 = vor.u32 %v2174, %v2175
    %v2177 = vshll.u32 2131351028, %v2168
    %v2178 = vshrl.u32 2102212464, %v2169
    %v2179 = vor.u32 %v2177, %v2178
    %v2180 = vshll.u32 2102212464, %v2168
    %v2181 = vshrl.u32 920167782, %v2169
    %v2182 = vor.u32 %v2180, %v2181
    %v2183 = vshll.u32 920167782, %v2168
    %v2184 = vshrl.u32 1326507024, %v2169
    %v2185 = vor.u32 %v2183, %v2184
    %vm2186 = vcmp.lt.s32.totalorder %v2167, 1
    %vm2187 = vcmp.lt.s32.totalorder %v2167, 2
    %vm2188 = vcmp.lt.s32.totalorder %v2167, 3
    %vm2189 = vcmp.lt.s32.totalorder %v2167, 4
    %v2190 = vsel %vm2186, %v2170, %v2173
    %v2191 = vsel %vm2189, %v2179, 2102212464
    %v2192 = vsel %vm2188, %v2176, %v2191
    %v2193 = vsel %vm2187, %v2190, %v2192
    %v2194 = vsel %vm2186, %v2173, %v2176
    %v2195 = vsel %vm2189, %v2182, 920167782
    %v2196 = vsel %vm2188, %v2179, %v2195
    %v2197 = vsel %vm2187, %v2194, %v2196
    %v2198 = vsel %vm2186, %v2176, %v2179
    %v2199 = vsel %vm2189, %v2185, 1326507024
    %v2200 = vsel %vm2188, %v2182, %v2199
    %v2201 = vsel %vm2187, %v2198, %v2200
    %v2202 = vshll.u32 %v2162, 8
    %v2203 = vand.u32 %v2202, 65535
    %v2204 = vshrl.u32 %v2202, 16
    %v2205 = vand.u32 %v2201, 65535
    %v2206 = vshrl.u32 %v2201, 16
    %v2207 = vmul.u32 %v2203, %v2205
    %v2208 = vmul.u32 %v2203, %v2206
    %v2209 = vmul.u32 %v2204, %v2205
    %v2210 = vmul.u32 %v2204, %v2206
    %v2211 = vshll.u32 %v2208, 16
    %v2212 = vshrl.u32 %v2208, 16
    %v2213 = vshll.u32 %v2209, 16
    %v2214 = vshrl.u32 %v2209, 16
    %vm2215 = vc.u32 %v2207, %v2211
    %v2216 = vsel %vm2215, 1, 0
    %v2217 = vadd.s32 %v2207, %v2211
    %v2218 = vadd.s32 %v2210, %v2216
    %vm2219 = vc.u32 %v2217, %v2213
    %v2220 = vsel %vm2219, 1, 0
    %v2221 = vadd.s32 %v2217, %v2213
    %v2222 = vadd.s32 %v2218, %v2220
    %v2223 = vadd.s32 %v2222, %v2212
    %v2224 = vadd.s32 %v2223, %v2214
    %v2225 = vand.u32 %v2202, 65535
    %v2226 = vshrl.u32 %v2202, 16
    %v2227 = vand.u32 %v2197, 65535
    %v2228 = vshrl.u32 %v2197, 16
    %v2229 = vmul.u32 %v2225, %v2227
    %v2230 = vmul.u32 %v2225, %v2228
    %v2231 = vmul.u32 %v2226, %v2227
    %v2232 = vmul.u32 %v2226, %v2228
    %v2233 = vshll.u32 %v2230, 16
    %v2234 = vshrl.u32 %v2230, 16
    %v2235 = vshll.u32 %v2231, 16
    %v2236 = vshrl.u32 %v2231, 16
    %vm2237 = vc.u32 %v2229, %v2233
    %v2238 = vsel %vm2237, 1, 0
    %v2239 = vadd.s32 %v2229, %v2233
    %v2240 = vadd.s32 %v2232, %v2238
    %vm2241 = vc.u32 %v2239, %v2235
    %v2242 = vsel %vm2241, 1, 0
    %v2243 = vadd.s32 %v2239, %v2235
    %v2244 = vadd.s32 %v2240, %v2242
    %v2245 = vadd.s32 %v2244, %v2234
    %v2246 = vadd.s32 %v2245, %v2236
    %v2247 = vmul.u32 %v2202, %v2193
    %v2248 = vadd.s32 %v2224, %v2243
    %vm2249 = vc.u32 %v2224, %v2243
    %v2250 = vadd.s32 %v2246, 1
    %v2251 = vsel %vm2249, %v2250, %v2246
    %v2252 = vadd.s32 %v2247, %v2251
    %v2253 = vadd.s32 %v2252, 536870912
    %v2254 = vshrl.u32 %v2253, 30
    %v2255 = vshll.u32 %v2254, 30
    %v2256 = vsub.s32 %v2252, %v2255
    %vm2257 = vcmp.lt.s32.totalorder %v2256, 0
    %v2258 = vsub.s32 0, %v2256
    %v2259 = vsel %vm2257, %v2258, %v2256
    %v2260 = vclz %v2259
    %v2261 = vsub.s32 %v2260, 2
    %vm2262 = vcmp.gt.s32.totalorder 0, %v2261
    %v2263 = vsel %vm2262, 0, %v2261
    %v2264 = vsub.s32 32, %v2263
    %v2265 = vshll.u32 %v2256, %v2263
    %v2266 = vshrl.u32 %v2248, %v2264
    %v2267 = vor.u32 %v2265, %v2266
    %v2268 = vsub.s32 4294967266, %v2263
    %v2269 = vadd.s32 %v2268, 127
    %v2270 = vshll.u32 %v2269, 23
    %v2271 = vor.u32 4788187, %v2270
    %v2272 = vand.u32 2147483647, %v2271
    %v2274 = vcvt.s32.f32 %v2267
    %v2275 = vmul.f32 %v2274, %v2272
    %v2276 = vxor.u32 %v2275, 2147483648
    %v2277 = vsel %vm2156, %v2276, %v2275
    %v2278 = vsub.s32 4, %v2254
    %v2279 = vsel %vm2156, %v2278, %v2254
    %v2280 = vsel %vm2155, %v2153, %v2277
    %v2281 = vsel %vm2155, 0, %v2279
    %v2282 = vmul.f32 %v2280, %v2280
    %v2283 = vmul.f32 %v2282, -0.001358992
    %v2284 = vadd.f32 %v2283, 0.041655596
    %v2285 = vmul.f32 %v2282, %v2284
    %v2286 = vadd.f32 %v2285, -0.4999988
    %v2287 = vmul.f32 %v2282, %v2286
    %v2288 = vadd.f32 1.0, %v2287
    %v2289 = vmul.f32 %v2280, %v2280
    %v2290 = vmul.f32 %v2289, -0.00019511016
    %v2291 = vadd.f32 %v2290, 0.008332121
    %v2292 = vmul.f32 %v2289, %v2291
    %v2293 = vadd.f32 %v2292, -0.16666654
    %v2294 = vmul.f32 %v2289, %v2293
    %v2295 = vadd.f32 %v2294, 1.0
    %v2296 = vmul.f32 %v2295, %v2280
    %vm2297 = vweird.f32 %v2153
    %v2298 = vadd.s32 %v2281, 3
    %v2299 = vand.u32 %v2298, 3
    %vm2300 = vcmp.lt.s32.totalorder %v2299, 2
    %vm2301 = vcmp.eq.s32.totalorder %v2299, 0
    %v2302 = vxor.u32 %v2296, 2147483648
    %v2303 = vsel %vm2301, %v2288, %v2302
    %vm2304 = vcmp.eq.s32.totalorder %v2299, 2
    %v2305 = vxor.u32 %v2288, 2147483648
    %v2306 = vsel %vm2304, %v2305, %v2296
    %v2307 = vsel %vm2300, %v2303, %v2306
    %v2308 = vsel %vm2297, nan, %v2307
    %s2309 = sld [smem:[#allocation2 + $0x1d]]
    %v2310 = vstv %s2309
    %v2311 = vmul.f32 %v2310, %v208
    %s2312 = sld [smem:[#allocation2 + $0x25]]
    %v2313 = vstv %s2312
    %v2314 = vmul.f32 %v2313, %v373
    %v2315 = vadd.f32 %v2311, %v2314
    %s2316 = sld [smem:[#allocation2 + $0x2d]]
    %v2317 = vstv %s2316
    %v2318 = vmul.f32 %v2317, %v538
    %v2319 = vadd.f32 %v2315, %v2318
    %s2320 = sld [smem:[#allocation2 + $0x35]]
    %v2321 = vstv %s2320
    %v2322 = vmul.f32 %v2321, %v703
    %v2323 = vadd.f32 %v2319, %v2322
    %s2324 = sld [smem:[#allocation2 + $0x3d]]
    %v2325 = vstv %s2324
    %v2326 = vmul.f32 %v2325, %v868
    %v2327 = vadd.f32 %v2323, %v2326
    %s2328 = sld [smem:[#allocation2 + $0x45]]
    %v2329 = vstv %s2328
    %v2330 = vmul.f32 %v2329, %v1033
    %v2331 = vadd.f32 %v2327, %v2330
    %s2332 = sld [smem:[#allocation2 + $0x4d]]
    %v2333 = vstv %s2332
    %v2334 = vmul.f32 %v2333, %v1198
    %v2335 = vadd.f32 %v2331, %v2334
    %s2336 = sld [smem:[#allocation2 + $0x55]]
    %v2337 = vstv %s2336
    %v2338 = vmul.f32 %v2337, %v1363
    %v2339 = vadd.f32 %v2335, %v2338
    %s2340 = sld [smem:[#allocation2 + $0x5d]]
    %v2341 = vstv %s2340
    %v2342 = vadd.f32 %v2339, %v2341
    %v2343 = vand.u32 2147483647, %v2342
    %vm2344 = vcmp.le.f32.partialorder %v2343, 0.7853982
    %vm2345 = vcmp.lt.s32.totalorder %v2342, 0
    %v2346 = vand.u32 %v2342, 2139095040
    %v2347 = vshrl.u32 %v2346, 23
    %v2348 = vsub.s32 %v2347, 127
    %v2349 = vand.u32 2147483647, %v2342
    %v2350 = vand.u32 %v2349, 8388607
    %v2351 = vor.u32 %v2350, 8388608
    %v2352 = vsub.s32 0, %v2351
    %v2353 = vadd.s32 %v2348, 1
    %vm2354 = vcmp.gt.s32.totalorder %v2353, 0
    %v2355 = vsel %vm2354, %v2353, 0
    %v2356 = vshrl.u32 %v2355, 5
    %v2357 = vand.u32 %v2355, 31
    %v2358 = vsub.s32 32, %v2357
    %v2359 = vshrl.u32 683565275, %v2358
    %v2360 = vshll.u32 683565275, %v2357
    %v2361 = vshrl.u32 2475754826, %v2358
    %v2362 = vor.u32 %v2360, %v2361
    %v2363 = vshll.u32 2475754826, %v2357
    %v2364 = vshrl.u32 2131351028, %v2358
    %v2365 = vor.u32 %v2363, %v2364
    %v2366 = vshll.u32 2131351028, %v2357
    %v2367 = vshrl.u32 2102212464, %v2358
    %v2368 = vor.u32 %v2366, %v2367
    %v2369 = vshll.u32 2102212464, %v2357
    %v2370 = vshrl.u32 920167782, %v2358
    %v2371 = vor.u32 %v2369, %v2370
    %v2372 = vshll.u32 920167782, %v2357
    %v2373 = vshrl.u32 1326507024, %v2358
    %v2374 = vor.u32 %v2372, %v2373
    %vm2375 = vcmp.lt.s32.totalorder %v2356, 1
    %vm2376 = vcmp.lt.s32.totalorder %v2356, 2
    %vm2377 = vcmp.lt.s32.totalorder %v2356, 3
    %vm2378 = vcmp.lt.s32.totalorder %v2356, 4
    %v2379 = vsel %vm2375, %v2359, %v2362
    %v2380 = vsel %vm2378, %v2368, 2102212464
    %v2381 = vsel %vm2377, %v2365, %v2380
    %v2382 = vsel %vm2376, %v2379, %v2381
    %v2383 = vsel %vm2375, %v2362, %v2365
    %v2384 = vsel %vm2378, %v2371, 920167782
    %v2385 = vsel %vm2377, %v2368, %v2384
    %v2386 = vsel %vm2376, %v2383, %v2385
    %v2387 = vsel %vm2375, %v2365, %v2368
    %v2388 = vsel %vm2378, %v2374, 1326507024
    %v2389 = vsel %vm2377, %v2371, %v2388
    %v2390 = vsel %vm2376, %v2387, %v2389
    %v2391 = vshll.u32 %v2351, 8
    %v2392 = vand.u32 %v2391, 65535
    %v2393 = vshrl.u32 %v2391, 16
    %v2394 = vand.u32 %v2390, 65535
    %v2395 = vshrl.u32 %v2390, 16
    %v2396 = vmul.u32 %v2392, %v2394
    %v2397 = vmul.u32 %v2392, %v2395
    %v2398 = vmul.u32 %v2393, %v2394
    %v2399 = vmul.u32 %v2393, %v2395
    %v2400 = vshll.u32 %v2397, 16
    %v2401 = vshrl.u32 %v2397, 16
    %v2402 = vshll.u32 %v2398, 16
    %v2403 = vshrl.u32 %v2398, 16
    %vm2404 = vc.u32 %v2396, %v2400
    %v2405 = vsel %vm2404, 1, 0
    %v2406 = vadd.s32 %v2396, %v2400
    %v2407 = vadd.s32 %v2399, %v2405
    %vm2408 = vc.u32 %v2406, %v2402
    %v2409 = vsel %vm2408, 1, 0
    %v2410 = vadd.s32 %v2406, %v2402
    %v2411 = vadd.s32 %v2407, %v2409
    %v2412 = vadd.s32 %v2411, %v2401
    %v2413 = vadd.s32 %v2412, %v2403
    %v2414 = vand.u32 %v2391, 65535
    %v2415 = vshrl.u32 %v2391, 16
    %v2416 = vand.u32 %v2386, 65535
    %v2417 = vshrl.u32 %v2386, 16
    %v2418 = vmul.u32 %v2414, %v2416
    %v2419 = vmul.u32 %v2414, %v2417
    %v2420 = vmul.u32 %v2415, %v2416
    %v2421 = vmul.u32 %v2415, %v2417
    %v2422 = vshll.u32 %v2419, 16
    %v2423 = vshrl.u32 %v2419, 16
    %v2424 = vshll.u32 %v2420, 16
    %v2425 = vshrl.u32 %v2420, 16
    %vm2426 = vc.u32 %v2418, %v2422
    %v2427 = vsel %vm2426, 1, 0
    %v2428 = vadd.s32 %v2418, %v2422
    %v2429 = vadd.s32 %v2421, %v2427
    %vm2430 = vc.u32 %v2428, %v2424
    %v2431 = vsel %vm2430, 1, 0
    %v2432 = vadd.s32 %v2428, %v2424
    %v2433 = vadd.s32 %v2429, %v2431
    %v2434 = vadd.s32 %v2433, %v2423
    %v2435 = vadd.s32 %v2434, %v2425
    %v2436 = vmul.u32 %v2391, %v2382
    %v2437 = vadd.s32 %v2413, %v2432
    %vm2438 = vc.u32 %v2413, %v2432
    %v2439 = vadd.s32 %v2435, 1
    %v2440 = vsel %vm2438, %v2439, %v2435
    %v2441 = vadd.s32 %v2436, %v2440
    %v2442 = vadd.s32 %v2441, 536870912
    %v2443 = vshrl.u32 %v2442, 30
    %v2444 = vshll.u32 %v2443, 30
    %v2445 = vsub.s32 %v2441, %v2444
    %vm2446 = vcmp.lt.s32.totalorder %v2445, 0
    %v2447 = vsub.s32 0, %v2445
    %v2448 = vsel %vm2446, %v2447, %v2445
    %v2449 = vclz %v2448
    %v2450 = vsub.s32 %v2449, 2
    %vm2451 = vcmp.gt.s32.totalorder 0, %v2450
    %v2452 = vsel %vm2451, 0, %v2450
    %v2453 = vsub.s32 32, %v2452
    %v2454 = vshll.u32 %v2445, %v2452
    %v2455 = vshrl.u32 %v2437, %v2453
    %v2456 = vor.u32 %v2454, %v2455
    %v2457 = vsub.s32 4294967266, %v2452
    %v2458 = vadd.s32 %v2457, 127
    %v2459 = vshll.u32 %v2458, 23
    %v2460 = vor.u32 4788187, %v2459
    %v2461 = vand.u32 2147483647, %v2460
    %v2463 = vcvt.s32.f32 %v2456
    %v2464 = vmul.f32 %v2463, %v2461
    %v2465 = vxor.u32 %v2464, 2147483648
    %v2466 = vsel %vm2345, %v2465, %v2464
    %v2467 = vsub.s32 4, %v2443
    %v2468 = vsel %vm2345, %v2467, %v2443
    %v2469 = vsel %vm2344, %v2342, %v2466
    %v2470 = vsel %vm2344, 0, %v2468
    %v2471 = vmul.f32 %v2469, %v2469
    %v2472 = vmul.f32 %v2471, -0.001358992
    %v2473 = vadd.f32 %v2472, 0.041655596
    %v2474 = vmul.f32 %v2471, %v2473
    %v2475 = vadd.f32 %v2474, -0.4999988
    %v2476 = vmul.f32 %v2471, %v2475
    %v2477 = vadd.f32 1.0, %v2476
    %v2478 = vmul.f32 %v2469, %v2469
    %v2479 = vmul.f32 %v2478, -0.00019511016
    %v2480 = vadd.f32 %v2479, 0.008332121
    %v2481 = vmul.f32 %v2478, %v2480
    %v2482 = vadd.f32 %v2481, -0.16666654
    %v2483 = vmul.f32 %v2478, %v2482
    %v2484 = vadd.f32 %v2483, 1.0
    %v2485 = vmul.f32 %v2484, %v2469
    %vm2486 = vweird.f32 %v2342
    %v2487 = vadd.s32 %v2470, 3
    %v2488 = vand.u32 %v2487, 3
    %vm2489 = vcmp.lt.s32.totalorder %v2488, 2
    %vm2490 = vcmp.eq.s32.totalorder %v2488, 0
    %v2491 = vxor.u32 %v2485, 2147483648
    %v2492 = vsel %vm2490, %v2477, %v2491
    %vm2493 = vcmp.eq.s32.totalorder %v2488, 2
    %v2494 = vxor.u32 %v2477, 2147483648
    %v2495 = vsel %vm2493, %v2494, %v2485
    %v2496 = vsel %vm2489, %v2492, %v2495
    %v2497 = vsel %vm2486, nan, %v2496
    %s2498 = sld [smem:[#allocation2 + $0x1e]]
    %v2499 = vstv %s2498
    %v2500 = vmul.f32 %v2499, %v208
    %s2501 = sld [smem:[#allocation2 + $0x26]]
    %v2502 = vstv %s2501
    %v2503 = vmul.f32 %v2502, %v373
    %v2504 = vadd.f32 %v2500, %v2503
    %s2505 = sld [smem:[#allocation2 + $0x2e]]
    %v2506 = vstv %s2505
    %v2507 = vmul.f32 %v2506, %v538
    %v2508 = vadd.f32 %v2504, %v2507
    %s2509 = sld [smem:[#allocation2 + $0x36]]
    %v2510 = vstv %s2509
    %v2511 = vmul.f32 %v2510, %v703
    %v2512 = vadd.f32 %v2508, %v2511
    %s2513 = sld [smem:[#allocation2 + $0x3e]]
    %v2514 = vstv %s2513
    %v2515 = vmul.f32 %v2514, %v868
    %v2516 = vadd.f32 %v2512, %v2515
    %s2517 = sld [smem:[#allocation2 + $0x46]]
    %v2518 = vstv %s2517
    %v2519 = vmul.f32 %v2518, %v1033
    %v2520 = vadd.f32 %v2516, %v2519
    %s2521 = sld [smem:[#allocation2 + $0x4e]]
    %v2522 = vstv %s2521
    %v2523 = vmul.f32 %v2522, %v1198
    %v2524 = vadd.f32 %v2520, %v2523
    %s2525 = sld [smem:[#allocation2 + $0x56]]
    %v2526 = vstv %s2525
    %v2527 = vmul.f32 %v2526, %v1363
    %v2528 = vadd.f32 %v2524, %v2527
    %s2529 = sld [smem:[#allocation2 + $0x5e]]
    %v2530 = vstv %s2529
    %v2531 = vadd.f32 %v2528, %v2530
    %v2532 = vand.u32 2147483647, %v2531
    %vm2533 = vcmp.le.f32.partialorder %v2532, 0.7853982
    %vm2534 = vcmp.lt.s32.totalorder %v2531, 0
    %v2535 = vand.u32 %v2531, 2139095040
    %v2536 = vshrl.u32 %v2535, 23
    %v2537 = vsub.s32 %v2536, 127
    %v2538 = vand.u32 2147483647, %v2531
    %v2539 = vand.u32 %v2538, 8388607
    %v2540 = vor.u32 %v2539, 8388608
    %v2541 = vsub.s32 0, %v2540
    %v2542 = vadd.s32 %v2537, 1
    %vm2543 = vcmp.gt.s32.totalorder %v2542, 0
    %v2544 = vsel %vm2543, %v2542, 0
    %v2545 = vshrl.u32 %v2544, 5
    %v2546 = vand.u32 %v2544, 31
    %v2547 = vsub.s32 32, %v2546
    %v2548 = vshrl.u32 683565275, %v2547
    %v2549 = vshll.u32 683565275, %v2546
    %v2550 = vshrl.u32 2475754826, %v2547
    %v2551 = vor.u32 %v2549, %v2550
    %v2552 = vshll.u32 2475754826, %v2546
    %v2553 = vshrl.u32 2131351028, %v2547
    %v2554 = vor.u32 %v2552, %v2553
    %v2555 = vshll.u32 2131351028, %v2546
    %v2556 = vshrl.u32 2102212464, %v2547
    %v2557 = vor.u32 %v2555, %v2556
    %v2558 = vshll.u32 2102212464, %v2546
    %v2559 = vshrl.u32 920167782, %v2547
    %v2560 = vor.u32 %v2558, %v2559
    %v2561 = vshll.u32 920167782, %v2546
    %v2562 = vshrl.u32 1326507024, %v2547
    %v2563 = vor.u32 %v2561, %v2562
    %vm2564 = vcmp.lt.s32.totalorder %v2545, 1
    %vm2565 = vcmp.lt.s32.totalorder %v2545, 2
    %vm2566 = vcmp.lt.s32.totalorder %v2545, 3
    %vm2567 = vcmp.lt.s32.totalorder %v2545, 4
    %v2568 = vsel %vm2564, %v2548, %v2551
    %v2569 = vsel %vm2567, %v2557, 2102212464
    %v2570 = vsel %vm2566, %v2554, %v2569
    %v2571 = vsel %vm2565, %v2568, %v2570
    %v2572 = vsel %vm2564, %v2551, %v2554
    %v2573 = vsel %vm2567, %v2560, 920167782
    %v2574 = vsel %vm2566, %v2557, %v2573
    %v2575 = vsel %vm2565, %v2572, %v2574
    %v2576 = vsel %vm2564, %v2554, %v2557
    %v2577 = vsel %vm2567, %v2563, 1326507024
    %v2578 = vsel %vm2566, %v2560, %v2577
    %v2579 = vsel %vm2565, %v2576, %v2578
    %v2580 = vshll.u32 %v2540, 8
    %v2581 = vand.u32 %v2580, 65535
    %v2582 = vshrl.u32 %v2580, 16
    %v2583 = vand.u32 %v2579, 65535
    %v2584 = vshrl.u32 %v2579, 16
    %v2585 = vmul.u32 %v2581, %v2583
    %v2586 = vmul.u32 %v2581, %v2584
    %v2587 = vmul.u32 %v2582, %v2583
    %v2588 = vmul.u32 %v2582, %v2584
    %v2589 = vshll.u32 %v2586, 16
    %v2590 = vshrl.u32 %v2586, 16
    %v2591 = vshll.u32 %v2587, 16
    %v2592 = vshrl.u32 %v2587, 16
    %vm2593 = vc.u32 %v2585, %v2589
    %v2594 = vsel %vm2593, 1, 0
    %v2595 = vadd.s32 %v2585, %v2589
    %v2596 = vadd.s32 %v2588, %v2594
    %vm2597 = vc.u32 %v2595, %v2591
    %v2598 = vsel %vm2597, 1, 0
    %v2599 = vadd.s32 %v2595, %v2591
    %v2600 = vadd.s32 %v2596, %v2598
    %v2601 = vadd.s32 %v2600, %v2590
    %v2602 = vadd.s32 %v2601, %v2592
    %v2603 = vand.u32 %v2580, 65535
    %v2604 = vshrl.u32 %v2580, 16
    %v2605 = vand.u32 %v2575, 65535
    %v2606 = vshrl.u32 %v2575, 16
    %v2607 = vmul.u32 %v2603, %v2605
    %v2608 = vmul.u32 %v2603, %v2606
    %v2609 = vmul.u32 %v2604, %v2605
    %v2610 = vmul.u32 %v2604, %v2606
    %v2611 = vshll.u32 %v2608, 16
    %v2612 = vshrl.u32 %v2608, 16
    %v2613 = vshll.u32 %v2609, 16
    %v2614 = vshrl.u32 %v2609, 16
    %vm2615 = vc.u32 %v2607, %v2611
    %v2616 = vsel %vm2615, 1, 0
    %v2617 = vadd.s32 %v2607, %v2611
    %v2618 = vadd.s32 %v2610, %v2616
    %vm2619 = vc.u32 %v2617, %v2613
    %v2620 = vsel %vm2619, 1, 0
    %v2621 = vadd.s32 %v2617, %v2613
    %v2622 = vadd.s32 %v2618, %v2620
    %v2623 = vadd.s32 %v2622, %v2612
    %v2624 = vadd.s32 %v2623, %v2614
    %v2625 = vmul.u32 %v2580, %v2571
    %v2626 = vadd.s32 %v2602, %v2621
    %vm2627 = vc.u32 %v2602, %v2621
    %v2628 = vadd.s32 %v2624, 1
    %v2629 = vsel %vm2627, %v2628, %v2624
    %v2630 = vadd.s32 %v2625, %v2629
    %v2631 = vadd.s32 %v2630, 536870912
    %v2632 = vshrl.u32 %v2631, 30
    %v2633 = vshll.u32 %v2632, 30
    %v2634 = vsub.s32 %v2630, %v2633
    %vm2635 = vcmp.lt.s32.totalorder %v2634, 0
    %v2636 = vsub.s32 0, %v2634
    %v2637 = vsel %vm2635, %v2636, %v2634
    %v2638 = vclz %v2637
    %v2639 = vsub.s32 %v2638, 2
    %vm2640 = vcmp.gt.s32.totalorder 0, %v2639
    %v2641 = vsel %vm2640, 0, %v2639
    %v2642 = vsub.s32 32, %v2641
    %v2643 = vshll.u32 %v2634, %v2641
    %v2644 = vshrl.u32 %v2626, %v2642
    %v2645 = vor.u32 %v2643, %v2644
    %v2646 = vsub.s32 4294967266, %v2641
    %v2647 = vadd.s32 %v2646, 127
    %v2648 = vshll.u32 %v2647, 23
    %v2649 = vor.u32 4788187, %v2648
    %v2650 = vand.u32 2147483647, %v2649
    %v2652 = vcvt.s32.f32 %v2645
    %v2653 = vmul.f32 %v2652, %v2650
    %v2654 = vxor.u32 %v2653, 2147483648
    %v2655 = vsel %vm2534, %v2654, %v2653
    %v2656 = vsub.s32 4, %v2632
    %v2657 = vsel %vm2534, %v2656, %v2632
    %v2658 = vsel %vm2533, %v2531, %v2655
    %v2659 = vsel %vm2533, 0, %v2657
    %v2660 = vmul.f32 %v2658, %v2658
    %v2661 = vmul.f32 %v2660, -0.001358992
    %v2662 = vadd.f32 %v2661, 0.041655596
    %v2663 = vmul.f32 %v2660, %v2662
    %v2664 = vadd.f32 %v2663, -0.4999988
    %v2665 = vmul.f32 %v2660, %v2664
    %v2666 = vadd.f32 1.0, %v2665
    %v2667 = vmul.f32 %v2658, %v2658
    %v2668 = vmul.f32 %v2667, -0.00019511016
    %v2669 = vadd.f32 %v2668, 0.008332121
    %v2670 = vmul.f32 %v2667, %v2669
    %v2671 = vadd.f32 %v2670, -0.16666654
    %v2672 = vmul.f32 %v2667, %v2671
    %v2673 = vadd.f32 %v2672, 1.0
    %v2674 = vmul.f32 %v2673, %v2658
    %vm2675 = vweird.f32 %v2531
    %v2676 = vadd.s32 %v2659, 3
    %v2677 = vand.u32 %v2676, 3
    %vm2678 = vcmp.lt.s32.totalorder %v2677, 2
    %vm2679 = vcmp.eq.s32.totalorder %v2677, 0
    %v2680 = vxor.u32 %v2674, 2147483648
    %v2681 = vsel %vm2679, %v2666, %v2680
    %vm2682 = vcmp.eq.s32.totalorder %v2677, 2
    %v2683 = vxor.u32 %v2666, 2147483648
    %v2684 = vsel %vm2682, %v2683, %v2674
    %v2685 = vsel %vm2678, %v2681, %v2684
    %v2686 = vsel %vm2675, nan, %v2685
    %s2687 = sld [smem:[#allocation2 + $0x1f]]
    %v2688 = vstv %s2687
    %v2689 = vmul.f32 %v2688, %v208
    %s2690 = sld [smem:[#allocation2 + $0x27]]
    %v2691 = vstv %s2690
    %v2692 = vmul.f32 %v2691, %v373
    %v2693 = vadd.f32 %v2689, %v2692
    %s2694 = sld [smem:[#allocation2 + $0x2f]]
    %v2695 = vstv %s2694
    %v2696 = vmul.f32 %v2695, %v538
    %v2697 = vadd.f32 %v2693, %v2696
    %s2698 = sld [smem:[#allocation2 + $0x37]]
    %v2699 = vstv %s2698
    %v2700 = vmul.f32 %v2699, %v703
    %v2701 = vadd.f32 %v2697, %v2700
    %s2702 = sld [smem:[#allocation2 + $0x3f]]
    %v2703 = vstv %s2702
    %v2704 = vmul.f32 %v2703, %v868
    %v2705 = vadd.f32 %v2701, %v2704
    %s2706 = sld [smem:[#allocation2 + $0x47]]
    %v2707 = vstv %s2706
    %v2708 = vmul.f32 %v2707, %v1033
    %v2709 = vadd.f32 %v2705, %v2708
    %s2710 = sld [smem:[#allocation2 + $0x4f]]
    %v2711 = vstv %s2710
    %v2712 = vmul.f32 %v2711, %v1198
    %v2713 = vadd.f32 %v2709, %v2712
    %s2714 = sld [smem:[#allocation2 + $0x57]]
    %v2715 = vstv %s2714
    %v2716 = vmul.f32 %v2715, %v1363
    %v2717 = vadd.f32 %v2713, %v2716
    %s2718 = sld [smem:[#allocation2 + $0x5f]]
    %v2719 = vstv %s2718
    %v2720 = vadd.f32 %v2717, %v2719
    %v2721 = vand.u32 2147483647, %v2720
    %vm2722 = vcmp.le.f32.partialorder %v2721, 0.7853982
    %vm2723 = vcmp.lt.s32.totalorder %v2720, 0
    %v2724 = vand.u32 %v2720, 2139095040
    %v2725 = vshrl.u32 %v2724, 23
    %v2726 = vsub.s32 %v2725, 127
    %v2727 = vand.u32 2147483647, %v2720
    %v2728 = vand.u32 %v2727, 8388607
    %v2729 = vor.u32 %v2728, 8388608
    %v2730 = vsub.s32 0, %v2729
    %v2731 = vadd.s32 %v2726, 1
    %vm2732 = vcmp.gt.s32.totalorder %v2731, 0
    %v2733 = vsel %vm2732, %v2731, 0
    %v2734 = vshrl.u32 %v2733, 5
    %v2735 = vand.u32 %v2733, 31
    %v2736 = vsub.s32 32, %v2735
    %v2737 = vshrl.u32 683565275, %v2736
    %v2738 = vshll.u32 683565275, %v2735
    %v2739 = vshrl.u32 2475754826, %v2736
    %v2740 = vor.u32 %v2738, %v2739
    %v2741 = vshll.u32 2475754826, %v2735
    %v2742 = vshrl.u32 2131351028, %v2736
    %v2743 = vor.u32 %v2741, %v2742
    %v2744 = vshll.u32 2131351028, %v2735
    %v2745 = vshrl.u32 2102212464, %v2736
    %v2746 = vor.u32 %v2744, %v2745
    %v2747 = vshll.u32 2102212464, %v2735
    %v2748 = vshrl.u32 920167782, %v2736
    %v2749 = vor.u32 %v2747, %v2748
    %v2750 = vshll.u32 920167782, %v2735
    %v2751 = vshrl.u32 1326507024, %v2736
    %v2752 = vor.u32 %v2750, %v2751
    %vm2753 = vcmp.lt.s32.totalorder %v2734, 1
    %vm2754 = vcmp.lt.s32.totalorder %v2734, 2
    %vm2755 = vcmp.lt.s32.totalorder %v2734, 3
    %vm2756 = vcmp.lt.s32.totalorder %v2734, 4
    %v2757 = vsel %vm2753, %v2737, %v2740
    %v2758 = vsel %vm2756, %v2746, 2102212464
    %v2759 = vsel %vm2755, %v2743, %v2758
    %v2760 = vsel %vm2754, %v2757, %v2759
    %v2761 = vsel %vm2753, %v2740, %v2743
    %v2762 = vsel %vm2756, %v2749, 920167782
    %v2763 = vsel %vm2755, %v2746, %v2762
    %v2764 = vsel %vm2754, %v2761, %v2763
    %v2765 = vsel %vm2753, %v2743, %v2746
    %v2766 = vsel %vm2756, %v2752, 1326507024
    %v2767 = vsel %vm2755, %v2749, %v2766
    %v2768 = vsel %vm2754, %v2765, %v2767
    %v2769 = vshll.u32 %v2729, 8
    %v2770 = vand.u32 %v2769, 65535
    %v2771 = vshrl.u32 %v2769, 16
    %v2772 = vand.u32 %v2768, 65535
    %v2773 = vshrl.u32 %v2768, 16
    %v2774 = vmul.u32 %v2770, %v2772
    %v2775 = vmul.u32 %v2770, %v2773
    %v2776 = vmul.u32 %v2771, %v2772
    %v2777 = vmul.u32 %v2771, %v2773
    %v2778 = vshll.u32 %v2775, 16
    %v2779 = vshrl.u32 %v2775, 16
    %v2780 = vshll.u32 %v2776, 16
    %v2781 = vshrl.u32 %v2776, 16
    %vm2782 = vc.u32 %v2774, %v2778
    %v2783 = vsel %vm2782, 1, 0
    %v2784 = vadd.s32 %v2774, %v2778
    %v2785 = vadd.s32 %v2777, %v2783
    %vm2786 = vc.u32 %v2784, %v2780
    %v2787 = vsel %vm2786, 1, 0
    %v2788 = vadd.s32 %v2784, %v2780
    %v2789 = vadd.s32 %v2785, %v2787
    %v2790 = vadd.s32 %v2789, %v2779
    %v2791 = vadd.s32 %v2790, %v2781
    %v2792 = vand.u32 %v2769, 65535
    %v2793 = vshrl.u32 %v2769, 16
    %v2794 = vand.u32 %v2764, 65535
    %v2795 = vshrl.u32 %v2764, 16
    %v2796 = vmul.u32 %v2792, %v2794
    %v2797 = vmul.u32 %v2792, %v2795
    %v2798 = vmul.u32 %v2793, %v2794
    %v2799 = vmul.u32 %v2793, %v2795
    %v2800 = vshll.u32 %v2797, 16
    %v2801 = vshrl.u32 %v2797, 16
    %v2802 = vshll.u32 %v2798, 16
    %v2803 = vshrl.u32 %v2798, 16
    %vm2804 = vc.u32 %v2796, %v2800
    %v2805 = vsel %vm2804, 1, 0
    %v2806 = vadd.s32 %v2796, %v2800
    %v2807 = vadd.s32 %v2799, %v2805
    %vm2808 = vc.u32 %v2806, %v2802
    %v2809 = vsel %vm2808, 1, 0
    %v2810 = vadd.s32 %v2806, %v2802
    %v2811 = vadd.s32 %v2807, %v2809
    %v2812 = vadd.s32 %v2811, %v2801
    %v2813 = vadd.s32 %v2812, %v2803
    %v2814 = vmul.u32 %v2769, %v2760
    %v2815 = vadd.s32 %v2791, %v2810
    %vm2816 = vc.u32 %v2791, %v2810
    %v2817 = vadd.s32 %v2813, 1
    %v2818 = vsel %vm2816, %v2817, %v2813
    %v2819 = vadd.s32 %v2814, %v2818
    %v2820 = vadd.s32 %v2819, 536870912
    %v2821 = vshrl.u32 %v2820, 30
    %v2822 = vshll.u32 %v2821, 30
    %v2823 = vsub.s32 %v2819, %v2822
    %vm2824 = vcmp.lt.s32.totalorder %v2823, 0
    %v2825 = vsub.s32 0, %v2823
    %v2826 = vsel %vm2824, %v2825, %v2823
    %v2827 = vclz %v2826
    %v2828 = vsub.s32 %v2827, 2
    %vm2829 = vcmp.gt.s32.totalorder 0, %v2828
    %v2830 = vsel %vm2829, 0, %v2828
    %v2831 = vsub.s32 32, %v2830
    %v2832 = vshll.u32 %v2823, %v2830
    %v2833 = vshrl.u32 %v2815, %v2831
    %v2834 = vor.u32 %v2832, %v2833
    %v2835 = vsub.s32 4294967266, %v2830
    %v2836 = vadd.s32 %v2835, 127
    %v2837 = vshll.u32 %v2836, 23
    %v2838 = vor.u32 4788187, %v2837
    %v2839 = vand.u32 2147483647, %v2838
    %v2841 = vcvt.s32.f32 %v2834
    %v2842 = vmul.f32 %v2841, %v2839
    %v2843 = vxor.u32 %v2842, 2147483648
    %v2844 = vsel %vm2723, %v2843, %v2842
    %v2845 = vsub.s32 4, %v2821
    %v2846 = vsel %vm2723, %v2845, %v2821
    %v2847 = vsel %vm2722, %v2720, %v2844
    %v2848 = vsel %vm2722, 0, %v2846
    %v2849 = vmul.f32 %v2847, %v2847
    %v2850 = vmul.f32 %v2849, -0.001358992
    %v2851 = vadd.f32 %v2850, 0.041655596
    %v2852 = vmul.f32 %v2849, %v2851
    %v2853 = vadd.f32 %v2852, -0.4999988
    %v2854 = vmul.f32 %v2849, %v2853
    %v2855 = vadd.f32 1.0, %v2854
    %v2856 = vmul.f32 %v2847, %v2847
    %v2857 = vmul.f32 %v2856, -0.00019511016
    %v2858 = vadd.f32 %v2857, 0.008332121
    %v2859 = vmul.f32 %v2856, %v2858
    %v2860 = vadd.f32 %v2859, -0.16666654
    %v2861 = vmul.f32 %v2856, %v2860
    %v2862 = vadd.f32 %v2861, 1.0
    %v2863 = vmul.f32 %v2862, %v2847
    %vm2864 = vweird.f32 %v2720
    %v2865 = vadd.s32 %v2848, 3
    %v2866 = vand.u32 %v2865, 3
    %vm2867 = vcmp.lt.s32.totalorder %v2866, 2
    %vm2868 = vcmp.eq.s32.totalorder %v2866, 0
    %v2869 = vxor.u32 %v2863, 2147483648
    %v2870 = vsel %vm2868, %v2855, %v2869
    %vm2871 = vcmp.eq.s32.totalorder %v2866, 2
    %v2872 = vxor.u32 %v2855, 2147483648
    %v2873 = vsel %vm2871, %v2872, %v2863
    %v2874 = vsel %vm2867, %v2870, %v2873
    %v2875 = vsel %vm2864, nan, %v2874
    %s2876 = sld [smem:[#allocation2 + $0x60]]
    %v2877 = vstv %s2876
    %v2878 = vmul.f32 %v2877, %v1552
    %s2879 = sld [smem:[#allocation2 + $0x61]]
    %v2880 = vstv %s2879
    %v2881 = vmul.f32 %v2880, %v1741
    %v2882 = vadd.f32 %v2878, %v2881
    %s2883 = sld [smem:[#allocation2 + $0x62]]
    %v2884 = vstv %s2883
    %v2885 = vmul.f32 %v2884, %v1930
    %v2886 = vadd.f32 %v2882, %v2885
    %s2887 = sld [smem:[#allocation2 + $0x63]]
    %v2888 = vstv %s2887
    %v2889 = vmul.f32 %v2888, %v2119
    %v2890 = vadd.f32 %v2886, %v2889
    %s2891 = sld [smem:[#allocation2 + $0x64]]
    %v2892 = vstv %s2891
    %v2893 = vmul.f32 %v2892, %v2308
    %v2894 = vadd.f32 %v2890, %v2893
    %s2895 = sld [smem:[#allocation2 + $0x65]]
    %v2896 = vstv %s2895
    %v2897 = vmul.f32 %v2896, %v2497
    %v2898 = vadd.f32 %v2894, %v2897
    %s2899 = sld [smem:[#allocation2 + $0x66]]
    %v2900 = vstv %s2899
    %v2901 = vmul.f32 %v2900, %v2686
    %v2902 = vadd.f32 %v2898, %v2901
    %s2903 = sld [smem:[#allocation2 + $0x67]]
    %v2904 = vstv %s2903
    %v2905 = vmul.f32 %v2904, %v2875
    %v2906 = vadd.f32 %v2902, %v2905
    %s2907 = sld [smem:[#allocation2 + $0x68]]
    %v2908 = vstv %s2907
    %v2909 = vadd.f32 %v2906, %v2908
    %2910 = vst [vmem:[#allocation7] sm:$0xff] %v2909
    // Predicated region
    $region18: #{tpu_custom_call.1} parent=1 // pred_check
      _
    $region19: #{tpu_custom_call.1} parent=1 // pred_check_branch
      %2912 = sbr.rel (0) target = $region21
    $region20: #{tpu_custom_call.1} parent=1 // pred_region
      %2914 = vsyncadd [#allocation4], 0
      %s2916 = sshll.u32 [#allocation7], 4
      %s2917 = int_to_ptr.vmem [resolvable:$true] %s2916
      %s2918 = sshll.u32 %s2, 4
      %s2919 = int_to_ptr.hbm [resolvable:$true] %s2918
      %2921 = dma.vmem_to_hbm [thread:$0]  %s2917, 128, %s2919, [#allocation4]
    $region21: #{tpu_custom_call.1} parent=1 // pred_fallthru
      _
    // Predicated region
    $region22: #{tpu_custom_call.1} parent=1 // pred_check
      _
    $region23: #{tpu_custom_call.1} parent=1 // pred_check_branch
      %2923 = sbr.rel (0) target = $region25
    $region24: #{tpu_custom_call.1} parent=1 // pred_region
      %2925 = dma.done [#allocation4], 128
    $region25: #{tpu_custom_call.1} parent=1 // pred_fallthru
      _
    %2926 = vsyncpa [#allocation3], 1
    %2927 = vsyncpa [#allocation4], 1
    %2928 = vsyncpa [#allocation5], 1

</llo_original>
